<compile_context>
chip_gen: v5e
topology: v5e:2x2
jax: 0.10.0
libtpu: 0.0.40
codegen_flags: <defaults>
</compile_context>

<pallas_src>
import functools

import numpy as np
import jax
import jax.numpy as jnp
from jax.experimental import pallas as pl
from jax.experimental.pallas import tpu as pltpu


DOWNSAMPLE_SCALES = (3, 3, 3, 3, 1)


def _round_up(x, m):
    return -(-x // m) * m


# ---------------------------------------------------------------------------
# Pallas kernel: out = act(A @ W + bias); grid (m, n, k), f32 scratch acc
# ---------------------------------------------------------------------------
def _matmul_bias_act_kernel(a_ref, w_ref, b_ref, o_ref, acc_ref, *,
                            neg_slope, apply_act, nk):
    if nk == 1:
        # Single reduction step: no scratch round-trip needed.
        y = jnp.dot(a_ref[...], w_ref[...],
                    preferred_element_type=jnp.float32) + b_ref[...]
        if apply_act:
            y = jnp.where(y >= 0, y, neg_slope * y)
        o_ref[...] = y.astype(o_ref.dtype)
        return

    k = pl.program_id(2)

    @pl.when(k == 0)
    def _():
        acc_ref[...] = jnp.zeros_like(acc_ref)

    acc_ref[...] += jnp.dot(a_ref[...], w_ref[...],
                            preferred_element_type=jnp.float32)

    @pl.when(k == nk - 1)
    def _():
        y = acc_ref[...] + b_ref[...]
        if apply_act:
            y = jnp.where(y >= 0, y, neg_slope * y)   # LeakyReLU in f32
        o_ref[...] = y.astype(o_ref.dtype)


def matmul_bias_act(a, w, b, *, apply_act, neg_slope=0.1,
                    out_dtype=jnp.bfloat16):
    """a: (M, K), w: (K, N), b: (N,) -> (M, N) = act(a @ w + b) in out_dtype."""
    M, K = a.shape
    _, N = w.shape

    # N: lane-dense, full weight column panel resident in VMEM (N <= 1024).
    Np = _round_up(N, 128)
    tn = Np

    # K: single full-K block whenever it fits; else largest <=1024 multiple of
    # 128 that divides the padded K, to minimize accumulator passes.
    if K <= 2048:
        Kp = _round_up(K, 16)
        tk = Kp
    else:
        Kp = _round_up(K, 128)
        tk = 1024
        while Kp % tk:
            tk -= 128

    # M: large tiles to amortize the ~0.35us per-grid-step overhead; the m
    # axis stays "parallel" for megacore sharding on v7x.
    tm = min(512, _round_up(M, 16))
    Mp = _round_up(M, tm)

    nk = Kp // tk
    grid = (Mp // tm, Np // tn, nk)

    a_p = jnp.pad(a.astype(jnp.bfloat16), ((0, Mp - M), (0, Kp - K)))
    w_p = jnp.pad(w.astype(jnp.bfloat16), ((0, Kp - K), (0, Np - N)))
    b_p = jnp.pad(b.astype(jnp.float32).reshape(1, -1), ((0, 0), (0, Np - N)))

    out_bytes = jnp.dtype(out_dtype).itemsize

    # Double-buffered A/W/out/bias blocks + one f32 scratch accumulator.
    vmem_need = (2 * (tm * tk * 2 + tk * tn * 2 + tm * tn * out_bytes + tn * 4)
                 + tm * tn * 4)
    vmem_limit = int(min(48 * 2**20, max(32 * 2**20, 2 * vmem_need)))

    cost = pl.CostEstimate(
        flops=int(2 * Mp * Kp * Np),
        transcendentals=0,
        bytes_accessed=int(Mp * Kp * 2 * (Np // tn)        # A, streamed once
                           + Kp * Np * 2 * (Mp // tm)      # W re-read per m
                           + Mp * Np * out_bytes + Np * 4),
    )

    out = pl.pallas_call(
        functools.partial(_matmul_bias_act_kernel, neg_slope=neg_slope,
                          apply_act=apply_act, nk=nk),
        out_shape=jax.ShapeDtypeStruct((Mp, Np), out_dtype),
        grid_spec=pltpu.PrefetchScalarGridSpec(
            num_scalar_prefetch=0,
            grid=grid,
            in_specs=[
                pl.BlockSpec((tm, tk), lambda m, n, k: (m, k)),
                pl.BlockSpec((tk, tn), lambda m, n, k: (k, n)),
                pl.BlockSpec((1, tn), lambda m, n, k: (0, n)),  # bias: no k dep
            ],
            out_specs=pl.BlockSpec((tm, tn), lambda m, n, k: (m, n)),
            scratch_shapes=[pltpu.VMEM((tm, tn), jnp.float32)],
        ),
        compiler_params=pltpu.CompilerParams(
            dimension_semantics=("parallel", "parallel", "arbitrary"),
            vmem_limit_bytes=vmem_limit),
        cost_estimate=cost,
    )(a_p, w_p, b_p)
    return out[:M, :N]


# ---------------------------------------------------------------------------
# One (k, 1) conv layer = 1-D conv along H, per period column
# ---------------------------------------------------------------------------
def conv_layer(x, w, b, *, stride, pad, apply_act, out_dtype=jnp.bfloat16):
    """x: (N, H, Cin). w: torch Conv2d weight (Cout, Cin, K, 1). b: (Cout,)."""
    N, H, Cin = x.shape
    Cout, _, K, _ = w.shape
    x = x.astype(jnp.bfloat16)                     # bf16 activations for MXU
    xp = jnp.pad(x, ((0, 0), (pad, pad), (0, 0)))
    Ho = (H + 2 * pad - K) // stride + 1
    # im2col via K strided slices (no gather); tap-major columns (k, cin).
    # TODO(synk): fuse this into the Pallas kernel to avoid duplicated HBM bytes.
    taps = [jax.lax.slice(xp, (0, t, 0), (N, t + stride * (Ho - 1) + 1, Cin),
                          (1, stride, 1)) for t in range(K)]
    a = jnp.stack(taps, axis=2).reshape(N * Ho, K * Cin)
    # matmul weight: W[(k, cin), cout] = w[cout, cin, k, 0]
    w_mat = jnp.transpose(w[..., 0], (2, 1, 0)).reshape(K * Cin, Cout)
    y = matmul_bias_act(a, w_mat, b, apply_act=apply_act, out_dtype=out_dtype)
    return y.reshape(N, Ho, Cout)


# ---------------------------------------------------------------------------
# HiFiGAN period discriminator forward (Pallas path)
# ---------------------------------------------------------------------------
def period_disc_forward(x, params, period, downsample_scales=DOWNSAMPLE_SCALES):
    """x: (B, C=1, T) -> list of 6 tensors in PyTorch NCHW / flattened layout."""
    B, C, T = x.shape
    if T % period != 0:
        n_pad = period - T % period
        x = jnp.pad(x, ((0, 0), (0, 0), (0, n_pad)), mode="reflect")
        T += n_pad
    H = T // period
    xv = x.reshape(B, C, H, period)                        # torch .view
    cur = jnp.transpose(xv, (0, 3, 2, 1)).reshape(B * period, H, C)

    outs = []
    for (w, b), stride in zip(params["convs"], downsample_scales):
        K = w.shape[2]
        cur = conv_layer(cur, w, b, stride=stride, pad=(K - 1) // 2,
                         apply_act=True, out_dtype=jnp.bfloat16)
        Ho, Cout = cur.shape[1], cur.shape[2]
        # back to torch (B, Cout, Ho, period), f32 for the returned feature map
        outs.append(jnp.transpose(cur.reshape(B, period, Ho, Cout),
                                  (0, 3, 2, 1)).astype(jnp.float32))

    w, b = params["out_conv"]
    cur = conv_layer(cur, w, b, stride=1, pad=1, apply_act=False,
                     out_dtype=jnp.float32)                # (2,1) kernel
    Hf = cur.shape[1]
    flat = jnp.transpose(cur.reshape(B, period, Hf, 1)[..., 0],
                         (0, 2, 1)).reshape(B, Hf * period)
    outs.append(flat)
    return outs


def multi_period_disc_forward(x, all_params, periods):
    return [period_disc_forward(x, p, per)
            for p, per in zip(all_params, periods)]


# ---------------------------------------------------------------------------
# Deterministic parameter initialization (mirrors the module's __init__ shapes)
# ---------------------------------------------------------------------------
def init_params(key, periods, *, in_channels=1, out_channels=1,
                kernel_sizes=(5, 3), channels=32,
                downsample_scales=DOWNSAMPLE_SCALES,
                max_downsample_channels=1024):
    all_params = []
    for _ in periods:
        in_chs, out_chs = in_channels, channels
        convs = []
        for _scale in downsample_scales:
            key, k1, k2 = jax.random.split(key, 3)
            w = jax.random.normal(
                k1, (out_chs, in_chs, kernel_sizes[0], 1), jnp.float32) * 0.05
            b = jax.random.normal(k2, (out_chs,), jnp.float32) * 0.05
            convs.append((w, b))
            in_chs = out_chs
            out_chs = min(out_chs * 4, max_downsample_channels)
        key, k1, k2 = jax.random.split(key, 3)
        wo = jax.random.normal(
            k1, (out_channels, in_chs, kernel_sizes[1] - 1, 1),
            jnp.float32) * 0.05
        bo = jax.random.normal(k2, (out_channels,), jnp.float32) * 0.05
        all_params.append({"convs": convs, "out_conv": (wo, bo)})
    return all_params


# ---------------------------------------------------------------------------
# Pure-JAX NCHW reference (f32 math, no Pallas) for verification
# ---------------------------------------------------------------------------
def ref_period_disc(x, params, period, downsample_scales=DOWNSAMPLE_SCALES):
    B, C, T = x.shape
    if T % period != 0:
        n_pad = period - T % period
        x = jnp.pad(x, ((0, 0), (0, 0), (0, n_pad)), mode="reflect")
        T += n_pad
    h = x.reshape(B, C, T // period, period)
    outs = []
    for (w, b), stride in zip(params["convs"], downsample_scales):
        p = (w.shape[2] - 1) // 2
        h = jax.lax.conv_general_dilated(
            h, w, (stride, 1), [(p, p), (0, 0)],
            dimension_numbers=("NCHW", "OIHW", "NCHW"))
        h = h + b[None, :, None, None]
        h = jnp.where(h >= 0, h, 0.1 * h)
        outs.append(h)
    w, b = params["out_conv"]
    h = jax.lax.conv_general_dilated(
        h, w, (1, 1), [(1, 1), (0, 0)],
        dimension_numbers=("NCHW", "OIHW", "NCHW")) + b[None, :, None, None]
    outs.append(h.reshape(h.shape[0], -1))
    return outs


# ---------------------------------------------------------------------------
if __name__ == "__main__":
    key = jax.random.PRNGKey(0)
    periods = [2, 3, 5, 7, 11]

    # Small shapes consistent with the module (shrunk channel widths so the
    # demo stays tiny; the kernels are width-agnostic).  T is large enough to
    # exercise M tiling and the reflect-pad path for periods 7 and 11.
    B, T = 2, 1200
    kx, kp = jax.random.split(key)
    x = jax.random.normal(kx, (B, 1, T), jnp.float32)

    params = init_params(kp, periods, channels=8, max_downsample_channels=64)

    fwd = jax.jit(functools.partial(multi_period_disc_forward,
                                    periods=tuple(periods)))
    outs = fwd(x, params)
    jax.block_until_ready(outs)

    # Verify against the pure-JAX f32 NCHW reference (bf16 MXU operands and
    # bf16 inter-layer storage -> looser tolerance than pure-f32).
    for p_idx, period in enumerate(periods):
        ref_outs = ref_period_disc(x, params[p_idx], period)
        for got, want in zip(outs[p_idx], ref_outs):
            assert got.shape == want.shape, (got.shape, want.shape)
            np.testing.assert_allclose(np.asarray(got), np.asarray(want),
                                       rtol=5e-2, atol=2e-2)

    print("KERNEL_OK")
</pallas_src>

<mosaic_0001>
module attributes {stable_mosaic.version = 11 : i64} {
  func.func @_matmul_bias_act_kernel(%arg0: i32, %arg1: i32, %arg2: i32, %arg3: memref<512x16xbf16, #tpu.memory_space<vmem>>, %arg4: memref<16x128xbf16, #tpu.memory_space<vmem>>, %arg5: memref<1x128xf32, #tpu.memory_space<vmem>>, %arg6: memref<512x128xbf16, #tpu.memory_space<vmem>>, %arg7: memref<512x128xf32, #tpu.memory_space<vmem>>) attributes {dimension_semantics = [#tpu.dimension_semantics<parallel>, #tpu.dimension_semantics<parallel>, #tpu.dimension_semantics<arbitrary>], iteration_bounds = array<i64: 2, 1, 1>, scalar_prefetch = 0 : i64, scratch_operands = 1 : i64, tpu.core_type = #tpu.core_type<tc>, window_params = [{transform_indices = @transform_0, window_bounds = array<i64: 512, 16>}, {transform_indices = @transform_1, window_bounds = array<i64: 16, 128>}, {transform_indices = @transform_2, window_bounds = array<i64: 1, 128>}, {transform_indices = @transform_3, window_bounds = array<i64: 512, 128>}]} {
    %c0 = arith.constant 0 : index
    %c0_0 = arith.constant 0 : index
    %0 = vector.load %arg3[%c0, %c0_0] : memref<512x16xbf16, #tpu.memory_space<vmem>>, vector<512x16xbf16>
    %c0_1 = arith.constant 0 : index
    %c0_2 = arith.constant 0 : index
    %1 = vector.load %arg4[%c0_1, %c0_2] : memref<16x128xbf16, #tpu.memory_space<vmem>>, vector<16x128xbf16>
    %cst = arith.constant dense<0.000000e+00> : vector<512x128xf32>
    %2 = tpu.matmul %0, %1, %cst {dimension_numbers = #tpu.dot_dimension_numbers<[1], [0], [0], [1], [0, 0, 1, 1], [], []>} : vector<512x16xbf16>, vector<16x128xbf16>, vector<512x128xf32> -> vector<512x128xf32>
    %c0_3 = arith.constant 0 : index
    %c0_4 = arith.constant 0 : index
    %3 = vector.load %arg5[%c0_3, %c0_4] : memref<1x128xf32, #tpu.memory_space<vmem>>, vector<1x128xf32>
    %4 = vector.broadcast %3 : vector<1x128xf32> to vector<512x128xf32>
    %5 = arith.addf %2, %4 : vector<512x128xf32>
    %cst_5 = arith.constant 0.000000e+00 : f32
    %6 = vector.broadcast %cst_5 : f32 to vector<512x128xf32>
    %7 = arith.cmpf oge, %5, %6 : vector<512x128xf32>
    %cst_6 = arith.constant 1.000000e-01 : f32
    %8 = vector.broadcast %cst_6 : f32 to vector<512x128xf32>
    %9 = arith.mulf %8, %5 : vector<512x128xf32>
    %10 = arith.select %7, %5, %9 : vector<512x128xi1>, vector<512x128xf32>
    %11 = arith.truncf %10 : vector<512x128xf32> to vector<512x128xbf16>
    %c0_7 = arith.constant 0 : index
    %c0_8 = arith.constant 0 : index
    %12 = vector.load %arg6[%c0_7, %c0_8] : memref<512x128xbf16, #tpu.memory_space<vmem>>, vector<512x128xbf16>
    tpu.vector_store %arg6[%c0_7, %c0_8], %11 {strides = array<i32>} : memref<512x128xbf16, #tpu.memory_space<vmem>>, vector<512x128xbf16>,
    return
  }
  func.func @transform_0(%arg0: i32, %arg1: i32, %arg2: i32) -> (i32, i32) {
    %c0_i32 = arith.constant 0 : i32
    return %arg0, %arg2 : i32, i32
  }
  func.func @transform_1(%arg0: i32, %arg1: i32, %arg2: i32) -> (i32, i32) {
    %c0_i32 = arith.constant 0 : i32
    return %arg2, %arg1 : i32, i32
  }
  func.func @transform_2(%arg0: i32, %arg1: i32, %arg2: i32) -> (i32, i32) {
    %c0_i32 = arith.constant 0 : i32
    %c0_i32_0 = arith.constant 0 : i32
    return %c0_i32, %arg1 : i32, i32
  }
  func.func @transform_3(%arg0: i32, %arg1: i32, %arg2: i32) -> (i32, i32) {
    %c0_i32 = arith.constant 0 : i32
    return %arg0, %arg1 : i32, i32
  }
}

module attributes {stable_mosaic.version = 11 : i64} {
  func.func @_matmul_bias_act_kernel(%arg0: i32, %arg1: i32, %arg2: i32, %arg3: memref<272x48xbf16, #tpu.memory_space<vmem>>, %arg4: memref<48x128xbf16, #tpu.memory_space<vmem>>, %arg5: memref<1x128xf32, #tpu.memory_space<vmem>>, %arg6: memref<272x128xbf16, #tpu.memory_space<vmem>>, %arg7: memref<272x128xf32, #tpu.memory_space<vmem>>) attributes {dimension_semantics = [#tpu.dimension_semantics<parallel>, #tpu.dimension_semantics<parallel>, #tpu.dimension_semantics<arbitrary>], iteration_bounds = array<i64: 1, 1, 1>, scalar_prefetch = 0 : i64, scratch_operands = 1 : i64, tpu.core_type = #tpu.core_type<tc>, window_params = [{transform_indices = @transform_0, window_bounds = array<i64: 272, 48>}, {transform_indices = @transform_1, window_bounds = array<i64: 48, 128>}, {transform_indices = @transform_2, window_bounds = array<i64: 1, 128>}, {transform_indices = @transform_3, window_bounds = array<i64: 272, 128>}]} {
    %c0 = arith.constant 0 : index
    %c0_0 = arith.constant 0 : index
    %0 = vector.load %arg3[%c0, %c0_0] : memref<272x48xbf16, #tpu.memory_space<vmem>>, vector<272x48xbf16>
    %c0_1 = arith.constant 0 : index
    %c0_2 = arith.constant 0 : index
    %1 = vector.load %arg4[%c0_1, %c0_2] : memref<48x128xbf16, #tpu.memory_space<vmem>>, vector<48x128xbf16>
    %cst = arith.constant dense<0.000000e+00> : vector<272x128xf32>
    %2 = tpu.matmul %0, %1, %cst {dimension_numbers = #tpu.dot_dimension_numbers<[1], [0], [0], [1], [0, 0, 1, 1], [], []>} : vector<272x48xbf16>, vector<48x128xbf16>, vector<272x128xf32> -> vector<272x128xf32>
    %c0_3 = arith.constant 0 : index
    %c0_4 = arith.constant 0 : index
    %3 = vector.load %arg5[%c0_3, %c0_4] : memref<1x128xf32, #tpu.memory_space<vmem>>, vector<1x128xf32>
    %4 = vector.broadcast %3 : vector<1x128xf32> to vector<272x128xf32>
    %5 = arith.addf %2, %4 : vector<272x128xf32>
    %cst_5 = arith.constant 0.000000e+00 : f32
    %6 = vector.broadcast %cst_5 : f32 to vector<272x128xf32>
    %7 = arith.cmpf oge, %5, %6 : vector<272x128xf32>
    %cst_6 = arith.constant 1.000000e-01 : f32
    %8 = vector.broadcast %cst_6 : f32 to vector<272x128xf32>
    %9 = arith.mulf %8, %5 : vector<272x128xf32>
    %10 = arith.select %7, %5, %9 : vector<272x128xi1>, vector<272x128xf32>
    %11 = arith.truncf %10 : vector<272x128xf32> to vector<272x128xbf16>
    %c0_7 = arith.constant 0 : index
    %c0_8 = arith.constant 0 : index
    %12 = vector.load %arg6[%c0_7, %c0_8] : memref<272x128xbf16, #tpu.memory_space<vmem>>, vector<272x128xbf16>
    tpu.vector_store %arg6[%c0_7, %c0_8], %11 {strides = array<i32>} : memref<272x128xbf16, #tpu.memory_space<vmem>>, vector<272x128xbf16>,
    return
  }
  func.func @transform_0(%arg0: i32, %arg1: i32, %arg2: i32) -> (i32, i32) {
    %c0_i32 = arith.constant 0 : i32
    return %arg0, %arg2 : i32, i32
  }
  func.func @transform_1(%arg0: i32, %arg1: i32, %arg2: i32) -> (i32, i32) {
    %c0_i32 = arith.constant 0 : i32
    return %arg2, %arg1 : i32, i32
  }
  func.func @transform_2(%arg0: i32, %arg1: i32, %arg2: i32) -> (i32, i32) {
    %c0_i32 = arith.constant 0 : i32
    %c0_i32_0 = arith.constant 0 : i32
    return %c0_i32, %arg1 : i32, i32
  }
  func.func @transform_3(%arg0: i32, %arg1: i32, %arg2: i32) -> (i32, i32) {
    %c0_i32 = arith.constant 0 : i32
    return %arg0, %arg1 : i32, i32
  }
}

module attributes {stable_mosaic.version = 11 : i64} {
  func.func @_matmul_bias_act_kernel(%arg0: i32, %arg1: i32, %arg2: i32, %arg3: memref<96x160xbf16, #tpu.memory_space<vmem>>, %arg4: memref<160x128xbf16, #tpu.memory_space<vmem>>, %arg5: memref<1x128xf32, #tpu.memory_space<vmem>>, %arg6: memref<96x128xbf16, #tpu.memory_space<vmem>>, %arg7: memref<96x128xf32, #tpu.memory_space<vmem>>) attributes {dimension_semantics = [#tpu.dimension_semantics<parallel>, #tpu.dimension_semantics<parallel>, #tpu.dimension_semantics<arbitrary>], iteration_bounds = array<i64: 1, 1, 1>, scalar_prefetch = 0 : i64, scratch_operands = 1 : i64, tpu.core_type = #tpu.core_type<tc>, window_params = [{transform_indices = @transform_0, window_bounds = array<i64: 96, 160>}, {transform_indices = @transform_1, window_bounds = array<i64: 160, 128>}, {transform_indices = @transform_2, window_bounds = array<i64: 1, 128>}, {transform_indices = @transform_3, window_bounds = array<i64: 96, 128>}]} {
    %c0 = arith.constant 0 : index
    %c0_0 = arith.constant 0 : index
    %0 = vector.load %arg3[%c0, %c0_0] : memref<96x160xbf16, #tpu.memory_space<vmem>>, vector<96x160xbf16>
    %c0_1 = arith.constant 0 : index
    %c0_2 = arith.constant 0 : index
    %1 = vector.load %arg4[%c0_1, %c0_2] : memref<160x128xbf16, #tpu.memory_space<vmem>>, vector<160x128xbf16>
    %cst = arith.constant dense<0.000000e+00> : vector<96x128xf32>
    %2 = tpu.matmul %0, %1, %cst {dimension_numbers = #tpu.dot_dimension_numbers<[1], [0], [0], [1], [0, 0, 1, 1], [], []>} : vector<96x160xbf16>, vector<160x128xbf16>, vector<96x128xf32> -> vector<96x128xf32>
    %c0_3 = arith.constant 0 : index
    %c0_4 = arith.constant 0 : index
    %3 = vector.load %arg5[%c0_3, %c0_4] : memref<1x128xf32, #tpu.memory_space<vmem>>, vector<1x128xf32>
    %4 = vector.broadcast %3 : vector<1x128xf32> to vector<96x128xf32>
    %5 = arith.addf %2, %4 : vector<96x128xf32>
    %cst_5 = arith.constant 0.000000e+00 : f32
    %6 = vector.broadcast %cst_5 : f32 to vector<96x128xf32>
    %7 = arith.cmpf oge, %5, %6 : vector<96x128xf32>
    %cst_6 = arith.constant 1.000000e-01 : f32
    %8 = vector.broadcast %cst_6 : f32 to vector<96x128xf32>
    %9 = arith.mulf %8, %5 : vector<96x128xf32>
    %10 = arith.select %7, %5, %9 : vector<96x128xi1>, vector<96x128xf32>
    %11 = arith.truncf %10 : vector<96x128xf32> to vector<96x128xbf16>
    %c0_7 = arith.constant 0 : index
    %c0_8 = arith.constant 0 : index
    %12 = vector.load %arg6[%c0_7, %c0_8] : memref<96x128xbf16, #tpu.memory_space<vmem>>, vector<96x128xbf16>
    tpu.vector_store %arg6[%c0_7, %c0_8], %11 {strides = array<i32>} : memref<96x128xbf16, #tpu.memory_space<vmem>>, vector<96x128xbf16>,
    return
  }
  func.func @transform_0(%arg0: i32, %arg1: i32, %arg2: i32) -> (i32, i32) {
    %c0_i32 = arith.constant 0 : i32
    return %arg0, %arg2 : i32, i32
  }
  func.func @transform_1(%arg0: i32, %arg1: i32, %arg2: i32) -> (i32, i32) {
    %c0_i32 = arith.constant 0 : i32
    return %arg2, %arg1 : i32, i32
  }
  func.func @transform_2(%arg0: i32, %arg1: i32, %arg2: i32) -> (i32, i32) {
    %c0_i32 = arith.constant 0 : i32
    %c0_i32_0 = arith.constant 0 : i32
    return %c0_i32, %arg1 : i32, i32
  }
  func.func @transform_3(%arg0: i32, %arg1: i32, %arg2: i32) -> (i32, i32) {
    %c0_i32 = arith.constant 0 : i32
    return %arg0, %arg1 : i32, i32
  }
}

module attributes {stable_mosaic.version = 11 : i64} {
  func.func @_matmul_bias_act_kernel(%arg0: i32, %arg1: i32, %arg2: i32, %arg3: memref<32x320xbf16, #tpu.memory_space<vmem>>, %arg4: memref<320x128xbf16, #tpu.memory_space<vmem>>, %arg5: memref<1x128xf32, #tpu.memory_space<vmem>>, %arg6: memref<32x128xbf16, #tpu.memory_space<vmem>>, %arg7: memref<32x128xf32, #tpu.memory_space<vmem>>) attributes {dimension_semantics = [#tpu.dimension_semantics<parallel>, #tpu.dimension_semantics<parallel>, #tpu.dimension_semantics<arbitrary>], iteration_bounds = array<i64: 1, 1, 1>, scalar_prefetch = 0 : i64, scratch_operands = 1 : i64, tpu.core_type = #tpu.core_type<tc>, window_params = [{transform_indices = @transform_0, window_bounds = array<i64: 32, 320>}, {transform_indices = @transform_1, window_bounds = array<i64: 320, 128>}, {transform_indices = @transform_2, window_bounds = array<i64: 1, 128>}, {transform_indices = @transform_3, window_bounds = array<i64: 32, 128>}]} {
    %c0 = arith.constant 0 : index
    %c0_0 = arith.constant 0 : index
    %0 = vector.load %arg3[%c0, %c0_0] : memref<32x320xbf16, #tpu.memory_space<vmem>>, vector<32x320xbf16>
    %c0_1 = arith.constant 0 : index
    %c0_2 = arith.constant 0 : index
    %1 = vector.load %arg4[%c0_1, %c0_2] : memref<320x128xbf16, #tpu.memory_space<vmem>>, vector<320x128xbf16>
    %cst = arith.constant dense<0.000000e+00> : vector<32x128xf32>
    %2 = tpu.matmul %0, %1, %cst {dimension_numbers = #tpu.dot_dimension_numbers<[1], [0], [0], [1], [0, 0, 1, 1], [], []>} : vector<32x320xbf16>, vector<320x128xbf16>, vector<32x128xf32> -> vector<32x128xf32>
    %c0_3 = arith.constant 0 : index
    %c0_4 = arith.constant 0 : index
    %3 = vector.load %arg5[%c0_3, %c0_4] : memref<1x128xf32, #tpu.memory_space<vmem>>, vector<1x128xf32>
    %4 = vector.broadcast %3 : vector<1x128xf32> to vector<32x128xf32>
    %5 = arith.addf %2, %4 : vector<32x128xf32>
    %cst_5 = arith.constant 0.000000e+00 : f32
    %6 = vector.broadcast %cst_5 : f32 to vector<32x128xf32>
    %7 = arith.cmpf oge, %5, %6 : vector<32x128xf32>
    %cst_6 = arith.constant 1.000000e-01 : f32
    %8 = vector.broadcast %cst_6 : f32 to vector<32x128xf32>
    %9 = arith.mulf %8, %5 : vector<32x128xf32>
    %10 = arith.select %7, %5, %9 : vector<32x128xi1>, vector<32x128xf32>
    %11 = arith.truncf %10 : vector<32x128xf32> to vector<32x128xbf16>
    %c0_7 = arith.constant 0 : index
    %c0_8 = arith.constant 0 : index
    %12 = vector.load %arg6[%c0_7, %c0_8] : memref<32x128xbf16, #tpu.memory_space<vmem>>, vector<32x128xbf16>
    tpu.vector_store %arg6[%c0_7, %c0_8], %11 {strides = array<i32>} : memref<32x128xbf16, #tpu.memory_space<vmem>>, vector<32x128xbf16>,
    return
  }
  func.func @transform_0(%arg0: i32, %arg1: i32, %arg2: i32) -> (i32, i32) {
    %c0_i32 = arith.constant 0 : i32
    return %arg0, %arg2 : i32, i32
  }
  func.func @transform_1(%arg0: i32, %arg1: i32, %arg2: i32) -> (i32, i32) {
    %c0_i32 = arith.constant 0 : i32
    return %arg2, %arg1 : i32, i32
  }
  func.func @transform_2(%arg0: i32, %arg1: i32, %arg2: i32) -> (i32, i32) {
    %c0_i32 = arith.constant 0 : i32
    %c0_i32_0 = arith.constant 0 : i32
    return %c0_i32, %arg1 : i32, i32
  }
  func.func @transform_3(%arg0: i32, %arg1: i32, %arg2: i32) -> (i32, i32) {
    %c0_i32 = arith.constant 0 : i32
    return %arg0, %arg1 : i32, i32
  }
}

module attributes {stable_mosaic.version = 11 : i64} {
  func.func @_matmul_bias_act_kernel(%arg0: i32, %arg1: i32, %arg2: i32, %arg3: memref<48x128xbf16, #tpu.memory_space<vmem>>, %arg4: memref<128x128xbf16, #tpu.memory_space<vmem>>, %arg5: memref<1x128xf32, #tpu.memory_space<vmem>>, %arg6: memref<48x128xf32, #tpu.memory_space<vmem>>, %arg7: memref<48x128xf32, #tpu.memory_space<vmem>>) attributes {dimension_semantics = [#tpu.dimension_semantics<parallel>, #tpu.dimension_semantics<parallel>, #tpu.dimension_semantics<arbitrary>], iteration_bounds = array<i64: 1, 1, 1>, scalar_prefetch = 0 : i64, scratch_operands = 1 : i64, tpu.core_type = #tpu.core_type<tc>, window_params = [{transform_indices = @transform_0, window_bounds = array<i64: 48, 128>}, {transform_indices = @transform_1, window_bounds = array<i64: 128, 128>}, {transform_indices = @transform_2, window_bounds = array<i64: 1, 128>}, {transform_indices = @transform_3, window_bounds = array<i64: 48, 128>}]} {
    %c0 = arith.constant 0 : index
    %c0_0 = arith.constant 0 : index
    %0 = vector.load %arg3[%c0, %c0_0] : memref<48x128xbf16, #tpu.memory_space<vmem>>, vector<48x128xbf16>
    %c0_1 = arith.constant 0 : index
    %c0_2 = arith.constant 0 : index
    %1 = vector.load %arg4[%c0_1, %c0_2] : memref<128x128xbf16, #tpu.memory_space<vmem>>, vector<128x128xbf16>
    %cst = arith.constant dense<0.000000e+00> : vector<48x128xf32>
    %2 = tpu.matmul %0, %1, %cst {dimension_numbers = #tpu.dot_dimension_numbers<[1], [0], [0], [1], [0, 0, 1, 1], [], []>} : vector<48x128xbf16>, vector<128x128xbf16>, vector<48x128xf32> -> vector<48x128xf32>
    %c0_3 = arith.constant 0 : index
    %c0_4 = arith.constant 0 : index
    %3 = vector.load %arg5[%c0_3, %c0_4] : memref<1x128xf32, #tpu.memory_space<vmem>>, vector<1x128xf32>
    %4 = vector.broadcast %3 : vector<1x128xf32> to vector<48x128xf32>
    %5 = arith.addf %2, %4 : vector<48x128xf32>
    %c0_5 = arith.constant 0 : index
    %c0_6 = arith.constant 0 : index
    %6 = vector.load %arg6[%c0_5, %c0_6] : memref<48x128xf32, #tpu.memory_space<vmem>>, vector<48x128xf32>
    tpu.vector_store %arg6[%c0_5, %c0_6], %5 {strides = array<i32>} : memref<48x128xf32, #tpu.memory_space<vmem>>, vector<48x128xf32>,
    return
  }
  func.func @transform_0(%arg0: i32, %arg1: i32, %arg2: i32) -> (i32, i32) {
    %c0_i32 = arith.constant 0 : i32
    return %arg0, %arg2 : i32, i32
  }
  func.func @transform_1(%arg0: i32, %arg1: i32, %arg2: i32) -> (i32, i32) {
    %c0_i32 = arith.constant 0 : i32
    return %arg2, %arg1 : i32, i32
  }
  func.func @transform_2(%arg0: i32, %arg1: i32, %arg2: i32) -> (i32, i32) {
    %c0_i32 = arith.constant 0 : i32
    %c0_i32_0 = arith.constant 0 : i32
    return %c0_i32, %arg1 : i32, i32
  }
  func.func @transform_3(%arg0: i32, %arg1: i32, %arg2: i32) -> (i32, i32) {
    %c0_i32 = arith.constant 0 : i32
    return %arg0, %arg1 : i32, i32
  }
}

module attributes {stable_mosaic.version = 11 : i64} {
  func.func @_matmul_bias_act_kernel(%arg0: i32, %arg1: i32, %arg2: i32, %arg3: memref<288x48xbf16, #tpu.memory_space<vmem>>, %arg4: memref<48x128xbf16, #tpu.memory_space<vmem>>, %arg5: memref<1x128xf32, #tpu.memory_space<vmem>>, %arg6: memref<288x128xbf16, #tpu.memory_space<vmem>>, %arg7: memref<288x128xf32, #tpu.memory_space<vmem>>) attributes {dimension_semantics = [#tpu.dimension_semantics<parallel>, #tpu.dimension_semantics<parallel>, #tpu.dimension_semantics<arbitrary>], iteration_bounds = array<i64: 1, 1, 1>, scalar_prefetch = 0 : i64, scratch_operands = 1 : i64, tpu.core_type = #tpu.core_type<tc>, window_params = [{transform_indices = @transform_0, window_bounds = array<i64: 288, 48>}, {transform_indices = @transform_1, window_bounds = array<i64: 48, 128>}, {transform_indices = @transform_2, window_bounds = array<i64: 1, 128>}, {transform_indices = @transform_3, window_bounds = array<i64: 288, 128>}]} {
    %c0 = arith.constant 0 : index
    %c0_0 = arith.constant 0 : index
    %0 = vector.load %arg3[%c0, %c0_0] : memref<288x48xbf16, #tpu.memory_space<vmem>>, vector<288x48xbf16>
    %c0_1 = arith.constant 0 : index
    %c0_2 = arith.constant 0 : index
    %1 = vector.load %arg4[%c0_1, %c0_2] : memref<48x128xbf16, #tpu.memory_space<vmem>>, vector<48x128xbf16>
    %cst = arith.constant dense<0.000000e+00> : vector<288x128xf32>
    %2 = tpu.matmul %0, %1, %cst {dimension_numbers = #tpu.dot_dimension_numbers<[1], [0], [0], [1], [0, 0, 1, 1], [], []>} : vector<288x48xbf16>, vector<48x128xbf16>, vector<288x128xf32> -> vector<288x128xf32>
    %c0_3 = arith.constant 0 : index
    %c0_4 = arith.constant 0 : index
    %3 = vector.load %arg5[%c0_3, %c0_4] : memref<1x128xf32, #tpu.memory_space<vmem>>, vector<1x128xf32>
    %4 = vector.broadcast %3 : vector<1x128xf32> to vector<288x128xf32>
    %5 = arith.addf %2, %4 : vector<288x128xf32>
    %cst_5 = arith.constant 0.000000e+00 : f32
    %6 = vector.broadcast %cst_5 : f32 to vector<288x128xf32>
    %7 = arith.cmpf oge, %5, %6 : vector<288x128xf32>
    %cst_6 = arith.constant 1.000000e-01 : f32
    %8 = vector.broadcast %cst_6 : f32 to vector<288x128xf32>
    %9 = arith.mulf %8, %5 : vector<288x128xf32>
    %10 = arith.select %7, %5, %9 : vector<288x128xi1>, vector<288x128xf32>
    %11 = arith.truncf %10 : vector<288x128xf32> to vector<288x128xbf16>
    %c0_7 = arith.constant 0 : index
    %c0_8 = arith.constant 0 : index
    %12 = vector.load %arg6[%c0_7, %c0_8] : memref<288x128xbf16, #tpu.memory_space<vmem>>, vector<288x128xbf16>
    tpu.vector_store %arg6[%c0_7, %c0_8], %11 {strides = array<i32>} : memref<288x128xbf16, #tpu.memory_space<vmem>>, vector<288x128xbf16>,
    return
  }
  func.func @transform_0(%arg0: i32, %arg1: i32, %arg2: i32) -> (i32, i32) {
    %c0_i32 = arith.constant 0 : i32
    return %arg0, %arg2 : i32, i32
  }
  func.func @transform_1(%arg0: i32, %arg1: i32, %arg2: i32) -> (i32, i32) {
    %c0_i32 = arith.constant 0 : i32
    return %arg2, %arg1 : i32, i32
  }
  func.func @transform_2(%arg0: i32, %arg1: i32, %arg2: i32) -> (i32, i32) {
    %c0_i32 = arith.constant 0 : i32
    %c0_i32_0 = arith.constant 0 : i32
    return %c0_i32, %arg1 : i32, i32
  }
  func.func @transform_3(%arg0: i32, %arg1: i32, %arg2: i32) -> (i32, i32) {
    %c0_i32 = arith.constant 0 : i32
    return %arg0, %arg1 : i32, i32
  }
}

module attributes {stable_mosaic.version = 11 : i64} {
  func.func @_matmul_bias_act_kernel(%arg0: i32, %arg1: i32, %arg2: i32, %arg3: memref<112x160xbf16, #tpu.memory_space<vmem>>, %arg4: memref<160x128xbf16, #tpu.memory_space<vmem>>, %arg5: memref<1x128xf32, #tpu.memory_space<vmem>>, %arg6: memref<112x128xbf16, #tpu.memory_space<vmem>>, %arg7: memref<112x128xf32, #tpu.memory_space<vmem>>) attributes {dimension_semantics = [#tpu.dimension_semantics<parallel>, #tpu.dimension_semantics<parallel>, #tpu.dimension_semantics<arbitrary>], iteration_bounds = array<i64: 1, 1, 1>, scalar_prefetch = 0 : i64, scratch_operands = 1 : i64, tpu.core_type = #tpu.core_type<tc>, window_params = [{transform_indices = @transform_0, window_bounds = array<i64: 112, 160>}, {transform_indices = @transform_1, window_bounds = array<i64: 160, 128>}, {transform_indices = @transform_2, window_bounds = array<i64: 1, 128>}, {transform_indices = @transform_3, window_bounds = array<i64: 112, 128>}]} {
    %c0 = arith.constant 0 : index
    %c0_0 = arith.constant 0 : index
    %0 = vector.load %arg3[%c0, %c0_0] : memref<112x160xbf16, #tpu.memory_space<vmem>>, vector<112x160xbf16>
    %c0_1 = arith.constant 0 : index
    %c0_2 = arith.constant 0 : index
    %1 = vector.load %arg4[%c0_1, %c0_2] : memref<160x128xbf16, #tpu.memory_space<vmem>>, vector<160x128xbf16>
    %cst = arith.constant dense<0.000000e+00> : vector<112x128xf32>
    %2 = tpu.matmul %0, %1, %cst {dimension_numbers = #tpu.dot_dimension_numbers<[1], [0], [0], [1], [0, 0, 1, 1], [], []>} : vector<112x160xbf16>, vector<160x128xbf16>, vector<112x128xf32> -> vector<112x128xf32>
    %c0_3 = arith.constant 0 : index
    %c0_4 = arith.constant 0 : index
    %3 = vector.load %arg5[%c0_3, %c0_4] : memref<1x128xf32, #tpu.memory_space<vmem>>, vector<1x128xf32>
    %4 = vector.broadcast %3 : vector<1x128xf32> to vector<112x128xf32>
    %5 = arith.addf %2, %4 : vector<112x128xf32>
    %cst_5 = arith.constant 0.000000e+00 : f32
    %6 = vector.broadcast %cst_5 : f32 to vector<112x128xf32>
    %7 = arith.cmpf oge, %5, %6 : vector<112x128xf32>
    %cst_6 = arith.constant 1.000000e-01 : f32
    %8 = vector.broadcast %cst_6 : f32 to vector<112x128xf32>
    %9 = arith.mulf %8, %5 : vector<112x128xf32>
    %10 = arith.select %7, %5, %9 : vector<112x128xi1>, vector<112x128xf32>
    %11 = arith.truncf %10 : vector<112x128xf32> to vector<112x128xbf16>
    %c0_7 = arith.constant 0 : index
    %c0_8 = arith.constant 0 : index
    %12 = vector.load %arg6[%c0_7, %c0_8] : memref<112x128xbf16, #tpu.memory_space<vmem>>, vector<112x128xbf16>
    tpu.vector_store %arg6[%c0_7, %c0_8], %11 {strides = array<i32>} : memref<112x128xbf16, #tpu.memory_space<vmem>>, vector<112x128xbf16>,
    return
  }
  func.func @transform_0(%arg0: i32, %arg1: i32, %arg2: i32) -> (i32, i32) {
    %c0_i32 = arith.constant 0 : i32
    return %arg0, %arg2 : i32, i32
  }
  func.func @transform_1(%arg0: i32, %arg1: i32, %arg2: i32) -> (i32, i32) {
    %c0_i32 = arith.constant 0 : i32
    return %arg2, %arg1 : i32, i32
  }
  func.func @transform_2(%arg0: i32, %arg1: i32, %arg2: i32) -> (i32, i32) {
    %c0_i32 = arith.constant 0 : i32
    %c0_i32_0 = arith.constant 0 : i32
    return %c0_i32, %arg1 : i32, i32
  }
  func.func @transform_3(%arg0: i32, %arg1: i32, %arg2: i32) -> (i32, i32) {
    %c0_i32 = arith.constant 0 : i32
    return %arg0, %arg1 : i32, i32
  }
}

module attributes {stable_mosaic.version = 11 : i64} {
  func.func @_matmul_bias_act_kernel(%arg0: i32, %arg1: i32, %arg2: i32, %arg3: memref<48x320xbf16, #tpu.memory_space<vmem>>, %arg4: memref<320x128xbf16, #tpu.memory_space<vmem>>, %arg5: memref<1x128xf32, #tpu.memory_space<vmem>>, %arg6: memref<48x128xbf16, #tpu.memory_space<vmem>>, %arg7: memref<48x128xf32, #tpu.memory_space<vmem>>) attributes {dimension_semantics = [#tpu.dimension_semantics<parallel>, #tpu.dimension_semantics<parallel>, #tpu.dimension_semantics<arbitrary>], iteration_bounds = array<i64: 1, 1, 1>, scalar_prefetch = 0 : i64, scratch_operands = 1 : i64, tpu.core_type = #tpu.core_type<tc>, window_params = [{transform_indices = @transform_0, window_bounds = array<i64: 48, 320>}, {transform_indices = @transform_1, window_bounds = array<i64: 320, 128>}, {transform_indices = @transform_2, window_bounds = array<i64: 1, 128>}, {transform_indices = @transform_3, window_bounds = array<i64: 48, 128>}]} {
    %c0 = arith.constant 0 : index
    %c0_0 = arith.constant 0 : index
    %0 = vector.load %arg3[%c0, %c0_0] : memref<48x320xbf16, #tpu.memory_space<vmem>>, vector<48x320xbf16>
    %c0_1 = arith.constant 0 : index
    %c0_2 = arith.constant 0 : index
    %1 = vector.load %arg4[%c0_1, %c0_2] : memref<320x128xbf16, #tpu.memory_space<vmem>>, vector<320x128xbf16>
    %cst = arith.constant dense<0.000000e+00> : vector<48x128xf32>
    %2 = tpu.matmul %0, %1, %cst {dimension_numbers = #tpu.dot_dimension_numbers<[1], [0], [0], [1], [0, 0, 1, 1], [], []>} : vector<48x320xbf16>, vector<320x128xbf16>, vector<48x128xf32> -> vector<48x128xf32>
    %c0_3 = arith.constant 0 : index
    %c0_4 = arith.constant 0 : index
    %3 = vector.load %arg5[%c0_3, %c0_4] : memref<1x128xf32, #tpu.memory_space<vmem>>, vector<1x128xf32>
    %4 = vector.broadcast %3 : vector<1x128xf32> to vector<48x128xf32>
    %5 = arith.addf %2, %4 : vector<48x128xf32>
    %cst_5 = arith.constant 0.000000e+00 : f32
    %6 = vector.broadcast %cst_5 : f32 to vector<48x128xf32>
    %7 = arith.cmpf oge, %5, %6 : vector<48x128xf32>
    %cst_6 = arith.constant 1.000000e-01 : f32
    %8 = vector.broadcast %cst_6 : f32 to vector<48x128xf32>
    %9 = arith.mulf %8, %5 : vector<48x128xf32>
    %10 = arith.select %7, %5, %9 : vector<48x128xi1>, vector<48x128xf32>
    %11 = arith.truncf %10 : vector<48x128xf32> to vector<48x128xbf16>
    %c0_7 = arith.constant 0 : index
    %c0_8 = arith.constant 0 : index
    %12 = vector.load %arg6[%c0_7, %c0_8] : memref<48x128xbf16, #tpu.memory_space<vmem>>, vector<48x128xbf16>
    tpu.vector_store %arg6[%c0_7, %c0_8], %11 {strides = array<i32>} : memref<48x128xbf16, #tpu.memory_space<vmem>>, vector<48x128xbf16>,
    return
  }
  func.func @transform_0(%arg0: i32, %arg1: i32, %arg2: i32) -> (i32, i32) {
    %c0_i32 = arith.constant 0 : i32
    return %arg0, %arg2 : i32, i32
  }
  func.func @transform_1(%arg0: i32, %arg1: i32, %arg2: i32) -> (i32, i32) {
    %c0_i32 = arith.constant 0 : i32
    return %arg2, %arg1 : i32, i32
  }
  func.func @transform_2(%arg0: i32, %arg1: i32, %arg2: i32) -> (i32, i32) {
    %c0_i32 = arith.constant 0 : i32
    %c0_i32_0 = arith.constant 0 : i32
    return %c0_i32, %arg1 : i32, i32
  }
  func.func @transform_3(%arg0: i32, %arg1: i32, %arg2: i32) -> (i32, i32) {
    %c0_i32 = arith.constant 0 : i32
    return %arg0, %arg1 : i32, i32
  }
}

module attributes {stable_mosaic.version = 11 : i64} {
  func.func @_matmul_bias_act_kernel(%arg0: i32, %arg1: i32, %arg2: i32, %arg3: memref<64x128xbf16, #tpu.memory_space<vmem>>, %arg4: memref<128x128xbf16, #tpu.memory_space<vmem>>, %arg5: memref<1x128xf32, #tpu.memory_space<vmem>>, %arg6: memref<64x128xf32, #tpu.memory_space<vmem>>, %arg7: memref<64x128xf32, #tpu.memory_space<vmem>>) attributes {dimension_semantics = [#tpu.dimension_semantics<parallel>, #tpu.dimension_semantics<parallel>, #tpu.dimension_semantics<arbitrary>], iteration_bounds = array<i64: 1, 1, 1>, scalar_prefetch = 0 : i64, scratch_operands = 1 : i64, tpu.core_type = #tpu.core_type<tc>, window_params = [{transform_indices = @transform_0, window_bounds = array<i64: 64, 128>}, {transform_indices = @transform_1, window_bounds = array<i64: 128, 128>}, {transform_indices = @transform_2, window_bounds = array<i64: 1, 128>}, {transform_indices = @transform_3, window_bounds = array<i64: 64, 128>}]} {
    %c0 = arith.constant 0 : index
    %c0_0 = arith.constant 0 : index
    %0 = vector.load %arg3[%c0, %c0_0] : memref<64x128xbf16, #tpu.memory_space<vmem>>, vector<64x128xbf16>
    %c0_1 = arith.constant 0 : index
    %c0_2 = arith.constant 0 : index
    %1 = vector.load %arg4[%c0_1, %c0_2] : memref<128x128xbf16, #tpu.memory_space<vmem>>, vector<128x128xbf16>
    %cst = arith.constant dense<0.000000e+00> : vector<64x128xf32>
    %2 = tpu.matmul %0, %1, %cst {dimension_numbers = #tpu.dot_dimension_numbers<[1], [0], [0], [1], [0, 0, 1, 1], [], []>} : vector<64x128xbf16>, vector<128x128xbf16>, vector<64x128xf32> -> vector<64x128xf32>
    %c0_3 = arith.constant 0 : index
    %c0_4 = arith.constant 0 : index
    %3 = vector.load %arg5[%c0_3, %c0_4] : memref<1x128xf32, #tpu.memory_space<vmem>>, vector<1x128xf32>
    %4 = vector.broadcast %3 : vector<1x128xf32> to vector<64x128xf32>
    %5 = arith.addf %2, %4 : vector<64x128xf32>
    %c0_5 = arith.constant 0 : index
    %c0_6 = arith.constant 0 : index
    %6 = vector.load %arg6[%c0_5, %c0_6] : memref<64x128xf32, #tpu.memory_space<vmem>>, vector<64x128xf32>
    tpu.vector_store %arg6[%c0_5, %c0_6], %5 {strides = array<i32>} : memref<64x128xf32, #tpu.memory_space<vmem>>, vector<64x128xf32>,
    return
  }
  func.func @transform_0(%arg0: i32, %arg1: i32, %arg2: i32) -> (i32, i32) {
    %c0_i32 = arith.constant 0 : i32
    return %arg0, %arg2 : i32, i32
  }
  func.func @transform_1(%arg0: i32, %arg1: i32, %arg2: i32) -> (i32, i32) {
    %c0_i32 = arith.constant 0 : i32
    return %arg2, %arg1 : i32, i32
  }
  func.func @transform_2(%arg0: i32, %arg1: i32, %arg2: i32) -> (i32, i32) {
    %c0_i32 = arith.constant 0 : i32
    %c0_i32_0 = arith.constant 0 : i32
    return %c0_i32, %arg1 : i32, i32
  }
  func.func @transform_3(%arg0: i32, %arg1: i32, %arg2: i32) -> (i32, i32) {
    %c0_i32 = arith.constant 0 : i32
    return %arg0, %arg1 : i32, i32
  }
}

module attributes {stable_mosaic.version = 11 : i64} {
  func.func @_matmul_bias_act_kernel(%arg0: i32, %arg1: i32, %arg2: i32, %arg3: memref<80x128xbf16, #tpu.memory_space<vmem>>, %arg4: memref<128x128xbf16, #tpu.memory_space<vmem>>, %arg5: memref<1x128xf32, #tpu.memory_space<vmem>>, %arg6: memref<80x128xf32, #tpu.memory_space<vmem>>, %arg7: memref<80x128xf32, #tpu.memory_space<vmem>>) attributes {dimension_semantics = [#tpu.dimension_semantics<parallel>, #tpu.dimension_semantics<parallel>, #tpu.dimension_semantics<arbitrary>], iteration_bounds = array<i64: 1, 1, 1>, scalar_prefetch = 0 : i64, scratch_operands = 1 : i64, tpu.core_type = #tpu.core_type<tc>, window_params = [{transform_indices = @transform_0, window_bounds = array<i64: 80, 128>}, {transform_indices = @transform_1, window_bounds = array<i64: 128, 128>}, {transform_indices = @transform_2, window_bounds = array<i64: 1, 128>}, {transform_indices = @transform_3, window_bounds = array<i64: 80, 128>}]} {
    %c0 = arith.constant 0 : index
    %c0_0 = arith.constant 0 : index
    %0 = vector.load %arg3[%c0, %c0_0] : memref<80x128xbf16, #tpu.memory_space<vmem>>, vector<80x128xbf16>
    %c0_1 = arith.constant 0 : index
    %c0_2 = arith.constant 0 : index
    %1 = vector.load %arg4[%c0_1, %c0_2] : memref<128x128xbf16, #tpu.memory_space<vmem>>, vector<128x128xbf16>
    %cst = arith.constant dense<0.000000e+00> : vector<80x128xf32>
    %2 = tpu.matmul %0, %1, %cst {dimension_numbers = #tpu.dot_dimension_numbers<[1], [0], [0], [1], [0, 0, 1, 1], [], []>} : vector<80x128xbf16>, vector<128x128xbf16>, vector<80x128xf32> -> vector<80x128xf32>
    %c0_3 = arith.constant 0 : index
    %c0_4 = arith.constant 0 : index
    %3 = vector.load %arg5[%c0_3, %c0_4] : memref<1x128xf32, #tpu.memory_space<vmem>>, vector<1x128xf32>
    %4 = vector.broadcast %3 : vector<1x128xf32> to vector<80x128xf32>
    %5 = arith.addf %2, %4 : vector<80x128xf32>
    %c0_5 = arith.constant 0 : index
    %c0_6 = arith.constant 0 : index
    %6 = vector.load %arg6[%c0_5, %c0_6] : memref<80x128xf32, #tpu.memory_space<vmem>>, vector<80x128xf32>
    tpu.vector_store %arg6[%c0_5, %c0_6], %5 {strides = array<i32>} : memref<80x128xf32, #tpu.memory_space<vmem>>, vector<80x128xf32>,
    return
  }
  func.func @transform_0(%arg0: i32, %arg1: i32, %arg2: i32) -> (i32, i32) {
    %c0_i32 = arith.constant 0 : i32
    return %arg0, %arg2 : i32, i32
  }
  func.func @transform_1(%arg0: i32, %arg1: i32, %arg2: i32) -> (i32, i32) {
    %c0_i32 = arith.constant 0 : i32
    return %arg2, %arg1 : i32, i32
  }
  func.func @transform_2(%arg0: i32, %arg1: i32, %arg2: i32) -> (i32, i32) {
    %c0_i32 = arith.constant 0 : i32
    %c0_i32_0 = arith.constant 0 : i32
    return %c0_i32, %arg1 : i32, i32
  }
  func.func @transform_3(%arg0: i32, %arg1: i32, %arg2: i32) -> (i32, i32) {
    %c0_i32 = arith.constant 0 : i32
    return %arg0, %arg1 : i32, i32
  }
}

</mosaic_0001>

<llo_original>
// kernel: multi_period_disc_forward.30
$region0: #{multi_period_disc_forward.30}
  #allocation0 [shape = 'u32[]', space=smem, size = 0x4, offset = 0x4, fixed_abs, tag = 'smem constant byte address 0x4 - core index']
  #allocation1 [shape = 'u32[72,128]{1,0:T(1,128)}', space=vmem, size = 0x9000, scoped, tag = 'internal scratch']
  #allocation2 [shape = 'f32[512,128]{1,0:T(8,128)}', space=vmem, size = 0x40000, scoped, tag = 'scratch operand']
  %s0 = inlined_call_operand.vmem [shape: bf16[1024,16], index: 0, kind: input, shape index: {}]
  %s1 = inlined_call_operand.vmem [shape: bf16[16,128], index: 1, kind: input, shape index: {}]
  %s2 = inlined_call_operand.vmem [shape: f32[1,128], index: 2, kind: input, shape index: {}]
  %s3 = inlined_call_operand.vmem [shape: bf16[1024,128], index: 3, kind: output, shape index: {}]
  %s4 = sld [smem:[#allocation0]]
  $region45: #{multi_period_disc_forward.30} parent=0
    _
  %s6 = ssub.s32 1, %s4
  %s7 = scalar_select 0, %s6, %s4
  loop: start=0, step=1, limit=4
  $region2: #{multi_period_disc_forward.30} parent=0 // loop_pre_header
    _
  $region3: #{multi_period_disc_forward.30} parent=0 // loop_header
    %s9 = sphi 0, %s13
    %p10 = scmp.ge.s32.totalorder %s9, 4
    %s16 = sphi 0, %s35
    %s17 = sphi 0, %s31
    %s18 = sphi 0, %s27
    %s19 = sphi 0, %s16
    %s20 = sphi 0, %s17
    %s21 = sphi 0, %s18
    %s22 = sphi 0, %s19
    %s23 = sphi 0, %s20
    %s24 = sphi 0, %s21
    %s40 = sphi 0, %s42
    %s43 = sphi 0, %s40
    %s44 = sphi 0, %s43
    %s60 = sphi 0, %s44
    %s68 = sphi 0, %s70
    %s71 = sphi 0, %s68
    %s72 = sphi 0, %s71
    %s88 = sphi 0, %s72
    %s94 = sphi 0, %s96
    %s97 = sphi 0, %s94
    %s98 = sphi 0, %s97
    %s114 = sphi 0, %s98
    %s122 = sphi 0, %s124
    %s125 = sphi 0, %s122
    %s126 = sphi 0, %s125
    %s142 = sphi 0, %s126
  $region4: #{multi_period_disc_forward.30} parent=0 // loop_header_branch
    %12 = sbr.rel (%p10) target = $region8
  $region5: #{multi_period_disc_forward.30} parent=0 // loop_body
    %s14 = ssub.s32 %s9, 1
    %s15 = ssub.s32 %s9, 2
    %s25 = sadd.s32 1, %s18
    %p26 = scmp.ge.s32.totalorder %s25, 1
    %s27 = scalar_select %p26, 0, %s25
    %s28 = sadd.s32 1, %s17
    %s29 = scalar_select %p26, %s28, %s17
    %p30 = scmp.ge.s32.totalorder %s29, 1
    %s31 = scalar_select %p30, 0, %s29
    %s32 = sadd.s32 1, %s16
    %s33 = scalar_select %p30, %s32, %s16
    %p34 = scmp.ge.s32.totalorder %s33, 2
    %s35 = scalar_select %p34, 0, %s33
    %s36 = ssub.s32 %s16, %s35
    %s37 = ssub.s32 %s18, %s27
    %s38 = sor.u32 %s36, %s37
    %p39 = scmp.eq.s32.totalorder %s38, 0
    %s41 = sadd.s32 %s40, 1
    %s42 = scalar_select %p39, %s40, %s41
    %p45 = pneg %p39
    %p46 = scmp.eq.s32.totalorder %s9, 1
    %p47 = por %p45, %p46
    %p48 = scmp.ne.s32.totalorder %s40, %s43
    %p49 = scmp.eq.s32.totalorder %s9, 0
    %p50 = por %p48, %p49
    %p51 = scmp.ne.s32.totalorder %s40, %s43
    %p52 = scmp.eq.s32.totalorder %s14, 1
    %p53 = por %p51, %p52
    %p54 = scmp.ne.s32.totalorder %s43, %s44
    %p55 = scmp.eq.s32.totalorder %s14, 0
    %p56 = por %p54, %p55
    %p57 = scmp.ne.s32.totalorder %s43, %s44
    %p58 = scmp.eq.s32.totalorder %s15, 1
    %p59 = por %p57, %p58
    %p61 = scmp.ne.s32.totalorder %s44, %s60
    %p62 = scmp.eq.s32.totalorder %s15, 0
    %p63 = por %p61, %p62
    %s64 = ssub.s32 %s18, %s27
    %s65 = ssub.s32 %s17, %s31
    %s66 = sor.u32 %s64, %s65
    %p67 = scmp.eq.s32.totalorder %s66, 0
    %s69 = sadd.s32 %s68, 1
    %s70 = scalar_select %p67, %s68, %s69
    %p73 = pneg %p67
    %p74 = scmp.eq.s32.totalorder %s9, 1
    %p75 = por %p73, %p74
    %p76 = scmp.ne.s32.totalorder %s68, %s71
    %p77 = scmp.eq.s32.totalorder %s9, 0
    %p78 = por %p76, %p77
    %p79 = scmp.ne.s32.totalorder %s68, %s71
    %p80 = scmp.eq.s32.totalorder %s14, 1
    %p81 = por %p79, %p80
    %p82 = scmp.ne.s32.totalorder %s71, %s72
    %p83 = scmp.eq.s32.totalorder %s14, 0
    %p84 = por %p82, %p83
    %p85 = scmp.ne.s32.totalorder %s71, %s72
    %p86 = scmp.eq.s32.totalorder %s15, 1
    %p87 = por %p85, %p86
    %p89 = scmp.ne.s32.totalorder %s72, %s88
    %p90 = scmp.eq.s32.totalorder %s15, 0
    %p91 = por %p89, %p90
    %s92 = ssub.s32 %s17, %s31
    %p93 = scmp.eq.s32.totalorder %s92, 0
    %s95 = sadd.s32 %s94, 1
    %s96 = scalar_select %p93, %s94, %s95
    %p99 = pneg %p93
    %p100 = scmp.eq.s32.totalorder %s9, 1
    %p101 = por %p99, %p100
    %p102 = scmp.ne.s32.totalorder %s94, %s97
    %p103 = scmp.eq.s32.totalorder %s9, 0
    %p104 = por %p102, %p103
    %p105 = scmp.ne.s32.totalorder %s94, %s97
    %p106 = scmp.eq.s32.totalorder %s14, 1
    %p107 = por %p105, %p106
    %p108 = scmp.ne.s32.totalorder %s97, %s98
    %p109 = scmp.eq.s32.totalorder %s14, 0
    %p110 = por %p108, %p109
    %p111 = scmp.ne.s32.totalorder %s97, %s98
    %p112 = scmp.eq.s32.totalorder %s15, 1
    %p113 = por %p111, %p112
    %p115 = scmp.ne.s32.totalorder %s98, %s114
    %p116 = scmp.eq.s32.totalorder %s15, 0
    %p117 = por %p115, %p116
    %s118 = ssub.s32 %s16, %s35
    %s119 = ssub.s32 %s17, %s31
    %s120 = sor.u32 %s118, %s119
    %p121 = scmp.eq.s32.totalorder %s120, 0
    %s123 = sadd.s32 %s122, 1
    %s124 = scalar_select %p121, %s122, %s123
    %p127 = pneg %p121
    %p128 = scmp.eq.s32.totalorder %s9, 1
    %p129 = por %p127, %p128
    %p130 = scmp.ne.s32.totalorder %s122, %s125
    %p131 = scmp.eq.s32.totalorder %s9, 0
    %p132 = por %p130, %p131
    %p133 = scmp.ne.s32.totalorder %s122, %s125
    %p134 = scmp.eq.s32.totalorder %s14, 1
    %p135 = por %p133, %p134
    %p136 = scmp.ne.s32.totalorder %s125, %s126
    %p137 = scmp.eq.s32.totalorder %s14, 0
    %p138 = por %p136, %p137
    %p139 = scmp.ne.s32.totalorder %s125, %s126
    %p140 = scmp.eq.s32.totalorder %s15, 1
    %p141 = por %p139, %p140
    %p143 = scmp.ne.s32.totalorder %s126, %s142
    %p144 = scmp.eq.s32.totalorder %s15, 0
    %p145 = por %p143, %p144
    %p146 = scmp.le.s32.totalorder 1, %s9
    %p147 = scmp.lt.s32.totalorder %s9, 3
    %p148 = pnand %p146, %p147
    %p149 = pneg %p148
    // Predicated region
    $region9: #{multi_period_disc_forward.30} parent=5 // pred_check
      _
    $region10: #{multi_period_disc_forward.30} parent=5 // pred_check_branch
      %151 = sbr.rel (%p148) target = $region12
    $region11: #{multi_period_disc_forward.30} parent=5 // pred_region
      %s152 = ssub.s32 %s9, 1
      // Predicated region
      $region13: #{multi_period_disc_forward.30} parent=11 // pred_check
        %p153 = pneg %p84
      $region14: #{multi_period_disc_forward.30} parent=11 // pred_check_branch
        %155 = sbr.rel (%p153) target = $region16
      $region15: #{multi_period_disc_forward.30} parent=11 // pred_region
        %s156 = smul.u32 2, %s21
        %p157 = scmp.lt.s32.totalorder %s156, 1
        %s158 = scalar_select %p157, %s156, 1
        %p159 = scmp.lt.s32.totalorder %s20, 0
        %s160 = scalar_select %p159, %s20, 0
        %s161 = sadd.s32 %s160, %s158
        %s162 = smul.addr %s161, 4
        %s163 = scalar_lea.vmem %s1, %s162
        %s164 = smul.u32 2, %s21
      $region16: #{multi_period_disc_forward.30} parent=11 // pred_fallthru
        _
      // Predicated region
      $region17: #{multi_period_disc_forward.30} parent=11 // pred_check
        %p165 = pneg %p110
      $region18: #{multi_period_disc_forward.30} parent=11 // pred_check_branch
        %167 = sbr.rel (%p165) target = $region20
      $region19: #{multi_period_disc_forward.30} parent=11 // pred_region
        %p168 = scmp.lt.s32.totalorder %s20, 0
        %s169 = scalar_select %p168, %s20, 0
        %s170 = scalar_lea.vmem %s2, %s169
      $region20: #{multi_period_disc_forward.30} parent=11 // pred_fallthru
        _
    $region12: #{multi_period_disc_forward.30} parent=5 // pred_fallthru
      _
    %p171 = scmp.lt.s32.totalorder %s9, 2
    // Predicated region
    $region21: #{multi_period_disc_forward.30} parent=5 // pred_check
      %p172 = pneg %p171
    $region22: #{multi_period_disc_forward.30} parent=5 // pred_check_branch
      %174 = sbr.rel (%p172) target = $region24
    $region23: #{multi_period_disc_forward.30} parent=5 // pred_region
      // Predicated region
      $region25: #{multi_period_disc_forward.30} parent=23 // pred_check
        %p175 = pneg %p50
      $region26: #{multi_period_disc_forward.30} parent=23 // pred_check_branch
        %177 = sbr.rel (%p175) target = $region28
      $region27: #{multi_period_disc_forward.30} parent=23 // pred_region
        %s178 = smul.u32 64, %s16
        %p179 = scmp.lt.s32.totalorder %s178, 127
        %s180 = scalar_select %p179, %s178, 127
        %p181 = scmp.lt.s32.totalorder %s18, 0
        %s182 = scalar_select %p181, %s18, 0
        %s183 = sadd.s32 %s182, %s180
        %s184 = smul.addr %s183, 4
        %s185 = scalar_lea.vmem %s0, %s184
        %s186 = smul.u32 64, %s16
      $region28: #{multi_period_disc_forward.30} parent=23 // pred_fallthru
        _
    $region24: #{multi_period_disc_forward.30} parent=5 // pred_fallthru
      _
    %p187 = scmp.le.s32.totalorder 1, %s9
    %p188 = scmp.lt.s32.totalorder %s9, 3
    %p189 = pnand %p187, %p188
    %p190 = pneg %p189
    // Predicated region
    $region29: #{multi_period_disc_forward.30} parent=5 // pred_check
      _
    $region30: #{multi_period_disc_forward.30} parent=5 // pred_check_branch
      %192 = sbr.rel (%p189) target = $region32
    $region31: #{multi_period_disc_forward.30} parent=5 // pred_region
      %s193 = ssub.s32 %s9, 1
      %s194 = smul.u32 64, %s19
      %p195 = scmp.lt.s32.totalorder %s194, 127
      %s196 = scalar_select %p195, %s194, 127
      %p197 = scmp.lt.s32.totalorder %s21, 0
      %s198 = scalar_select %p197, %s21, 0
      %s199 = sadd.s32 %s198, %s196
      %s200 = smul.addr %s199, 4
      %s201 = scalar_lea.vmem %s0, %s200
      %p202 = pneg %p56
      %p203 = pneg %p53
      %s204 = smul.u32 2, %s21
      %p205 = scmp.lt.s32.totalorder %s204, 1
      %s206 = scalar_select %p205, %s204, 1
      %p207 = scmp.lt.s32.totalorder %s20, 0
      %s208 = scalar_select %p207, %s20, 0
      %s209 = sadd.s32 %s208, %s206
      %s210 = smul.addr %s209, 4
      %s211 = scalar_lea.vmem %s1, %s210
      %p212 = pneg %p84
      %p213 = pneg %p81
      %p214 = scmp.lt.s32.totalorder %s20, 0
      %s215 = scalar_select %p214, %s20, 0
      %s216 = scalar_lea.vmem %s2, %s215
      %p217 = pneg %p110
      %p218 = pneg %p107
      %p219 = pneg %p138
      %p220 = pneg %p135
      %s221 = smul.u32 64, %s19
      %p222 = scmp.lt.s32.totalorder %s221, 127
      %s223 = scalar_select %p222, %s221, 127
      %p224 = scmp.lt.s32.totalorder %s20, 0
      %s225 = scalar_select %p224, %s20, 0
      %s226 = sadd.s32 %s225, %s223
      %s227 = smul.addr %s226, 4
      %s228 = scalar_lea.vmem %s3, %s227
      %s229 = smul.u32 64, %s19
      %p230 = scmp.lt.s32.totalorder %s229, 127
      %s231 = scalar_select %p230, %s229, 127
      %p232 = scmp.lt.s32.totalorder %s21, 0
      %s233 = scalar_select %p232, %s21, 0
      %s234 = sadd.s32 %s233, %s231
      %s235 = smul.addr %s234, 4
      %s236 = scalar_lea.vmem %s0, %s235
      %s237 = smul.u32 64, %s19
      %s238 = smul.u32 2, %s21
      %p239 = scmp.lt.s32.totalorder %s238, 1
      %s240 = scalar_select %p239, %s238, 1
      %p241 = scmp.lt.s32.totalorder %s20, 0
      %s242 = scalar_select %p241, %s20, 0
      %s243 = sadd.s32 %s242, %s240
      %s244 = smul.addr %s243, 4
      %s245 = scalar_lea.vmem %s1, %s244
      %s246 = smul.u32 2, %s21
      %p247 = scmp.lt.s32.totalorder %s20, 0
      %s248 = scalar_select %p247, %s20, 0
      %s249 = scalar_lea.vmem %s2, %s248
      %s250 = smul.u32 64, %s19
      %p251 = scmp.lt.s32.totalorder %s250, 127
      %s252 = scalar_select %p251, %s250, 127
      %p253 = scmp.lt.s32.totalorder %s20, 0
      %s254 = scalar_select %p253, %s20, 0
      %s255 = sadd.s32 %s254, %s252
      %s256 = smul.addr %s255, 4
      %s257 = scalar_lea.vmem %s3, %s256
      %s258 = smul.u32 64, %s19
      %v260 = vld [vmem:[%s236] sm:$0xf]
      %v261 = vld [vmem:[%s236 + $0x4] sm:$0xf]
      %v262 = vld [vmem:[%s236 + $0x8] sm:$0xf]
      %v263 = vld [vmem:[%s236 + $0xc] sm:$0xf]
      %v264 = vld [vmem:[%s236 + $0x10] sm:$0xf]
      %v265 = vld [vmem:[%s236 + $0x14] sm:$0xf]
      %v266 = vld [vmem:[%s236 + $0x18] sm:$0xf]
      %v267 = vld [vmem:[%s236 + $0x1c] sm:$0xf]
      %v268 = vld [vmem:[%s236 + $0x20] sm:$0xf]
      %v269 = vld [vmem:[%s236 + $0x24] sm:$0xf]
      %v270 = vld [vmem:[%s236 + $0x28] sm:$0xf]
      %v271 = vld [vmem:[%s236 + $0x2c] sm:$0xf]
      %v272 = vld [vmem:[%s236 + $0x30] sm:$0xf]
      %v273 = vld [vmem:[%s236 + $0x34] sm:$0xf]
      %v274 = vld [vmem:[%s236 + $0x38] sm:$0xf]
      %v275 = vld [vmem:[%s236 + $0x3c] sm:$0xf]
      %v276 = vld [vmem:[%s236 + $0x40] sm:$0xf]
      %v277 = vld [vmem:[%s236 + $0x44] sm:$0xf]
      %v278 = vld [vmem:[%s236 + $0x48] sm:$0xf]
      %v279 = vld [vmem:[%s236 + $0x4c] sm:$0xf]
      %v280 = vld [vmem:[%s236 + $0x50] sm:$0xf]
      %v281 = vld [vmem:[%s236 + $0x54] sm:$0xf]
      %v282 = vld [vmem:[%s236 + $0x58] sm:$0xf]
      %v283 = vld [vmem:[%s236 + $0x5c] sm:$0xf]
      %v284 = vld [vmem:[%s236 + $0x60] sm:$0xf]
      %v285 = vld [vmem:[%s236 + $0x64] sm:$0xf]
      %v286 = vld [vmem:[%s236 + $0x68] sm:$0xf]
      %v287 = vld [vmem:[%s236 + $0x6c] sm:$0xf]
      %v288 = vld [vmem:[%s236 + $0x70] sm:$0xf]
      %v289 = vld [vmem:[%s236 + $0x74] sm:$0xf]
      %v290 = vld [vmem:[%s236 + $0x78] sm:$0xf]
      %v291 = vld [vmem:[%s236 + $0x7c] sm:$0xf]
      %v292 = vld [vmem:[%s236 + $0x80] sm:$0xf]
      %v293 = vld [vmem:[%s236 + $0x84] sm:$0xf]
      %v294 = vld [vmem:[%s236 + $0x88] sm:$0xf]
      %v295 = vld [vmem:[%s236 + $0x8c] sm:$0xf]
      %v296 = vld [vmem:[%s236 + $0x90] sm:$0xf]
      %v297 = vld [vmem:[%s236 + $0x94] sm:$0xf]
      %v298 = vld [vmem:[%s236 + $0x98] sm:$0xf]
      %v299 = vld [vmem:[%s236 + $0x9c] sm:$0xf]
      %v300 = vld [vmem:[%s236 + $0xa0] sm:$0xf]
      %v301 = vld [vmem:[%s236 + $0xa4] sm:$0xf]
      %v302 = vld [vmem:[%s236 + $0xa8] sm:$0xf]
      %v303 = vld [vmem:[%s236 + $0xac] sm:$0xf]
      %v304 = vld [vmem:[%s236 + $0xb0] sm:$0xf]
      %v305 = vld [vmem:[%s236 + $0xb4] sm:$0xf]
      %v306 = vld [vmem:[%s236 + $0xb8] sm:$0xf]
      %v307 = vld [vmem:[%s236 + $0xbc] sm:$0xf]
      %v308 = vld [vmem:[%s236 + $0xc0] sm:$0xf]
      %v309 = vld [vmem:[%s236 + $0xc4] sm:$0xf]
      %v310 = vld [vmem:[%s236 + $0xc8] sm:$0xf]
      %v311 = vld [vmem:[%s236 + $0xcc] sm:$0xf]
      %v312 = vld [vmem:[%s236 + $0xd0] sm:$0xf]
      %v313 = vld [vmem:[%s236 + $0xd4] sm:$0xf]
      %v314 = vld [vmem:[%s236 + $0xd8] sm:$0xf]
      %v315 = vld [vmem:[%s236 + $0xdc] sm:$0xf]
      %v316 = vld [vmem:[%s236 + $0xe0] sm:$0xf]
      %v317 = vld [vmem:[%s236 + $0xe4] sm:$0xf]
      %v318 = vld [vmem:[%s236 + $0xe8] sm:$0xf]
      %v319 = vld [vmem:[%s236 + $0xec] sm:$0xf]
      %v320 = vld [vmem:[%s236 + $0xf0] sm:$0xf]
      %v321 = vld [vmem:[%s236 + $0xf4] sm:$0xf]
      %v322 = vld [vmem:[%s236 + $0xf8] sm:$0xf]
      %v323 = vld [vmem:[%s236 + $0xfc] sm:$0xf]
      %v324 = vld [vmem:[%s245] sm:$0xf]
      %v325 = vld [vmem:[%s245 + $0x4] sm:$0xf]
      %v326 = vld [vmem:[%s249] sm:$0x1]
      %v328 = vperm.slane %v326, 0
      %v394 = vunpack.c.l.b16 %v260
      %v395 = vunpack.c.l.b16 %v261
      %v396 = vunpack.c.l.b16 %v262
      %v397 = vunpack.c.l.b16 %v263
      %v398 = vunpack.c.l.b16 %v264
      %v399 = vunpack.c.l.b16 %v265
      %v400 = vunpack.c.l.b16 %v266
      %v401 = vunpack.c.l.b16 %v267
      %v402 = vunpack.c.l.b16 %v268
      %v403 = vunpack.c.l.b16 %v269
      %v404 = vunpack.c.l.b16 %v270
      %v405 = vunpack.c.l.b16 %v271
      %v406 = vunpack.c.l.b16 %v272
      %v407 = vunpack.c.l.b16 %v273
      %v408 = vunpack.c.l.b16 %v274
      %v409 = vunpack.c.l.b16 %v275
      %v410 = vunpack.c.l.b16 %v276
      %v411 = vunpack.c.l.b16 %v277
      %v412 = vunpack.c.l.b16 %v278
      %v413 = vunpack.c.l.b16 %v279
      %v414 = vunpack.c.l.b16 %v280
      %v415 = vunpack.c.l.b16 %v281
      %v416 = vunpack.c.l.b16 %v282
      %v417 = vunpack.c.l.b16 %v283
      %v418 = vunpack.c.l.b16 %v284
      %v419 = vunpack.c.l.b16 %v285
      %v420 = vunpack.c.l.b16 %v286
      %v421 = vunpack.c.l.b16 %v287
      %v422 = vunpack.c.l.b16 %v288
      %v423 = vunpack.c.l.b16 %v289
      %v424 = vunpack.c.l.b16 %v290
      %v425 = vunpack.c.l.b16 %v291
      %v426 = vunpack.c.l.b16 %v292
      %v427 = vunpack.c.l.b16 %v293
      %v428 = vunpack.c.l.b16 %v294
      %v429 = vunpack.c.l.b16 %v295
      %v430 = vunpack.c.l.b16 %v296
      %v431 = vunpack.c.l.b16 %v297
      %v432 = vunpack.c.l.b16 %v298
      %v433 = vunpack.c.l.b16 %v299
      %v434 = vunpack.c.l.b16 %v300
      %v435 = vunpack.c.l.b16 %v301
      %v436 = vunpack.c.l.b16 %v302
      %v437 = vunpack.c.l.b16 %v303
      %v438 = vunpack.c.l.b16 %v304
      %v439 = vunpack.c.l.b16 %v305
      %v440 = vunpack.c.l.b16 %v306
      %v441 = vunpack.c.l.b16 %v307
      %v442 = vunpack.c.l.b16 %v308
      %v443 = vunpack.c.l.b16 %v309
      %v444 = vunpack.c.l.b16 %v310
      %v445 = vunpack.c.l.b16 %v311
      %v446 = vunpack.c.l.b16 %v312
      %v447 = vunpack.c.l.b16 %v313
      %v448 = vunpack.c.l.b16 %v314
      %v449 = vunpack.c.l.b16 %v315
      %v450 = vunpack.c.l.b16 %v316
      %v451 = vunpack.c.l.b16 %v317
      %v452 = vunpack.c.l.b16 %v318
      %v453 = vunpack.c.l.b16 %v319
      %v454 = vunpack.c.l.b16 %v320
      %v455 = vunpack.c.l.b16 %v321
      %v456 = vunpack.c.l.b16 %v322
      %v457 = vunpack.c.l.b16 %v323
      %v458 = vpack.c.b16 %v395, %v394
      %v459 = vpack.c.b16 %v397, %v396
      %v460 = vpack.c.b16 %v399, %v398
      %v461 = vpack.c.b16 %v401, %v400
      %v462 = vpack.c.b16 %v403, %v402
      %v463 = vpack.c.b16 %v405, %v404
      %v464 = vpack.c.b16 %v407, %v406
      %v465 = vpack.c.b16 %v409, %v408
      %v466 = vpack.c.b16 %v411, %v410
      %v467 = vpack.c.b16 %v413, %v412
      %v468 = vpack.c.b16 %v415, %v414
      %v469 = vpack.c.b16 %v417, %v416
      %v470 = vpack.c.b16 %v419, %v418
      %v471 = vpack.c.b16 %v421, %v420
      %v472 = vpack.c.b16 %v423, %v422
      %v473 = vpack.c.b16 %v425, %v424
      %v474 = vpack.c.b16 %v427, %v426
      %v475 = vpack.c.b16 %v429, %v428
      %v476 = vpack.c.b16 %v431, %v430
      %v477 = vpack.c.b16 %v433, %v432
      %v478 = vpack.c.b16 %v435, %v434
      %v479 = vpack.c.b16 %v437, %v436
      %v480 = vpack.c.b16 %v439, %v438
      %v481 = vpack.c.b16 %v441, %v440
      %v482 = vpack.c.b16 %v443, %v442
      %v483 = vpack.c.b16 %v445, %v444
      %v484 = vpack.c.b16 %v447, %v446
      %v485 = vpack.c.b16 %v449, %v448
      %v486 = vpack.c.b16 %v451, %v450
      %v487 = vpack.c.b16 %v453, %v452
      %v488 = vpack.c.b16 %v455, %v454
      %v489 = vpack.c.b16 %v457, %v456
      %v492 = vunpack.c.l.b16 %v324
      %v493 = vunpack.c.l.b16 %v325
      %v494 = vpack.c.b16 %v493, %v492
      %vm496 = vcmask 130048
      %v498 = vsel %vm496, %v458, 0
      %v501 = vsel %vm496, %v459, 0
      %v504 = vsel %vm496, %v460, 0
      %v507 = vsel %vm496, %v461, 0
      %v510 = vsel %vm496, %v462, 0
      %v513 = vsel %vm496, %v463, 0
      %v516 = vsel %vm496, %v464, 0
      %v519 = vsel %vm496, %v465, 0
      %v522 = vsel %vm496, %v466, 0
      %v525 = vsel %vm496, %v467, 0
      %v528 = vsel %vm496, %v468, 0
      %v531 = vsel %vm496, %v469, 0
      %v534 = vsel %vm496, %v470, 0
      %v537 = vsel %vm496, %v471, 0
      %v540 = vsel %vm496, %v472, 0
      %v543 = vsel %vm496, %v473, 0
      %v546 = vsel %vm496, %v474, 0
      %v549 = vsel %vm496, %v475, 0
      %v552 = vsel %vm496, %v476, 0
      %v555 = vsel %vm496, %v477, 0
      %v558 = vsel %vm496, %v478, 0
      %v561 = vsel %vm496, %v479, 0
      %v564 = vsel %vm496, %v480, 0
      %v567 = vsel %vm496, %v481, 0
      %v570 = vsel %vm496, %v482, 0
      %v573 = vsel %vm496, %v483, 0
      %v576 = vsel %vm496, %v484, 0
      %v579 = vsel %vm496, %v485, 0
      %v582 = vsel %vm496, %v486, 0
      %v585 = vsel %vm496, %v487, 0
      %v588 = vsel %vm496, %v488, 0
      %v591 = vsel %vm496, %v489, 0
      %593 = vmatpush.bf16.msra.mxu0 0
      %594 = vmatpush.bf16.msra.mxu0 0
      %595 = vmatpush.bf16.msra.mxu0 0
      %596 = vmatpush.bf16.msra.mxu0 0
      %597 = vmatpush.bf16.msra.mxu0 0
      %598 = vmatpush.bf16.msra.mxu0 0
      %599 = vmatpush.bf16.msra.mxu0 0
      %600 = vmatpush.bf16.msra.mxu0 %v494
      %601 = vmatmul.bf16.gmra.mxu0 %v498
      %v602 = vpop.f32.mrf.mxu0
      %v603 = vadd.f32 %v328, %v602
      %v604 = vpop.f32.mrf.mxu0
      %v605 = vadd.f32 %v328, %v604
      %606 = vmatmul.bf16.gmra.mxu0 %v501
      %v607 = vpop.f32.mrf.mxu0
      %v608 = vadd.f32 %v328, %v607
      %v609 = vpop.f32.mrf.mxu0
      %v610 = vadd.f32 %v328, %v609
      %611 = vmatmul.bf16.gmra.mxu0 %v504
      %v612 = vpop.f32.mrf.mxu0
      %v613 = vadd.f32 %v328, %v612
      %v614 = vpop.f32.mrf.mxu0
      %v615 = vadd.f32 %v328, %v614
      %616 = vmatmul.bf16.gmra.mxu0 %v507
      %v617 = vpop.f32.mrf.mxu0
      %v618 = vadd.f32 %v328, %v617
      %v619 = vpop.f32.mrf.mxu0
      %v620 = vadd.f32 %v328, %v619
      %621 = vmatmul.bf16.gmra.mxu0 %v510
      %v622 = vpop.f32.mrf.mxu0
      %v623 = vadd.f32 %v328, %v622
      %v624 = vpop.f32.mrf.mxu0
      %v625 = vadd.f32 %v328, %v624
      %626 = vmatmul.bf16.gmra.mxu0 %v513
      %v627 = vpop.f32.mrf.mxu0
      %v628 = vadd.f32 %v328, %v627
      %v629 = vpop.f32.mrf.mxu0
      %v630 = vadd.f32 %v328, %v629
      %631 = vmatmul.bf16.gmra.mxu0 %v516
      %v632 = vpop.f32.mrf.mxu0
      %v633 = vadd.f32 %v328, %v632
      %v634 = vpop.f32.mrf.mxu0
      %v635 = vadd.f32 %v328, %v634
      %636 = vmatmul.bf16.gmra.mxu0 %v519
      %v637 = vpop.f32.mrf.mxu0
      %v638 = vadd.f32 %v328, %v637
      %v639 = vpop.f32.mrf.mxu0
      %v640 = vadd.f32 %v328, %v639
      %641 = vmatmul.bf16.gmra.mxu0 %v522
      %v642 = vpop.f32.mrf.mxu0
      %v643 = vadd.f32 %v328, %v642
      %v644 = vpop.f32.mrf.mxu0
      %v645 = vadd.f32 %v328, %v644
      %646 = vmatmul.bf16.gmra.mxu0 %v525
      %v647 = vpop.f32.mrf.mxu0
      %v648 = vadd.f32 %v328, %v647
      %v649 = vpop.f32.mrf.mxu0
      %v650 = vadd.f32 %v328, %v649
      %651 = vmatmul.bf16.gmra.mxu0 %v528
      %v652 = vpop.f32.mrf.mxu0
      %v653 = vadd.f32 %v328, %v652
      %v654 = vpop.f32.mrf.mxu0
      %v655 = vadd.f32 %v328, %v654
      %656 = vmatmul.bf16.gmra.mxu0 %v531
      %v657 = vpop.f32.mrf.mxu0
      %v658 = vadd.f32 %v328, %v657
      %v659 = vpop.f32.mrf.mxu0
      %v660 = vadd.f32 %v328, %v659
      %661 = vmatmul.bf16.gmra.mxu0 %v534
      %v662 = vpop.f32.mrf.mxu0
      %v663 = vadd.f32 %v328, %v662
      %v664 = vpop.f32.mrf.mxu0
      %v665 = vadd.f32 %v328, %v664
      %666 = vmatmul.bf16.gmra.mxu0 %v537
      %v667 = vpop.f32.mrf.mxu0
      %v668 = vadd.f32 %v328, %v667
      %v669 = vpop.f32.mrf.mxu0
      %v670 = vadd.f32 %v328, %v669
      %671 = vmatmul.bf16.gmra.mxu0 %v540
      %v672 = vpop.f32.mrf.mxu0
      %v673 = vadd.f32 %v328, %v672
      %v674 = vpop.f32.mrf.mxu0
      %v675 = vadd.f32 %v328, %v674
      %676 = vmatmul.bf16.gmra.mxu0 %v543
      %v677 = vpop.f32.mrf.mxu0
      %v678 = vadd.f32 %v328, %v677
      %v679 = vpop.f32.mrf.mxu0
      %v680 = vadd.f32 %v328, %v679
      %681 = vmatmul.bf16.gmra.mxu0 %v546
      %v682 = vpop.f32.mrf.mxu0
      %v683 = vadd.f32 %v328, %v682
      %v684 = vpop.f32.mrf.mxu0
      %v685 = vadd.f32 %v328, %v684
      %686 = vmatmul.bf16.gmra.mxu0 %v549
      %v687 = vpop.f32.mrf.mxu0
      %v688 = vadd.f32 %v328, %v687
      %v689 = vpop.f32.mrf.mxu0
      %v690 = vadd.f32 %v328, %v689
      %691 = vmatmul.bf16.gmra.mxu0 %v552
      %v692 = vpop.f32.mrf.mxu0
      %v693 = vadd.f32 %v328, %v692
      %v694 = vpop.f32.mrf.mxu0
      %v695 = vadd.f32 %v328, %v694
      %696 = vmatmul.bf16.gmra.mxu0 %v555
      %v697 = vpop.f32.mrf.mxu0
      %v698 = vadd.f32 %v328, %v697
      %v699 = vpop.f32.mrf.mxu0
      %v700 = vadd.f32 %v328, %v699
      %701 = vmatmul.bf16.gmra.mxu0 %v558
      %v702 = vpop.f32.mrf.mxu0
      %v703 = vadd.f32 %v328, %v702
      %v704 = vpop.f32.mrf.mxu0
      %v705 = vadd.f32 %v328, %v704
      %706 = vmatmul.bf16.gmra.mxu0 %v561
      %v707 = vpop.f32.mrf.mxu0
      %v708 = vadd.f32 %v328, %v707
      %v709 = vpop.f32.mrf.mxu0
      %v710 = vadd.f32 %v328, %v709
      %711 = vmatmul.bf16.gmra.mxu0 %v564
      %v712 = vpop.f32.mrf.mxu0
      %v713 = vadd.f32 %v328, %v712
      %v714 = vpop.f32.mrf.mxu0
      %v715 = vadd.f32 %v328, %v714
      %716 = vmatmul.bf16.gmra.mxu0 %v567
      %v717 = vpop.f32.mrf.mxu0
      %v718 = vadd.f32 %v328, %v717
      %v719 = vpop.f32.mrf.mxu0
      %v720 = vadd.f32 %v328, %v719
      %721 = vmatmul.bf16.gmra.mxu0 %v570
      %v722 = vpop.f32.mrf.mxu0
      %v723 = vadd.f32 %v328, %v722
      %v724 = vpop.f32.mrf.mxu0
      %v725 = vadd.f32 %v328, %v724
      %726 = vmatmul.bf16.gmra.mxu0 %v573
      %v727 = vpop.f32.mrf.mxu0
      %v728 = vadd.f32 %v328, %v727
      %v729 = vpop.f32.mrf.mxu0
      %v730 = vadd.f32 %v328, %v729
      %731 = vmatmul.bf16.gmra.mxu0 %v576
      %v732 = vpop.f32.mrf.mxu0
      %v733 = vadd.f32 %v328, %v732
      %v734 = vpop.f32.mrf.mxu0
      %v735 = vadd.f32 %v328, %v734
      %736 = vmatmul.bf16.gmra.mxu0 %v579
      %v737 = vpop.f32.mrf.mxu0
      %v738 = vadd.f32 %v328, %v737
      %v739 = vpop.f32.mrf.mxu0
      %v740 = vadd.f32 %v328, %v739
      %741 = vmatmul.bf16.gmra.mxu0 %v582
      %v742 = vpop.f32.mrf.mxu0
      %v743 = vadd.f32 %v328, %v742
      %v744 = vpop.f32.mrf.mxu0
      %v745 = vadd.f32 %v328, %v744
      %746 = vmatmul.bf16.gmra.mxu0 %v585
      %v747 = vpop.f32.mrf.mxu0
      %v748 = vadd.f32 %v328, %v747
      %v749 = vpop.f32.mrf.mxu0
      %v750 = vadd.f32 %v328, %v749
      %751 = vmatmul.bf16.gmra.mxu0 %v588
      %v752 = vpop.f32.mrf.mxu0
      %v753 = vadd.f32 %v328, %v752
      %v754 = vpop.f32.mrf.mxu0
      %v755 = vadd.f32 %v328, %v754
      %756 = vmatmul.bf16.gmra.mxu0 %v591
      %v757 = vpop.f32.mrf.mxu0
      %v758 = vadd.f32 %v328, %v757
      %v759 = vpop.f32.mrf.mxu0
      %v760 = vadd.f32 %v328, %v759
      %761 = vdwg.mxu0
      %vm762 = vcmp.ge.f32.partialorder %v603, 0.0
      %vm763 = vcmp.ge.f32.partialorder %v605, 0.0
      %vm764 = vcmp.ge.f32.partialorder %v608, 0.0
      %vm765 = vcmp.ge.f32.partialorder %v610, 0.0
      %vm766 = vcmp.ge.f32.partialorder %v613, 0.0
      %vm767 = vcmp.ge.f32.partialorder %v615, 0.0
      %vm768 = vcmp.ge.f32.partialorder %v618, 0.0
      %vm769 = vcmp.ge.f32.partialorder %v620, 0.0
      %vm770 = vcmp.ge.f32.partialorder %v623, 0.0
      %vm771 = vcmp.ge.f32.partialorder %v625, 0.0
      %vm772 = vcmp.ge.f32.partialorder %v628, 0.0
      %vm773 = vcmp.ge.f32.partialorder %v630, 0.0
      %vm774 = vcmp.ge.f32.partialorder %v633, 0.0
      %vm775 = vcmp.ge.f32.partialorder %v635, 0.0
      %vm776 = vcmp.ge.f32.partialorder %v638, 0.0
      %vm777 = vcmp.ge.f32.partialorder %v640, 0.0
      %vm778 = vcmp.ge.f32.partialorder %v643, 0.0
      %vm779 = vcmp.ge.f32.partialorder %v645, 0.0
      %vm780 = vcmp.ge.f32.partialorder %v648, 0.0
      %vm781 = vcmp.ge.f32.partialorder %v650, 0.0
      %vm782 = vcmp.ge.f32.partialorder %v653, 0.0
      %vm783 = vcmp.ge.f32.partialorder %v655, 0.0
      %vm784 = vcmp.ge.f32.partialorder %v658, 0.0
      %vm785 = vcmp.ge.f32.partialorder %v660, 0.0
      %vm786 = vcmp.ge.f32.partialorder %v663, 0.0
      %vm787 = vcmp.ge.f32.partialorder %v665, 0.0
      %vm788 = vcmp.ge.f32.partialorder %v668, 0.0
      %vm789 = vcmp.ge.f32.partialorder %v670, 0.0
      %vm790 = vcmp.ge.f32.partialorder %v673, 0.0
      %vm791 = vcmp.ge.f32.partialorder %v675, 0.0
      %vm792 = vcmp.ge.f32.partialorder %v678, 0.0
      %vm793 = vcmp.ge.f32.partialorder %v680, 0.0
      %vm794 = vcmp.ge.f32.partialorder %v683, 0.0
      %vm795 = vcmp.ge.f32.partialorder %v685, 0.0
      %vm796 = vcmp.ge.f32.partialorder %v688, 0.0
      %vm797 = vcmp.ge.f32.partialorder %v690, 0.0
      %vm798 = vcmp.ge.f32.partialorder %v693, 0.0
      %vm799 = vcmp.ge.f32.partialorder %v695, 0.0
      %vm800 = vcmp.ge.f32.partialorder %v698, 0.0
      %vm801 = vcmp.ge.f32.partialorder %v700, 0.0
      %vm802 = vcmp.ge.f32.partialorder %v703, 0.0
      %vm803 = vcmp.ge.f32.partialorder %v705, 0.0
      %vm804 = vcmp.ge.f32.partialorder %v708, 0.0
      %vm805 = vcmp.ge.f32.partialorder %v710, 0.0
      %vm806 = vcmp.ge.f32.partialorder %v713, 0.0
      %vm807 = vcmp.ge.f32.partialorder %v715, 0.0
      %vm808 = vcmp.ge.f32.partialorder %v718, 0.0
      %vm809 = vcmp.ge.f32.partialorder %v720, 0.0
      %vm810 = vcmp.ge.f32.partialorder %v723, 0.0
      %vm811 = vcmp.ge.f32.partialorder %v725, 0.0
      %vm812 = vcmp.ge.f32.partialorder %v728, 0.0
      %vm813 = vcmp.ge.f32.partialorder %v730, 0.0
      %vm814 = vcmp.ge.f32.partialorder %v733, 0.0
      %vm815 = vcmp.ge.f32.partialorder %v735, 0.0
      %vm816 = vcmp.ge.f32.partialorder %v738, 0.0
      %vm817 = vcmp.ge.f32.partialorder %v740, 0.0
      %vm818 = vcmp.ge.f32.partialorder %v743, 0.0
      %vm819 = vcmp.ge.f32.partialorder %v745, 0.0
      %vm820 = vcmp.ge.f32.partialorder %v748, 0.0
      %vm821 = vcmp.ge.f32.partialorder %v750, 0.0
      %vm822 = vcmp.ge.f32.partialorder %v753, 0.0
      %vm823 = vcmp.ge.f32.partialorder %v755, 0.0
      %vm824 = vcmp.ge.f32.partialorder %v758, 0.0
      %vm825 = vcmp.ge.f32.partialorder %v760, 0.0
      %v826 = vmul.f32 %v603, 0.1
      %v827 = vmul.f32 %v605, 0.1
      %v828 = vmul.f32 %v608, 0.1
      %v829 = vmul.f32 %v610, 0.1
      %v830 = vmul.f32 %v613, 0.1
      %v831 = vmul.f32 %v615, 0.1
      %v832 = vmul.f32 %v618, 0.1
      %v833 = vmul.f32 %v620, 0.1
      %v834 = vmul.f32 %v623, 0.1
      %v835 = vmul.f32 %v625, 0.1
      %v836 = vmul.f32 %v628, 0.1
      %v837 = vmul.f32 %v630, 0.1
      %v838 = vmul.f32 %v633, 0.1
      %v839 = vmul.f32 %v635, 0.1
      %v840 = vmul.f32 %v638, 0.1
      %v841 = vmul.f32 %v640, 0.1
      %v842 = vmul.f32 %v643, 0.1
      %v843 = vmul.f32 %v645, 0.1
      %v844 = vmul.f32 %v648, 0.1
      %v845 = vmul.f32 %v650, 0.1
      %v846 = vmul.f32 %v653, 0.1
      %v847 = vmul.f32 %v655, 0.1
      %v848 = vmul.f32 %v658, 0.1
      %v849 = vmul.f32 %v660, 0.1
      %v850 = vmul.f32 %v663, 0.1
      %v851 = vmul.f32 %v665, 0.1
      %v852 = vmul.f32 %v668, 0.1
      %v853 = vmul.f32 %v670, 0.1
      %v854 = vmul.f32 %v673, 0.1
      %v855 = vmul.f32 %v675, 0.1
      %v856 = vmul.f32 %v678, 0.1
      %v857 = vmul.f32 %v680, 0.1
      %v858 = vmul.f32 %v683, 0.1
      %v859 = vmul.f32 %v685, 0.1
      %v860 = vmul.f32 %v688, 0.1
      %v861 = vmul.f32 %v690, 0.1
      %v862 = vmul.f32 %v693, 0.1
      %v863 = vmul.f32 %v695, 0.1
      %v864 = vmul.f32 %v698, 0.1
      %v865 = vmul.f32 %v700, 0.1
      %v866 = vmul.f32 %v703, 0.1
      %v867 = vmul.f32 %v705, 0.1
      %v868 = vmul.f32 %v708, 0.1
      %v869 = vmul.f32 %v710, 0.1
      %v870 = vmul.f32 %v713, 0.1
      %v871 = vmul.f32 %v715, 0.1
      %v872 = vmul.f32 %v718, 0.1
      %v873 = vmul.f32 %v720, 0.1
      %v874 = vmul.f32 %v723, 0.1
      %v875 = vmul.f32 %v725, 0.1
      %v876 = vmul.f32 %v728, 0.1
      %v877 = vmul.f32 %v730, 0.1
      %v878 = vmul.f32 %v733, 0.1
      %v879 = vmul.f32 %v735, 0.1
      %v880 = vmul.f32 %v738, 0.1
      %v881 = vmul.f32 %v740, 0.1
      %v882 = vmul.f32 %v743, 0.1
      %v883 = vmul.f32 %v745, 0.1
      %v884 = vmul.f32 %v748, 0.1
      %v885 = vmul.f32 %v750, 0.1
      %v886 = vmul.f32 %v753, 0.1
      %v887 = vmul.f32 %v755, 0.1
      %v888 = vmul.f32 %v758, 0.1
      %v889 = vmul.f32 %v760, 0.1
      %v890 = vsel %vm762, %v603, %v826
      %v891 = vsel %vm763, %v605, %v827
      %v892 = vsel %vm764, %v608, %v828
      %v893 = vsel %vm765, %v610, %v829
      %v894 = vsel %vm766, %v613, %v830
      %v895 = vsel %vm767, %v615, %v831
      %v896 = vsel %vm768, %v618, %v832
      %v897 = vsel %vm769, %v620, %v833
      %v898 = vsel %vm770, %v623, %v834
      %v899 = vsel %vm771, %v625, %v835
      %v900 = vsel %vm772, %v628, %v836
      %v901 = vsel %vm773, %v630, %v837
      %v902 = vsel %vm774, %v633, %v838
      %v903 = vsel %vm775, %v635, %v839
      %v904 = vsel %vm776, %v638, %v840
      %v905 = vsel %vm777, %v640, %v841
      %v906 = vsel %vm778, %v643, %v842
      %v907 = vsel %vm779, %v645, %v843
      %v908 = vsel %vm780, %v648, %v844
      %v909 = vsel %vm781, %v650, %v845
      %v910 = vsel %vm782, %v653, %v846
      %v911 = vsel %vm783, %v655, %v847
      %v912 = vsel %vm784, %v658, %v848
      %v913 = vsel %vm785, %v660, %v849
      %v914 = vsel %vm786, %v663, %v850
      %v915 = vsel %vm787, %v665, %v851
      %v916 = vsel %vm788, %v668, %v852
      %v917 = vsel %vm789, %v670, %v853
      %v918 = vsel %vm790, %v673, %v854
      %v919 = vsel %vm791, %v675, %v855
      %v920 = vsel %vm792, %v678, %v856
      %v921 = vsel %vm793, %v680, %v857
      %v922 = vsel %vm794, %v683, %v858
      %v923 = vsel %vm795, %v685, %v859
      %v924 = vsel %vm796, %v688, %v860
      %v925 = vsel %vm797, %v690, %v861
      %v926 = vsel %vm798, %v693, %v862
      %v927 = vsel %vm799, %v695, %v863
      %v928 = vsel %vm800, %v698, %v864
      %v929 = vsel %vm801, %v700, %v865
      %v930 = vsel %vm802, %v703, %v866
      %v931 = vsel %vm803, %v705, %v867
      %v932 = vsel %vm804, %v708, %v868
      %v933 = vsel %vm805, %v710, %v869
      %v934 = vsel %vm806, %v713, %v870
      %v935 = vsel %vm807, %v715, %v871
      %v936 = vsel %vm808, %v718, %v872
      %v937 = vsel %vm809, %v720, %v873
      %v938 = vsel %vm810, %v723, %v874
      %v939 = vsel %vm811, %v725, %v875
      %v940 = vsel %vm812, %v728, %v876
      %v941 = vsel %vm813, %v730, %v877
      %v942 = vsel %vm814, %v733, %v878
      %v943 = vsel %vm815, %v735, %v879
      %v944 = vsel %vm816, %v738, %v880
      %v945 = vsel %vm817, %v740, %v881
      %v946 = vsel %vm818, %v743, %v882
      %v947 = vsel %vm819, %v745, %v883
      %v948 = vsel %vm820, %v748, %v884
      %v949 = vsel %vm821, %v750, %v885
      %v950 = vsel %vm822, %v753, %v886
      %v951 = vsel %vm823, %v755, %v887
      %v952 = vsel %vm824, %v758, %v888
      %v953 = vsel %vm825, %v760, %v889
      %v954 = vpack.c.bf16 %v890, %v890
      %v955 = vpack.c.bf16 %v891, %v891
      %v956 = vpack.c.bf16 %v892, %v892
      %v957 = vpack.c.bf16 %v893, %v893
      %v958 = vpack.c.bf16 %v894, %v894
      %v959 = vpack.c.bf16 %v895, %v895
      %v960 = vpack.c.bf16 %v896, %v896
      %v961 = vpack.c.bf16 %v897, %v897
      %v962 = vpack.c.bf16 %v898, %v898
      %v963 = vpack.c.bf16 %v899, %v899
      %v964 = vpack.c.bf16 %v900, %v900
      %v965 = vpack.c.bf16 %v901, %v901
      %v966 = vpack.c.bf16 %v902, %v902
      %v967 = vpack.c.bf16 %v903, %v903
      %v968 = vpack.c.bf16 %v904, %v904
      %v969 = vpack.c.bf16 %v905, %v905
      %v970 = vpack.c.bf16 %v906, %v906
      %v971 = vpack.c.bf16 %v907, %v907
      %v972 = vpack.c.bf16 %v908, %v908
      %v973 = vpack.c.bf16 %v909, %v909
      %v974 = vpack.c.bf16 %v910, %v910
      %v975 = vpack.c.bf16 %v911, %v911
      %v976 = vpack.c.bf16 %v912, %v912
      %v977 = vpack.c.bf16 %v913, %v913
      %v978 = vpack.c.bf16 %v914, %v914
      %v979 = vpack.c.bf16 %v915, %v915
      %v980 = vpack.c.bf16 %v916, %v916
      %v981 = vpack.c.bf16 %v917, %v917
      %v982 = vpack.c.bf16 %v918, %v918
      %v983 = vpack.c.bf16 %v919, %v919
      %v984 = vpack.c.bf16 %v920, %v920
      %v985 = vpack.c.bf16 %v921, %v921
      %v986 = vpack.c.bf16 %v922, %v922
      %v987 = vpack.c.bf16 %v923, %v923
      %v988 = vpack.c.bf16 %v924, %v924
      %v989 = vpack.c.bf16 %v925, %v925
      %v990 = vpack.c.bf16 %v926, %v926
      %v991 = vpack.c.bf16 %v927, %v927
      %v992 = vpack.c.bf16 %v928, %v928
      %v993 = vpack.c.bf16 %v929, %v929
      %v994 = vpack.c.bf16 %v930, %v930
      %v995 = vpack.c.bf16 %v931, %v931
      %v996 = vpack.c.bf16 %v932, %v932
      %v997 = vpack.c.bf16 %v933, %v933
      %v998 = vpack.c.bf16 %v934, %v934
      %v999 = vpack.c.bf16 %v935, %v935
      %v1000 = vpack.c.bf16 %v936, %v936
      %v1001 = vpack.c.bf16 %v937, %v937
      %v1002 = vpack.c.bf16 %v938, %v938
      %v1003 = vpack.c.bf16 %v939, %v939
      %v1004 = vpack.c.bf16 %v940, %v940
      %v1005 = vpack.c.bf16 %v941, %v941
      %v1006 = vpack.c.bf16 %v942, %v942
      %v1007 = vpack.c.bf16 %v943, %v943
      %v1008 = vpack.c.bf16 %v944, %v944
      %v1009 = vpack.c.bf16 %v945, %v945
      %v1010 = vpack.c.bf16 %v946, %v946
      %v1011 = vpack.c.bf16 %v947, %v947
      %v1012 = vpack.c.bf16 %v948, %v948
      %v1013 = vpack.c.bf16 %v949, %v949
      %v1014 = vpack.c.bf16 %v950, %v950
      %v1015 = vpack.c.bf16 %v951, %v951
      %v1016 = vpack.c.bf16 %v952, %v952
      %v1017 = vpack.c.bf16 %v953, %v953
      %1018 = vst [vmem:[%s257] sm:$0xf] %v954
      %1019 = vst [vmem:[%s257 + $0x4] sm:$0xf] %v955
      %1020 = vst [vmem:[%s257 + $0x8] sm:$0xf] %v956
      %1021 = vst [vmem:[%s257 + $0xc] sm:$0xf] %v957
      %1022 = vst [vmem:[%s257 + $0x10] sm:$0xf] %v958
      %1023 = vst [vmem:[%s257 + $0x14] sm:$0xf] %v959
      %1024 = vst [vmem:[%s257 + $0x18] sm:$0xf] %v960
      %1025 = vst [vmem:[%s257 + $0x1c] sm:$0xf] %v961
      %1026 = vst [vmem:[%s257 + $0x20] sm:$0xf] %v962
      %1027 = vst [vmem:[%s257 + $0x24] sm:$0xf] %v963
      %1028 = vst [vmem:[%s257 + $0x28] sm:$0xf] %v964
      %1029 = vst [vmem:[%s257 + $0x2c] sm:$0xf] %v965
      %1030 = vst [vmem:[%s257 + $0x30] sm:$0xf] %v966
      %1031 = vst [vmem:[%s257 + $0x34] sm:$0xf] %v967
      %1032 = vst [vmem:[%s257 + $0x38] sm:$0xf] %v968
      %1033 = vst [vmem:[%s257 + $0x3c] sm:$0xf] %v969
      %1034 = vst [vmem:[%s257 + $0x40] sm:$0xf] %v970
      %1035 = vst [vmem:[%s257 + $0x44] sm:$0xf] %v971
      %1036 = vst [vmem:[%s257 + $0x48] sm:$0xf] %v972
      %1037 = vst [vmem:[%s257 + $0x4c] sm:$0xf] %v973
      %1038 = vst [vmem:[%s257 + $0x50] sm:$0xf] %v974
      %1039 = vst [vmem:[%s257 + $0x54] sm:$0xf] %v975
      %1040 = vst [vmem:[%s257 + $0x58] sm:$0xf] %v976
      %1041 = vst [vmem:[%s257 + $0x5c] sm:$0xf] %v977
      %1042 = vst [vmem:[%s257 + $0x60] sm:$0xf] %v978
      %1043 = vst [vmem:[%s257 + $0x64] sm:$0xf] %v979
      %1044 = vst [vmem:[%s257 + $0x68] sm:$0xf] %v980
      %1045 = vst [vmem:[%s257 + $0x6c] sm:$0xf] %v981
      %1046 = vst [vmem:[%s257 + $0x70] sm:$0xf] %v982
      %1047 = vst [vmem:[%s257 + $0x74] sm:$0xf] %v983
      %1048 = vst [vmem:[%s257 + $0x78] sm:$0xf] %v984
      %1049 = vst [vmem:[%s257 + $0x7c] sm:$0xf] %v985
      %1050 = vst [vmem:[%s257 + $0x80] sm:$0xf] %v986
      %1051 = vst [vmem:[%s257 + $0x84] sm:$0xf] %v987
      %1052 = vst [vmem:[%s257 + $0x88] sm:$0xf] %v988
      %1053 = vst [vmem:[%s257 + $0x8c] sm:$0xf] %v989
      %1054 = vst [vmem:[%s257 + $0x90] sm:$0xf] %v990
      %1055 = vst [vmem:[%s257 + $0x94] sm:$0xf] %v991
      %1056 = vst [vmem:[%s257 + $0x98] sm:$0xf] %v992
      %1057 = vst [vmem:[%s257 + $0x9c] sm:$0xf] %v993
      %1058 = vst [vmem:[%s257 + $0xa0] sm:$0xf] %v994
      %1059 = vst [vmem:[%s257 + $0xa4] sm:$0xf] %v995
      %1060 = vst [vmem:[%s257 + $0xa8] sm:$0xf] %v996
      %1061 = vst [vmem:[%s257 + $0xac] sm:$0xf] %v997
      %1062 = vst [vmem:[%s257 + $0xb0] sm:$0xf] %v998
      %1063 = vst [vmem:[%s257 + $0xb4] sm:$0xf] %v999
      %1064 = vst [vmem:[%s257 + $0xb8] sm:$0xf] %v1000
      %1065 = vst [vmem:[%s257 + $0xbc] sm:$0xf] %v1001
      %1066 = vst [vmem:[%s257 + $0xc0] sm:$0xf] %v1002
      %1067 = vst [vmem:[%s257 + $0xc4] sm:$0xf] %v1003
      %1068 = vst [vmem:[%s257 + $0xc8] sm:$0xf] %v1004
      %1069 = vst [vmem:[%s257 + $0xcc] sm:$0xf] %v1005
      %1070 = vst [vmem:[%s257 + $0xd0] sm:$0xf] %v1006
      %1071 = vst [vmem:[%s257 + $0xd4] sm:$0xf] %v1007
      %1072 = vst [vmem:[%s257 + $0xd8] sm:$0xf] %v1008
      %1073 = vst [vmem:[%s257 + $0xdc] sm:$0xf] %v1009
      %1074 = vst [vmem:[%s257 + $0xe0] sm:$0xf] %v1010
      %1075 = vst [vmem:[%s257 + $0xe4] sm:$0xf] %v1011
      %1076 = vst [vmem:[%s257 + $0xe8] sm:$0xf] %v1012
      %1077 = vst [vmem:[%s257 + $0xec] sm:$0xf] %v1013
      %1078 = vst [vmem:[%s257 + $0xf0] sm:$0xf] %v1014
      %1079 = vst [vmem:[%s257 + $0xf4] sm:$0xf] %v1015
      %1080 = vst [vmem:[%s257 + $0xf8] sm:$0xf] %v1016
      %1081 = vst [vmem:[%s257 + $0xfc] sm:$0xf] %v1017
      %s1082 = smul.u32 64, %s19
      %p1083 = scmp.lt.s32.totalorder %s1082, 127
      %s1084 = scalar_select %p1083, %s1082, 127
      %p1085 = scmp.lt.s32.totalorder %s20, 0
      %s1086 = scalar_select %p1085, %s20, 0
      %s1087 = sadd.s32 %s1086, %s1084
      %s1088 = smul.addr %s1087, 4
      %s1089 = scalar_lea.vmem %s3, %s1088
      // Predicated region
      $region33: #{multi_period_disc_forward.30} parent=31 // pred_check
        %p1090 = pneg %p135
      $region34: #{multi_period_disc_forward.30} parent=31 // pred_check_branch
        %1092 = sbr.rel (%p1090) target = $region36
      $region35: #{multi_period_disc_forward.30} parent=31 // pred_region
        %s1093 = smul.u32 64, %s19
      $region36: #{multi_period_disc_forward.30} parent=31 // pred_fallthru
        _
    $region32: #{multi_period_disc_forward.30} parent=5 // pred_fallthru
      _
    %p1094 = scmp.le.s32.totalorder 2, %s9
    // Predicated region
    $region37: #{multi_period_disc_forward.30} parent=5 // pred_check
      %p1095 = pneg %p1094
    $region38: #{multi_period_disc_forward.30} parent=5 // pred_check_branch
      %1097 = sbr.rel (%p1095) target = $region40
    $region39: #{multi_period_disc_forward.30} parent=5 // pred_region
      %s1098 = ssub.s32 %s9, 2
      // Predicated region
      $region41: #{multi_period_disc_forward.30} parent=39 // pred_check
        %p1099 = pneg %p141
      $region42: #{multi_period_disc_forward.30} parent=39 // pred_check_branch
        %1101 = sbr.rel (%p1099) target = $region44
      $region43: #{multi_period_disc_forward.30} parent=39 // pred_region
        %s1102 = smul.u32 64, %s22
        %p1103 = scmp.lt.s32.totalorder %s1102, 127
        %s1104 = scalar_select %p1103, %s1102, 127
        %p1105 = scmp.lt.s32.totalorder %s23, 0
        %s1106 = scalar_select %p1105, %s23, 0
        %s1107 = sadd.s32 %s1106, %s1104
        %s1108 = smul.addr %s1107, 4
        %s1109 = scalar_lea.vmem %s3, %s1108
      $region44: #{multi_period_disc_forward.30} parent=39 // pred_fallthru
        _
    $region40: #{multi_period_disc_forward.30} parent=5 // pred_fallthru
      _
  $region6: #{multi_period_disc_forward.30} parent=0 // loop_footer
    %s13 = sadd.s32 1, %s9
  $region7: #{multi_period_disc_forward.30} parent=0 // loop_footer_branch
    %8 = sbr.rel target = $region3
  $region8: #{multi_period_disc_forward.30} parent=0 // loop_exit
    _

// kernel: multi_period_disc_forward.31
$region0: #{multi_period_disc_forward.31}
  #allocation0 [shape = 'u32[]', space=smem, size = 0x4, offset = 0x4, fixed_abs, tag = 'smem constant byte address 0x4 - core index']
  #allocation1 [shape = 'u32[72,128]{1,0:T(1,128)}', space=vmem, size = 0x9000, scoped, tag = 'internal scratch']
  #allocation2 [shape = 'f32[272,128]{1,0:T(8,128)}', space=vmem, size = 0x22000, scoped, tag = 'scratch operand']
  %s0 = inlined_call_operand.vmem [shape: bf16[272,48], index: 0, kind: input, shape index: {}]
  %s1 = inlined_call_operand.vmem [shape: bf16[48,128], index: 1, kind: input, shape index: {}]
  %s2 = inlined_call_operand.vmem [shape: f32[1,128], index: 2, kind: input, shape index: {}]
  %s3 = inlined_call_operand.vmem [shape: bf16[272,128], index: 3, kind: output, shape index: {}]
  %s4 = sld [smem:[#allocation0]]
  $region22: #{multi_period_disc_forward.31} parent=0
    _
  %s6 = ssub.s32 1, %s4
  %s7 = scalar_select 0, %s6, %s4
  // Predicated region
  $region2: #{multi_period_disc_forward.31} parent=0 // pred_check
    _
  $region3: #{multi_period_disc_forward.31} parent=0 // pred_check_branch
    %9 = sbr.rel (0) target = $region5
  $region4: #{multi_period_disc_forward.31} parent=0 // pred_region
    _
  $region5: #{multi_period_disc_forward.31} parent=0 // pred_fallthru
    _
  // Predicated region
  $region6: #{multi_period_disc_forward.31} parent=0 // pred_check
    _
  $region7: #{multi_period_disc_forward.31} parent=0 // pred_check_branch
    %11 = sbr.rel (0) target = $region9
  $region8: #{multi_period_disc_forward.31} parent=0 // pred_region
    _
  $region9: #{multi_period_disc_forward.31} parent=0 // pred_fallthru
    _
  // Predicated region
  $region10: #{multi_period_disc_forward.31} parent=0 // pred_check
    _
  $region11: #{multi_period_disc_forward.31} parent=0 // pred_check_branch
    %13 = sbr.rel (0) target = $region13
  $region12: #{multi_period_disc_forward.31} parent=0 // pred_region
    _
  $region13: #{multi_period_disc_forward.31} parent=0 // pred_fallthru
    _
  %v15 = vld [vmem:[%s0] sm:$0xf]
  %v16 = vld [vmem:[%s0 + $0x4] sm:$0xf]
  %v17 = vld [vmem:[%s0 + $0x8] sm:$0xf]
  %v18 = vld [vmem:[%s0 + $0xc] sm:$0xf]
  %v19 = vld [vmem:[%s0 + $0x10] sm:$0xf]
  %v20 = vld [vmem:[%s0 + $0x14] sm:$0xf]
  %v21 = vld [vmem:[%s0 + $0x18] sm:$0xf]
  %v22 = vld [vmem:[%s0 + $0x1c] sm:$0xf]
  %v23 = vld [vmem:[%s0 + $0x20] sm:$0xf]
  %v24 = vld [vmem:[%s0 + $0x24] sm:$0xf]
  %v25 = vld [vmem:[%s0 + $0x28] sm:$0xf]
  %v26 = vld [vmem:[%s0 + $0x2c] sm:$0xf]
  %v27 = vld [vmem:[%s0 + $0x30] sm:$0xf]
  %v28 = vld [vmem:[%s0 + $0x34] sm:$0xf]
  %v29 = vld [vmem:[%s0 + $0x38] sm:$0xf]
  %v30 = vld [vmem:[%s0 + $0x3c] sm:$0xf]
  %v31 = vld [vmem:[%s0 + $0x40] sm:$0xf]
  %v32 = vld [vmem:[%s0 + $0x44] sm:$0xf]
  %v33 = vld [vmem:[%s0 + $0x48] sm:$0xf]
  %v34 = vld [vmem:[%s0 + $0x4c] sm:$0xf]
  %v35 = vld [vmem:[%s0 + $0x50] sm:$0xf]
  %v36 = vld [vmem:[%s0 + $0x54] sm:$0xf]
  %v37 = vld [vmem:[%s0 + $0x58] sm:$0xf]
  %v38 = vld [vmem:[%s0 + $0x5c] sm:$0xf]
  %v39 = vld [vmem:[%s0 + $0x60] sm:$0xf]
  %v40 = vld [vmem:[%s0 + $0x64] sm:$0xf]
  %v41 = vld [vmem:[%s0 + $0x68] sm:$0xf]
  %v42 = vld [vmem:[%s0 + $0x6c] sm:$0xf]
  %v43 = vld [vmem:[%s0 + $0x70] sm:$0xf]
  %v44 = vld [vmem:[%s0 + $0x74] sm:$0xf]
  %v45 = vld [vmem:[%s0 + $0x78] sm:$0xf]
  %v46 = vld [vmem:[%s0 + $0x7c] sm:$0xf]
  %v47 = vld [vmem:[%s0 + $0x80] sm:$0xf]
  %v48 = vld [vmem:[%s0 + $0x84] sm:$0xf]
  %v49 = vld [vmem:[%s1] sm:$0xf]
  %v50 = vld [vmem:[%s1 + $0x4] sm:$0xf]
  %v51 = vld [vmem:[%s1 + $0x8] sm:$0xf]
  %v52 = vld [vmem:[%s1 + $0xc] sm:$0xf]
  %v53 = vld [vmem:[%s1 + $0x10] sm:$0xf]
  %v54 = vld [vmem:[%s1 + $0x14] sm:$0xf]
  %v55 = vld [vmem:[%s2] sm:$0x1]
  %v57 = vperm.slane %v55, 0
  %v93 = vunpack.c.l.b16 %v15
  %v94 = vunpack.c.l.b16 %v16
  %v95 = vunpack.c.l.b16 %v17
  %v96 = vunpack.c.l.b16 %v18
  %v97 = vunpack.c.l.b16 %v19
  %v98 = vunpack.c.l.b16 %v20
  %v99 = vunpack.c.l.b16 %v21
  %v100 = vunpack.c.l.b16 %v22
  %v101 = vunpack.c.l.b16 %v23
  %v102 = vunpack.c.l.b16 %v24
  %v103 = vunpack.c.l.b16 %v25
  %v104 = vunpack.c.l.b16 %v26
  %v105 = vunpack.c.l.b16 %v27
  %v106 = vunpack.c.l.b16 %v28
  %v107 = vunpack.c.l.b16 %v29
  %v108 = vunpack.c.l.b16 %v30
  %v109 = vunpack.c.l.b16 %v31
  %v110 = vunpack.c.l.b16 %v32
  %v111 = vunpack.c.l.b16 %v33
  %v112 = vunpack.c.l.b16 %v34
  %v113 = vunpack.c.l.b16 %v35
  %v114 = vunpack.c.l.b16 %v36
  %v115 = vunpack.c.l.b16 %v37
  %v116 = vunpack.c.l.b16 %v38
  %v117 = vunpack.c.l.b16 %v39
  %v118 = vunpack.c.l.b16 %v40
  %v119 = vunpack.c.l.b16 %v41
  %v120 = vunpack.c.l.b16 %v42
  %v121 = vunpack.c.l.b16 %v43
  %v122 = vunpack.c.l.b16 %v44
  %v123 = vunpack.c.l.b16 %v45
  %v124 = vunpack.c.l.b16 %v46
  %v125 = vunpack.c.l.b16 %v47
  %v126 = vunpack.c.l.b16 %v48
  %v127 = vpack.c.b16 %v94, %v93
  %v128 = vpack.c.b16 %v96, %v95
  %v129 = vpack.c.b16 %v98, %v97
  %v130 = vpack.c.b16 %v100, %v99
  %v131 = vpack.c.b16 %v102, %v101
  %v132 = vpack.c.b16 %v104, %v103
  %v133 = vpack.c.b16 %v106, %v105
  %v134 = vpack.c.b16 %v108, %v107
  %v135 = vpack.c.b16 %v110, %v109
  %v136 = vpack.c.b16 %v112, %v111
  %v137 = vpack.c.b16 %v114, %v113
  %v138 = vpack.c.b16 %v116, %v115
  %v139 = vpack.c.b16 %v118, %v117
  %v140 = vpack.c.b16 %v120, %v119
  %v141 = vpack.c.b16 %v122, %v121
  %v142 = vpack.c.b16 %v124, %v123
  %v143 = vpack.c.b16 %v126, %v125
  %v150 = vunpack.c.l.b16 %v49
  %v151 = vunpack.c.l.b16 %v50
  %v152 = vunpack.c.l.b16 %v51
  %v153 = vunpack.c.l.b16 %v52
  %v154 = vunpack.c.l.b16 %v53
  %v155 = vunpack.c.l.b16 %v54
  %v156 = vpack.c.b16 %v151, %v150
  %v157 = vpack.c.b16 %v153, %v152
  %v158 = vpack.c.b16 %v155, %v154
  %vm162 = vcmask 392192
  %v164 = vsel %vm162, %v127, 0
  %v167 = vsel %vm162, %v128, 0
  %v170 = vsel %vm162, %v129, 0
  %v173 = vsel %vm162, %v130, 0
  %v176 = vsel %vm162, %v131, 0
  %v179 = vsel %vm162, %v132, 0
  %v182 = vsel %vm162, %v133, 0
  %v185 = vsel %vm162, %v134, 0
  %v188 = vsel %vm162, %v135, 0
  %v191 = vsel %vm162, %v136, 0
  %v194 = vsel %vm162, %v137, 0
  %v197 = vsel %vm162, %v138, 0
  %v200 = vsel %vm162, %v139, 0
  %v203 = vsel %vm162, %v140, 0
  %v206 = vsel %vm162, %v141, 0
  %v209 = vsel %vm162, %v142, 0
  %v212 = vsel %vm162, %v143, 0
  %214 = vmatpush.bf16.msra.mxu0 0
  %215 = vmatpush.bf16.msra.mxu0 0
  %216 = vmatpush.bf16.msra.mxu0 0
  %217 = vmatpush.bf16.msra.mxu0 0
  %218 = vmatpush.bf16.msra.mxu0 0
  %219 = vmatpush.bf16.msra.mxu0 %v158
  %220 = vmatpush.bf16.msra.mxu0 %v157
  %221 = vmatpush.bf16.msra.mxu0 %v156
  %222 = vmatmul.bf16.gmra.mxu0 %v164
  %v223 = vpop.f32.mrf.mxu0
  %v224 = vadd.f32 %v57, %v223
  %v225 = vpop.f32.mrf.mxu0
  %v226 = vadd.f32 %v57, %v225
  %227 = vmatmul.bf16.gmra.mxu0 %v167
  %v228 = vpop.f32.mrf.mxu0
  %v229 = vadd.f32 %v57, %v228
  %v230 = vpop.f32.mrf.mxu0
  %v231 = vadd.f32 %v57, %v230
  %232 = vmatmul.bf16.gmra.mxu0 %v170
  %v233 = vpop.f32.mrf.mxu0
  %v234 = vadd.f32 %v57, %v233
  %v235 = vpop.f32.mrf.mxu0
  %v236 = vadd.f32 %v57, %v235
  %237 = vmatmul.bf16.gmra.mxu0 %v173
  %v238 = vpop.f32.mrf.mxu0
  %v239 = vadd.f32 %v57, %v238
  %v240 = vpop.f32.mrf.mxu0
  %v241 = vadd.f32 %v57, %v240
  %242 = vmatmul.bf16.gmra.mxu0 %v176
  %v243 = vpop.f32.mrf.mxu0
  %v244 = vadd.f32 %v57, %v243
  %v245 = vpop.f32.mrf.mxu0
  %v246 = vadd.f32 %v57, %v245
  %247 = vmatmul.bf16.gmra.mxu0 %v179
  %v248 = vpop.f32.mrf.mxu0
  %v249 = vadd.f32 %v57, %v248
  %v250 = vpop.f32.mrf.mxu0
  %v251 = vadd.f32 %v57, %v250
  %252 = vmatmul.bf16.gmra.mxu0 %v182
  %v253 = vpop.f32.mrf.mxu0
  %v254 = vadd.f32 %v57, %v253
  %v255 = vpop.f32.mrf.mxu0
  %v256 = vadd.f32 %v57, %v255
  %257 = vmatmul.bf16.gmra.mxu0 %v185
  %v258 = vpop.f32.mrf.mxu0
  %v259 = vadd.f32 %v57, %v258
  %v260 = vpop.f32.mrf.mxu0
  %v261 = vadd.f32 %v57, %v260
  %262 = vmatmul.bf16.gmra.mxu0 %v188
  %v263 = vpop.f32.mrf.mxu0
  %v264 = vadd.f32 %v57, %v263
  %v265 = vpop.f32.mrf.mxu0
  %v266 = vadd.f32 %v57, %v265
  %267 = vmatmul.bf16.gmra.mxu0 %v191
  %v268 = vpop.f32.mrf.mxu0
  %v269 = vadd.f32 %v57, %v268
  %v270 = vpop.f32.mrf.mxu0
  %v271 = vadd.f32 %v57, %v270
  %272 = vmatmul.bf16.gmra.mxu0 %v194
  %v273 = vpop.f32.mrf.mxu0
  %v274 = vadd.f32 %v57, %v273
  %v275 = vpop.f32.mrf.mxu0
  %v276 = vadd.f32 %v57, %v275
  %277 = vmatmul.bf16.gmra.mxu0 %v197
  %v278 = vpop.f32.mrf.mxu0
  %v279 = vadd.f32 %v57, %v278
  %v280 = vpop.f32.mrf.mxu0
  %v281 = vadd.f32 %v57, %v280
  %282 = vmatmul.bf16.gmra.mxu0 %v200
  %v283 = vpop.f32.mrf.mxu0
  %v284 = vadd.f32 %v57, %v283
  %v285 = vpop.f32.mrf.mxu0
  %v286 = vadd.f32 %v57, %v285
  %287 = vmatmul.bf16.gmra.mxu0 %v203
  %v288 = vpop.f32.mrf.mxu0
  %v289 = vadd.f32 %v57, %v288
  %v290 = vpop.f32.mrf.mxu0
  %v291 = vadd.f32 %v57, %v290
  %292 = vmatmul.bf16.gmra.mxu0 %v206
  %v293 = vpop.f32.mrf.mxu0
  %v294 = vadd.f32 %v57, %v293
  %v295 = vpop.f32.mrf.mxu0
  %v296 = vadd.f32 %v57, %v295
  %297 = vmatmul.bf16.gmra.mxu0 %v209
  %v298 = vpop.f32.mrf.mxu0
  %v299 = vadd.f32 %v57, %v298
  %v300 = vpop.f32.mrf.mxu0
  %v301 = vadd.f32 %v57, %v300
  %302 = vmatmul.bf16.gmra.mxu0 %v212
  %v303 = vpop.f32.mrf.mxu0
  %v304 = vadd.f32 %v57, %v303
  %v305 = vpop.f32.mrf.mxu0
  %v306 = vadd.f32 %v57, %v305
  %307 = vdwg.mxu0
  %vm308 = vcmp.ge.f32.partialorder %v224, 0.0
  %vm309 = vcmp.ge.f32.partialorder %v226, 0.0
  %vm310 = vcmp.ge.f32.partialorder %v229, 0.0
  %vm311 = vcmp.ge.f32.partialorder %v231, 0.0
  %vm312 = vcmp.ge.f32.partialorder %v234, 0.0
  %vm313 = vcmp.ge.f32.partialorder %v236, 0.0
  %vm314 = vcmp.ge.f32.partialorder %v239, 0.0
  %vm315 = vcmp.ge.f32.partialorder %v241, 0.0
  %vm316 = vcmp.ge.f32.partialorder %v244, 0.0
  %vm317 = vcmp.ge.f32.partialorder %v246, 0.0
  %vm318 = vcmp.ge.f32.partialorder %v249, 0.0
  %vm319 = vcmp.ge.f32.partialorder %v251, 0.0
  %vm320 = vcmp.ge.f32.partialorder %v254, 0.0
  %vm321 = vcmp.ge.f32.partialorder %v256, 0.0
  %vm322 = vcmp.ge.f32.partialorder %v259, 0.0
  %vm323 = vcmp.ge.f32.partialorder %v261, 0.0
  %vm324 = vcmp.ge.f32.partialorder %v264, 0.0
  %vm325 = vcmp.ge.f32.partialorder %v266, 0.0
  %vm326 = vcmp.ge.f32.partialorder %v269, 0.0
  %vm327 = vcmp.ge.f32.partialorder %v271, 0.0
  %vm328 = vcmp.ge.f32.partialorder %v274, 0.0
  %vm329 = vcmp.ge.f32.partialorder %v276, 0.0
  %vm330 = vcmp.ge.f32.partialorder %v279, 0.0
  %vm331 = vcmp.ge.f32.partialorder %v281, 0.0
  %vm332 = vcmp.ge.f32.partialorder %v284, 0.0
  %vm333 = vcmp.ge.f32.partialorder %v286, 0.0
  %vm334 = vcmp.ge.f32.partialorder %v289, 0.0
  %vm335 = vcmp.ge.f32.partialorder %v291, 0.0
  %vm336 = vcmp.ge.f32.partialorder %v294, 0.0
  %vm337 = vcmp.ge.f32.partialorder %v296, 0.0
  %vm338 = vcmp.ge.f32.partialorder %v299, 0.0
  %vm339 = vcmp.ge.f32.partialorder %v301, 0.0
  %vm340 = vcmp.ge.f32.partialorder %v304, 0.0
  %vm341 = vcmp.ge.f32.partialorder %v306, 0.0
  %v342 = vmul.f32 %v224, 0.1
  %v343 = vmul.f32 %v226, 0.1
  %v344 = vmul.f32 %v229, 0.1
  %v345 = vmul.f32 %v231, 0.1
  %v346 = vmul.f32 %v234, 0.1
  %v347 = vmul.f32 %v236, 0.1
  %v348 = vmul.f32 %v239, 0.1
  %v349 = vmul.f32 %v241, 0.1
  %v350 = vmul.f32 %v244, 0.1
  %v351 = vmul.f32 %v246, 0.1
  %v352 = vmul.f32 %v249, 0.1
  %v353 = vmul.f32 %v251, 0.1
  %v354 = vmul.f32 %v254, 0.1
  %v355 = vmul.f32 %v256, 0.1
  %v356 = vmul.f32 %v259, 0.1
  %v357 = vmul.f32 %v261, 0.1
  %v358 = vmul.f32 %v264, 0.1
  %v359 = vmul.f32 %v266, 0.1
  %v360 = vmul.f32 %v269, 0.1
  %v361 = vmul.f32 %v271, 0.1
  %v362 = vmul.f32 %v274, 0.1
  %v363 = vmul.f32 %v276, 0.1
  %v364 = vmul.f32 %v279, 0.1
  %v365 = vmul.f32 %v281, 0.1
  %v366 = vmul.f32 %v284, 0.1
  %v367 = vmul.f32 %v286, 0.1
  %v368 = vmul.f32 %v289, 0.1
  %v369 = vmul.f32 %v291, 0.1
  %v370 = vmul.f32 %v294, 0.1
  %v371 = vmul.f32 %v296, 0.1
  %v372 = vmul.f32 %v299, 0.1
  %v373 = vmul.f32 %v301, 0.1
  %v374 = vmul.f32 %v304, 0.1
  %v375 = vmul.f32 %v306, 0.1
  %v376 = vsel %vm308, %v224, %v342
  %v377 = vsel %vm309, %v226, %v343
  %v378 = vsel %vm310, %v229, %v344
  %v379 = vsel %vm311, %v231, %v345
  %v380 = vsel %vm312, %v234, %v346
  %v381 = vsel %vm313, %v236, %v347
  %v382 = vsel %vm314, %v239, %v348
  %v383 = vsel %vm315, %v241, %v349
  %v384 = vsel %vm316, %v244, %v350
  %v385 = vsel %vm317, %v246, %v351
  %v386 = vsel %vm318, %v249, %v352
  %v387 = vsel %vm319, %v251, %v353
  %v388 = vsel %vm320, %v254, %v354
  %v389 = vsel %vm321, %v256, %v355
  %v390 = vsel %vm322, %v259, %v356
  %v391 = vsel %vm323, %v261, %v357
  %v392 = vsel %vm324, %v264, %v358
  %v393 = vsel %vm325, %v266, %v359
  %v394 = vsel %vm326, %v269, %v360
  %v395 = vsel %vm327, %v271, %v361
  %v396 = vsel %vm328, %v274, %v362
  %v397 = vsel %vm329, %v276, %v363
  %v398 = vsel %vm330, %v279, %v364
  %v399 = vsel %vm331, %v281, %v365
  %v400 = vsel %vm332, %v284, %v366
  %v401 = vsel %vm333, %v286, %v367
  %v402 = vsel %vm334, %v289, %v368
  %v403 = vsel %vm335, %v291, %v369
  %v404 = vsel %vm336, %v294, %v370
  %v405 = vsel %vm337, %v296, %v371
  %v406 = vsel %vm338, %v299, %v372
  %v407 = vsel %vm339, %v301, %v373
  %v408 = vsel %vm340, %v304, %v374
  %v409 = vsel %vm341, %v306, %v375
  %v410 = vpack.c.bf16 %v376, %v376
  %v411 = vpack.c.bf16 %v377, %v377
  %v412 = vpack.c.bf16 %v378, %v378
  %v413 = vpack.c.bf16 %v379, %v379
  %v414 = vpack.c.bf16 %v380, %v380
  %v415 = vpack.c.bf16 %v381, %v381
  %v416 = vpack.c.bf16 %v382, %v382
  %v417 = vpack.c.bf16 %v383, %v383
  %v418 = vpack.c.bf16 %v384, %v384
  %v419 = vpack.c.bf16 %v385, %v385
  %v420 = vpack.c.bf16 %v386, %v386
  %v421 = vpack.c.bf16 %v387, %v387
  %v422 = vpack.c.bf16 %v388, %v388
  %v423 = vpack.c.bf16 %v389, %v389
  %v424 = vpack.c.bf16 %v390, %v390
  %v425 = vpack.c.bf16 %v391, %v391
  %v426 = vpack.c.bf16 %v392, %v392
  %v427 = vpack.c.bf16 %v393, %v393
  %v428 = vpack.c.bf16 %v394, %v394
  %v429 = vpack.c.bf16 %v395, %v395
  %v430 = vpack.c.bf16 %v396, %v396
  %v431 = vpack.c.bf16 %v397, %v397
  %v432 = vpack.c.bf16 %v398, %v398
  %v433 = vpack.c.bf16 %v399, %v399
  %v434 = vpack.c.bf16 %v400, %v400
  %v435 = vpack.c.bf16 %v401, %v401
  %v436 = vpack.c.bf16 %v402, %v402
  %v437 = vpack.c.bf16 %v403, %v403
  %v438 = vpack.c.bf16 %v404, %v404
  %v439 = vpack.c.bf16 %v405, %v405
  %v440 = vpack.c.bf16 %v406, %v406
  %v441 = vpack.c.bf16 %v407, %v407
  %v442 = vpack.c.bf16 %v408, %v408
  %v443 = vpack.c.bf16 %v409, %v409
  %444 = vst [vmem:[%s3] sm:$0xf] %v410
  %445 = vst [vmem:[%s3 + $0x4] sm:$0xf] %v411
  %446 = vst [vmem:[%s3 + $0x8] sm:$0xf] %v412
  %447 = vst [vmem:[%s3 + $0xc] sm:$0xf] %v413
  %448 = vst [vmem:[%s3 + $0x10] sm:$0xf] %v414
  %449 = vst [vmem:[%s3 + $0x14] sm:$0xf] %v415
  %450 = vst [vmem:[%s3 + $0x18] sm:$0xf] %v416
  %451 = vst [vmem:[%s3 + $0x1c] sm:$0xf] %v417
  %452 = vst [vmem:[%s3 + $0x20] sm:$0xf] %v418
  %453 = vst [vmem:[%s3 + $0x24] sm:$0xf] %v419
  %454 = vst [vmem:[%s3 + $0x28] sm:$0xf] %v420
  %455 = vst [vmem:[%s3 + $0x2c] sm:$0xf] %v421
  %456 = vst [vmem:[%s3 + $0x30] sm:$0xf] %v422
  %457 = vst [vmem:[%s3 + $0x34] sm:$0xf] %v423
  %458 = vst [vmem:[%s3 + $0x38] sm:$0xf] %v424
  %459 = vst [vmem:[%s3 + $0x3c] sm:$0xf] %v425
  %460 = vst [vmem:[%s3 + $0x40] sm:$0xf] %v426
  %461 = vst [vmem:[%s3 + $0x44] sm:$0xf] %v427
  %462 = vst [vmem:[%s3 + $0x48] sm:$0xf] %v428
  %463 = vst [vmem:[%s3 + $0x4c] sm:$0xf] %v429
  %464 = vst [vmem:[%s3 + $0x50] sm:$0xf] %v430
  %465 = vst [vmem:[%s3 + $0x54] sm:$0xf] %v431
  %466 = vst [vmem:[%s3 + $0x58] sm:$0xf] %v432
  %467 = vst [vmem:[%s3 + $0x5c] sm:$0xf] %v433
  %468 = vst [vmem:[%s3 + $0x60] sm:$0xf] %v434
  %469 = vst [vmem:[%s3 + $0x64] sm:$0xf] %v435
  %470 = vst [vmem:[%s3 + $0x68] sm:$0xf] %v436
  %471 = vst [vmem:[%s3 + $0x6c] sm:$0xf] %v437
  %472 = vst [vmem:[%s3 + $0x70] sm:$0xf] %v438
  %473 = vst [vmem:[%s3 + $0x74] sm:$0xf] %v439
  %474 = vst [vmem:[%s3 + $0x78] sm:$0xf] %v440
  %475 = vst [vmem:[%s3 + $0x7c] sm:$0xf] %v441
  %476 = vst [vmem:[%s3 + $0x80] sm:$0xf] %v442
  %477 = vst [vmem:[%s3 + $0x84] sm:$0xf] %v443
  // Predicated region
  $region14: #{multi_period_disc_forward.31} parent=0 // pred_check
    _
  $region15: #{multi_period_disc_forward.31} parent=0 // pred_check_branch
    %479 = sbr.rel (0) target = $region17
  $region16: #{multi_period_disc_forward.31} parent=0 // pred_region
    _
  $region17: #{multi_period_disc_forward.31} parent=0 // pred_fallthru
    _
  // Predicated region
  $region18: #{multi_period_disc_forward.31} parent=0 // pred_check
    _
  $region19: #{multi_period_disc_forward.31} parent=0 // pred_check_branch
    %481 = sbr.rel (0) target = $region21
  $region20: #{multi_period_disc_forward.31} parent=0 // pred_region
    _
  $region21: #{multi_period_disc_forward.31} parent=0 // pred_fallthru
    _

// kernel: multi_period_disc_forward.32
$region0: #{multi_period_disc_forward.32}
  #allocation0 [shape = 'u32[]', space=smem, size = 0x4, offset = 0x4, fixed_abs, tag = 'smem constant byte address 0x4 - core index']
  #allocation1 [shape = 'u32[72,128]{1,0:T(1,128)}', space=vmem, size = 0x9000, scoped, tag = 'internal scratch']
  #allocation2 [shape = 'f32[96,128]{1,0:T(8,128)}', space=vmem, size = 0xc000, scoped, tag = 'scratch operand']
  %s0 = inlined_call_operand.vmem [shape: bf16[96,160], index: 0, kind: input, shape index: {}]
  %s1 = inlined_call_operand.vmem [shape: bf16[160,128], index: 1, kind: input, shape index: {}]
  %s2 = inlined_call_operand.vmem [shape: f32[1,128], index: 2, kind: input, shape index: {}]
  %s3 = inlined_call_operand.vmem [shape: bf16[96,128], index: 3, kind: output, shape index: {}]
  %s4 = sld [smem:[#allocation0]]
  $region22: #{multi_period_disc_forward.32} parent=0
    _
  %s6 = ssub.s32 1, %s4
  %s7 = scalar_select 0, %s6, %s4
  // Predicated region
  $region2: #{multi_period_disc_forward.32} parent=0 // pred_check
    _
  $region3: #{multi_period_disc_forward.32} parent=0 // pred_check_branch
    %9 = sbr.rel (0) target = $region5
  $region4: #{multi_period_disc_forward.32} parent=0 // pred_region
    _
  $region5: #{multi_period_disc_forward.32} parent=0 // pred_fallthru
    _
  // Predicated region
  $region6: #{multi_period_disc_forward.32} parent=0 // pred_check
    _
  $region7: #{multi_period_disc_forward.32} parent=0 // pred_check_branch
    %11 = sbr.rel (0) target = $region9
  $region8: #{multi_period_disc_forward.32} parent=0 // pred_region
    _
  $region9: #{multi_period_disc_forward.32} parent=0 // pred_fallthru
    _
  // Predicated region
  $region10: #{multi_period_disc_forward.32} parent=0 // pred_check
    _
  $region11: #{multi_period_disc_forward.32} parent=0 // pred_check_branch
    %13 = sbr.rel (0) target = $region13
  $region12: #{multi_period_disc_forward.32} parent=0 // pred_region
    _
  $region13: #{multi_period_disc_forward.32} parent=0 // pred_fallthru
    _
  %v15 = vld [vmem:[%s0] sm:$0xff]
  %v16 = vld [vmem:[%s0 + $0x8] sm:$0xff]
  %v17 = vld [vmem:[%s0 + $0x10] sm:$0xff]
  %v18 = vld [vmem:[%s0 + $0x18] sm:$0xff]
  %v19 = vld [vmem:[%s0 + $0x20] sm:$0xff]
  %v20 = vld [vmem:[%s0 + $0x28] sm:$0xff]
  %v21 = vld [vmem:[%s0 + $0x30] sm:$0xff]
  %v22 = vld [vmem:[%s0 + $0x38] sm:$0xff]
  %v23 = vld [vmem:[%s0 + $0x40] sm:$0xff]
  %v24 = vld [vmem:[%s0 + $0x48] sm:$0xff]
  %v25 = vld [vmem:[%s0 + $0x50] sm:$0xff]
  %v26 = vld [vmem:[%s0 + $0x58] sm:$0xff]
  %v27 = vld [vmem:[%s1] sm:$0xf]
  %v28 = vld [vmem:[%s1 + $0x4] sm:$0xf]
  %v29 = vld [vmem:[%s1 + $0x8] sm:$0xf]
  %v30 = vld [vmem:[%s1 + $0xc] sm:$0xf]
  %v31 = vld [vmem:[%s1 + $0x10] sm:$0xf]
  %v32 = vld [vmem:[%s1 + $0x14] sm:$0xf]
  %v33 = vld [vmem:[%s1 + $0x18] sm:$0xf]
  %v34 = vld [vmem:[%s1 + $0x1c] sm:$0xf]
  %v35 = vld [vmem:[%s1 + $0x20] sm:$0xf]
  %v36 = vld [vmem:[%s1 + $0x24] sm:$0xf]
  %v37 = vld [vmem:[%s1 + $0x28] sm:$0xf]
  %v38 = vld [vmem:[%s1 + $0x2c] sm:$0xf]
  %v39 = vld [vmem:[%s1 + $0x30] sm:$0xf]
  %v40 = vld [vmem:[%s1 + $0x34] sm:$0xf]
  %v41 = vld [vmem:[%s1 + $0x38] sm:$0xf]
  %v42 = vld [vmem:[%s1 + $0x3c] sm:$0xf]
  %v43 = vld [vmem:[%s1 + $0x40] sm:$0xf]
  %v44 = vld [vmem:[%s1 + $0x44] sm:$0xf]
  %v45 = vld [vmem:[%s1 + $0x48] sm:$0xf]
  %v46 = vld [vmem:[%s1 + $0x4c] sm:$0xf]
  %v47 = vld [vmem:[%s2] sm:$0x1]
  %v49 = vperm.slane %v47, 0
  %v63 = vunpack.c.l.b16 %v15
  %v64 = vunpack.c.h.b16 %v15
  %v65 = vunpack.c.l.b16 %v16
  %v66 = vunpack.c.h.b16 %v16
  %v67 = vunpack.c.l.b16 %v17
  %v68 = vunpack.c.h.b16 %v17
  %v69 = vunpack.c.l.b16 %v18
  %v70 = vunpack.c.h.b16 %v18
  %v71 = vunpack.c.l.b16 %v19
  %v72 = vunpack.c.h.b16 %v19
  %v73 = vunpack.c.l.b16 %v20
  %v74 = vunpack.c.h.b16 %v20
  %v75 = vunpack.c.l.b16 %v21
  %v76 = vunpack.c.h.b16 %v21
  %v77 = vunpack.c.l.b16 %v22
  %v78 = vunpack.c.h.b16 %v22
  %v79 = vunpack.c.l.b16 %v23
  %v80 = vunpack.c.h.b16 %v23
  %v81 = vunpack.c.l.b16 %v24
  %v82 = vunpack.c.h.b16 %v24
  %v83 = vunpack.c.l.b16 %v25
  %v84 = vunpack.c.h.b16 %v25
  %v85 = vunpack.c.l.b16 %v26
  %v86 = vunpack.c.h.b16 %v26
  %v87 = vpack.c.b16 %v65, %v63
  %v88 = vpack.c.b16 %v66, %v64
  %v89 = vpack.c.b16 %v69, %v67
  %v90 = vpack.c.b16 %v70, %v68
  %v91 = vpack.c.b16 %v73, %v71
  %v92 = vpack.c.b16 %v74, %v72
  %v93 = vpack.c.b16 %v77, %v75
  %v94 = vpack.c.b16 %v78, %v76
  %v95 = vpack.c.b16 %v81, %v79
  %v96 = vpack.c.b16 %v82, %v80
  %v97 = vpack.c.b16 %v85, %v83
  %v98 = vpack.c.b16 %v86, %v84
  %v125 = vunpack.c.l.b16 %v27
  %v126 = vunpack.c.l.b16 %v28
  %v127 = vunpack.c.l.b16 %v29
  %v128 = vunpack.c.l.b16 %v30
  %v129 = vunpack.c.l.b16 %v31
  %v130 = vunpack.c.l.b16 %v32
  %v131 = vunpack.c.l.b16 %v33
  %v132 = vunpack.c.l.b16 %v34
  %v133 = vunpack.c.l.b16 %v35
  %v134 = vunpack.c.l.b16 %v36
  %v135 = vunpack.c.l.b16 %v37
  %v136 = vunpack.c.l.b16 %v38
  %v137 = vunpack.c.l.b16 %v39
  %v138 = vunpack.c.l.b16 %v40
  %v139 = vunpack.c.l.b16 %v41
  %v140 = vunpack.c.l.b16 %v42
  %v141 = vunpack.c.l.b16 %v43
  %v142 = vunpack.c.l.b16 %v44
  %v143 = vunpack.c.l.b16 %v45
  %v144 = vunpack.c.l.b16 %v46
  %v145 = vpack.c.b16 %v126, %v125
  %v146 = vpack.c.b16 %v128, %v127
  %v147 = vpack.c.b16 %v130, %v129
  %v148 = vpack.c.b16 %v132, %v131
  %v149 = vpack.c.b16 %v134, %v133
  %v150 = vpack.c.b16 %v136, %v135
  %v151 = vpack.c.b16 %v138, %v137
  %v152 = vpack.c.b16 %v140, %v139
  %v153 = vpack.c.b16 %v142, %v141
  %v154 = vpack.c.b16 %v144, %v143
  %vm165 = vcmask 261120
  %v167 = vsel %vm165, %v88, 0
  %v170 = vsel %vm165, %v90, 0
  %v173 = vsel %vm165, %v92, 0
  %v176 = vsel %vm165, %v94, 0
  %v179 = vsel %vm165, %v96, 0
  %v182 = vsel %vm165, %v98, 0
  %184 = vmatpush.bf16.msra.mxu0 %v152
  %185 = vmatpush.bf16.msra.mxu0 %v151
  %186 = vmatpush.bf16.msra.mxu0 %v150
  %187 = vmatpush.bf16.msra.mxu0 %v149
  %188 = vmatpush.bf16.msra.mxu0 %v148
  %189 = vmatpush.bf16.msra.mxu0 %v147
  %190 = vmatpush.bf16.msra.mxu0 %v146
  %191 = vmatpush.bf16.msra.mxu0 %v145
  %192 = vmatmul.bf16.gmra.mxu0 %v87
  %v193 = vpop.f32.mrf.mxu0
  %v194 = vadd.f32 %v49, %v193
  %v195 = vpop.f32.mrf.mxu0
  %v196 = vadd.f32 %v49, %v195
  %197 = vmatmul.bf16.gmra.mxu0 %v89
  %v198 = vpop.f32.mrf.mxu0
  %v199 = vadd.f32 %v49, %v198
  %v200 = vpop.f32.mrf.mxu0
  %v201 = vadd.f32 %v49, %v200
  %202 = vmatmul.bf16.gmra.mxu0 %v91
  %v203 = vpop.f32.mrf.mxu0
  %v204 = vadd.f32 %v49, %v203
  %v205 = vpop.f32.mrf.mxu0
  %v206 = vadd.f32 %v49, %v205
  %207 = vmatmul.bf16.gmra.mxu0 %v93
  %v208 = vpop.f32.mrf.mxu0
  %v209 = vadd.f32 %v49, %v208
  %v210 = vpop.f32.mrf.mxu0
  %v211 = vadd.f32 %v49, %v210
  %212 = vmatmul.bf16.gmra.mxu0 %v95
  %v213 = vpop.f32.mrf.mxu0
  %v214 = vadd.f32 %v49, %v213
  %v215 = vpop.f32.mrf.mxu0
  %v216 = vadd.f32 %v49, %v215
  %217 = vmatmul.bf16.gmra.mxu0 %v97
  %v218 = vpop.f32.mrf.mxu0
  %v219 = vadd.f32 %v49, %v218
  %v220 = vpop.f32.mrf.mxu0
  %v221 = vadd.f32 %v49, %v220
  %222 = vdwg.mxu0
  %223 = vmatpush.bf16.msra.mxu0 0
  %224 = vmatpush.bf16.msra.mxu0 0
  %225 = vmatpush.bf16.msra.mxu0 0
  %226 = vmatpush.bf16.msra.mxu0 0
  %227 = vmatpush.bf16.msra.mxu0 0
  %228 = vmatpush.bf16.msra.mxu0 0
  %229 = vmatpush.bf16.msra.mxu0 %v154
  %230 = vmatpush.bf16.msra.mxu0 %v153
  %231 = vmatmul.bf16.gmra.mxu0 %v167
  %v232 = vpop.f32.mrf.mxu0
  %v233 = vadd.f32 %v194, %v232
  %v234 = vpop.f32.mrf.mxu0
  %v235 = vadd.f32 %v196, %v234
  %236 = vmatmul.bf16.gmra.mxu0 %v170
  %v237 = vpop.f32.mrf.mxu0
  %v238 = vadd.f32 %v199, %v237
  %v239 = vpop.f32.mrf.mxu0
  %v240 = vadd.f32 %v201, %v239
  %241 = vmatmul.bf16.gmra.mxu0 %v173
  %v242 = vpop.f32.mrf.mxu0
  %v243 = vadd.f32 %v204, %v242
  %v244 = vpop.f32.mrf.mxu0
  %v245 = vadd.f32 %v206, %v244
  %246 = vmatmul.bf16.gmra.mxu0 %v176
  %v247 = vpop.f32.mrf.mxu0
  %v248 = vadd.f32 %v209, %v247
  %v249 = vpop.f32.mrf.mxu0
  %v250 = vadd.f32 %v211, %v249
  %251 = vmatmul.bf16.gmra.mxu0 %v179
  %v252 = vpop.f32.mrf.mxu0
  %v253 = vadd.f32 %v214, %v252
  %v254 = vpop.f32.mrf.mxu0
  %v255 = vadd.f32 %v216, %v254
  %256 = vmatmul.bf16.gmra.mxu0 %v182
  %v257 = vpop.f32.mrf.mxu0
  %v258 = vadd.f32 %v219, %v257
  %v259 = vpop.f32.mrf.mxu0
  %v260 = vadd.f32 %v221, %v259
  %261 = vdwg.mxu0
  %vm262 = vcmp.ge.f32.partialorder %v233, 0.0
  %vm263 = vcmp.ge.f32.partialorder %v235, 0.0
  %vm264 = vcmp.ge.f32.partialorder %v238, 0.0
  %vm265 = vcmp.ge.f32.partialorder %v240, 0.0
  %vm266 = vcmp.ge.f32.partialorder %v243, 0.0
  %vm267 = vcmp.ge.f32.partialorder %v245, 0.0
  %vm268 = vcmp.ge.f32.partialorder %v248, 0.0
  %vm269 = vcmp.ge.f32.partialorder %v250, 0.0
  %vm270 = vcmp.ge.f32.partialorder %v253, 0.0
  %vm271 = vcmp.ge.f32.partialorder %v255, 0.0
  %vm272 = vcmp.ge.f32.partialorder %v258, 0.0
  %vm273 = vcmp.ge.f32.partialorder %v260, 0.0
  %v274 = vmul.f32 %v233, 0.1
  %v275 = vmul.f32 %v235, 0.1
  %v276 = vmul.f32 %v238, 0.1
  %v277 = vmul.f32 %v240, 0.1
  %v278 = vmul.f32 %v243, 0.1
  %v279 = vmul.f32 %v245, 0.1
  %v280 = vmul.f32 %v248, 0.1
  %v281 = vmul.f32 %v250, 0.1
  %v282 = vmul.f32 %v253, 0.1
  %v283 = vmul.f32 %v255, 0.1
  %v284 = vmul.f32 %v258, 0.1
  %v285 = vmul.f32 %v260, 0.1
  %v286 = vsel %vm262, %v233, %v274
  %v287 = vsel %vm263, %v235, %v275
  %v288 = vsel %vm264, %v238, %v276
  %v289 = vsel %vm265, %v240, %v277
  %v290 = vsel %vm266, %v243, %v278
  %v291 = vsel %vm267, %v245, %v279
  %v292 = vsel %vm268, %v248, %v280
  %v293 = vsel %vm269, %v250, %v281
  %v294 = vsel %vm270, %v253, %v282
  %v295 = vsel %vm271, %v255, %v283
  %v296 = vsel %vm272, %v258, %v284
  %v297 = vsel %vm273, %v260, %v285
  %v298 = vpack.c.bf16 %v286, %v286
  %v299 = vpack.c.bf16 %v287, %v287
  %v300 = vpack.c.bf16 %v288, %v288
  %v301 = vpack.c.bf16 %v289, %v289
  %v302 = vpack.c.bf16 %v290, %v290
  %v303 = vpack.c.bf16 %v291, %v291
  %v304 = vpack.c.bf16 %v292, %v292
  %v305 = vpack.c.bf16 %v293, %v293
  %v306 = vpack.c.bf16 %v294, %v294
  %v307 = vpack.c.bf16 %v295, %v295
  %v308 = vpack.c.bf16 %v296, %v296
  %v309 = vpack.c.bf16 %v297, %v297
  %310 = vst [vmem:[%s3] sm:$0xf] %v298
  %311 = vst [vmem:[%s3 + $0x4] sm:$0xf] %v299
  %312 = vst [vmem:[%s3 + $0x8] sm:$0xf] %v300
  %313 = vst [vmem:[%s3 + $0xc] sm:$0xf] %v301
  %314 = vst [vmem:[%s3 + $0x10] sm:$0xf] %v302
  %315 = vst [vmem:[%s3 + $0x14] sm:$0xf] %v303
  %316 = vst [vmem:[%s3 + $0x18] sm:$0xf] %v304
  %317 = vst [vmem:[%s3 + $0x1c] sm:$0xf] %v305
  %318 = vst [vmem:[%s3 + $0x20] sm:$0xf] %v306
  %319 = vst [vmem:[%s3 + $0x24] sm:$0xf] %v307
  %320 = vst [vmem:[%s3 + $0x28] sm:$0xf] %v308
  %321 = vst [vmem:[%s3 + $0x2c] sm:$0xf] %v309
  // Predicated region
  $region14: #{multi_period_disc_forward.32} parent=0 // pred_check
    _
  $region15: #{multi_period_disc_forward.32} parent=0 // pred_check_branch
    %323 = sbr.rel (0) target = $region17
  $region16: #{multi_period_disc_forward.32} parent=0 // pred_region
    _
  $region17: #{multi_period_disc_forward.32} parent=0 // pred_fallthru
    _
  // Predicated region
  $region18: #{multi_period_disc_forward.32} parent=0 // pred_check
    _
  $region19: #{multi_period_disc_forward.32} parent=0 // pred_check_branch
    %325 = sbr.rel (0) target = $region21
  $region20: #{multi_period_disc_forward.32} parent=0 // pred_region
    _
  $region21: #{multi_period_disc_forward.32} parent=0 // pred_fallthru
    _

// kernel: multi_period_disc_forward.33
$region0: #{multi_period_disc_forward.33}
  #allocation0 [shape = 'u32[]', space=smem, size = 0x4, offset = 0x4, fixed_abs, tag = 'smem constant byte address 0x4 - core index']
  #allocation1 [shape = 'u32[72,128]{1,0:T(1,128)}', space=vmem, size = 0x9000, scoped, tag = 'internal scratch']
  #allocation2 [shape = 'f32[32,128]{1,0:T(8,128)}', space=vmem, size = 0x4000, scoped, tag = 'scratch operand']
  %s0 = inlined_call_operand.vmem [shape: bf16[32,320], index: 0, kind: input, shape index: {}]
  %s1 = inlined_call_operand.vmem [shape: bf16[320,128], index: 1, kind: input, shape index: {}]
  %s2 = inlined_call_operand.vmem [shape: f32[1,128], index: 2, kind: input, shape index: {}]
  %s3 = inlined_call_operand.vmem [shape: bf16[32,128], index: 3, kind: output, shape index: {}]
  %s4 = sld [smem:[#allocation0]]
  $region22: #{multi_period_disc_forward.33} parent=0
    _
  %s6 = ssub.s32 1, %s4
  %s7 = scalar_select 0, %s6, %s4
  // Predicated region
  $region2: #{multi_period_disc_forward.33} parent=0 // pred_check
    _
  $region3: #{multi_period_disc_forward.33} parent=0 // pred_check_branch
    %9 = sbr.rel (0) target = $region5
  $region4: #{multi_period_disc_forward.33} parent=0 // pred_region
    _
  $region5: #{multi_period_disc_forward.33} parent=0 // pred_fallthru
    _
  // Predicated region
  $region6: #{multi_period_disc_forward.33} parent=0 // pred_check
    _
  $region7: #{multi_period_disc_forward.33} parent=0 // pred_check_branch
    %11 = sbr.rel (0) target = $region9
  $region8: #{multi_period_disc_forward.33} parent=0 // pred_region
    _
  $region9: #{multi_period_disc_forward.33} parent=0 // pred_fallthru
    _
  // Predicated region
  $region10: #{multi_period_disc_forward.33} parent=0 // pred_check
    _
  $region11: #{multi_period_disc_forward.33} parent=0 // pred_check_branch
    %13 = sbr.rel (0) target = $region13
  $region12: #{multi_period_disc_forward.33} parent=0 // pred_region
    _
  $region13: #{multi_period_disc_forward.33} parent=0 // pred_fallthru
    _
  %v15 = vld [vmem:[%s0] sm:$0xff]
  %v16 = vld [vmem:[%s0 + $0x8] sm:$0xf]
  %v17 = vld [vmem:[%s0 + $0xc] sm:$0xff]
  %v18 = vld [vmem:[%s0 + $0x14] sm:$0xf]
  %v19 = vld [vmem:[%s0 + $0x18] sm:$0xff]
  %v20 = vld [vmem:[%s0 + $0x20] sm:$0xf]
  %v21 = vld [vmem:[%s0 + $0x24] sm:$0xff]
  %v22 = vld [vmem:[%s0 + $0x2c] sm:$0xf]
  %v23 = vld [vmem:[%s1] sm:$0xf]
  %v24 = vld [vmem:[%s1 + $0x4] sm:$0xf]
  %v25 = vld [vmem:[%s1 + $0x8] sm:$0xf]
  %v26 = vld [vmem:[%s1 + $0xc] sm:$0xf]
  %v27 = vld [vmem:[%s1 + $0x10] sm:$0xf]
  %v28 = vld [vmem:[%s1 + $0x14] sm:$0xf]
  %v29 = vld [vmem:[%s1 + $0x18] sm:$0xf]
  %v30 = vld [vmem:[%s1 + $0x1c] sm:$0xf]
  %v31 = vld [vmem:[%s1 + $0x20] sm:$0xf]
  %v32 = vld [vmem:[%s1 + $0x24] sm:$0xf]
  %v33 = vld [vmem:[%s1 + $0x28] sm:$0xf]
  %v34 = vld [vmem:[%s1 + $0x2c] sm:$0xf]
  %v35 = vld [vmem:[%s1 + $0x30] sm:$0xf]
  %v36 = vld [vmem:[%s1 + $0x34] sm:$0xf]
  %v37 = vld [vmem:[%s1 + $0x38] sm:$0xf]
  %v38 = vld [vmem:[%s1 + $0x3c] sm:$0xf]
  %v39 = vld [vmem:[%s1 + $0x40] sm:$0xf]
  %v40 = vld [vmem:[%s1 + $0x44] sm:$0xf]
  %v41 = vld [vmem:[%s1 + $0x48] sm:$0xf]
  %v42 = vld [vmem:[%s1 + $0x4c] sm:$0xf]
  %v43 = vld [vmem:[%s1 + $0x50] sm:$0xf]
  %v44 = vld [vmem:[%s1 + $0x54] sm:$0xf]
  %v45 = vld [vmem:[%s1 + $0x58] sm:$0xf]
  %v46 = vld [vmem:[%s1 + $0x5c] sm:$0xf]
  %v47 = vld [vmem:[%s1 + $0x60] sm:$0xf]
  %v48 = vld [vmem:[%s1 + $0x64] sm:$0xf]
  %v49 = vld [vmem:[%s1 + $0x68] sm:$0xf]
  %v50 = vld [vmem:[%s1 + $0x6c] sm:$0xf]
  %v51 = vld [vmem:[%s1 + $0x70] sm:$0xf]
  %v52 = vld [vmem:[%s1 + $0x74] sm:$0xf]
  %v53 = vld [vmem:[%s1 + $0x78] sm:$0xf]
  %v54 = vld [vmem:[%s1 + $0x7c] sm:$0xf]
  %v55 = vld [vmem:[%s1 + $0x80] sm:$0xf]
  %v56 = vld [vmem:[%s1 + $0x84] sm:$0xf]
  %v57 = vld [vmem:[%s1 + $0x88] sm:$0xf]
  %v58 = vld [vmem:[%s1 + $0x8c] sm:$0xf]
  %v59 = vld [vmem:[%s1 + $0x90] sm:$0xf]
  %v60 = vld [vmem:[%s1 + $0x94] sm:$0xf]
  %v61 = vld [vmem:[%s1 + $0x98] sm:$0xf]
  %v62 = vld [vmem:[%s1 + $0x9c] sm:$0xf]
  %v63 = vld [vmem:[%s2] sm:$0x1]
  %v65 = vperm.slane %v63, 0
  %v75 = vunpack.c.l.b16 %v15
  %v76 = vunpack.c.h.b16 %v15
  %v77 = vunpack.c.l.b16 %v16
  %v78 = vunpack.c.l.b16 %v17
  %v79 = vunpack.c.h.b16 %v17
  %v80 = vunpack.c.l.b16 %v18
  %v81 = vunpack.c.l.b16 %v19
  %v82 = vunpack.c.h.b16 %v19
  %v83 = vunpack.c.l.b16 %v20
  %v84 = vunpack.c.l.b16 %v21
  %v85 = vunpack.c.h.b16 %v21
  %v86 = vunpack.c.l.b16 %v22
  %v87 = vpack.c.b16 %v78, %v75
  %v88 = vpack.c.b16 %v79, %v76
  %v89 = vpack.c.b16 %v80, %v77
  %v90 = vpack.c.b16 %v84, %v81
  %v91 = vpack.c.b16 %v85, %v82
  %v92 = vpack.c.b16 %v86, %v83
  %v137 = vunpack.c.l.b16 %v23
  %v138 = vunpack.c.l.b16 %v24
  %v139 = vunpack.c.l.b16 %v25
  %v140 = vunpack.c.l.b16 %v26
  %v141 = vunpack.c.l.b16 %v27
  %v142 = vunpack.c.l.b16 %v28
  %v143 = vunpack.c.l.b16 %v29
  %v144 = vunpack.c.l.b16 %v30
  %v145 = vunpack.c.l.b16 %v31
  %v146 = vunpack.c.l.b16 %v32
  %v147 = vunpack.c.l.b16 %v33
  %v148 = vunpack.c.l.b16 %v34
  %v149 = vunpack.c.l.b16 %v35
  %v150 = vunpack.c.l.b16 %v36
  %v151 = vunpack.c.l.b16 %v37
  %v152 = vunpack.c.l.b16 %v38
  %v153 = vunpack.c.l.b16 %v39
  %v154 = vunpack.c.l.b16 %v40
  %v155 = vunpack.c.l.b16 %v41
  %v156 = vunpack.c.l.b16 %v42
  %v157 = vunpack.c.l.b16 %v43
  %v158 = vunpack.c.l.b16 %v44
  %v159 = vunpack.c.l.b16 %v45
  %v160 = vunpack.c.l.b16 %v46
  %v161 = vunpack.c.l.b16 %v47
  %v162 = vunpack.c.l.b16 %v48
  %v163 = vunpack.c.l.b16 %v49
  %v164 = vunpack.c.l.b16 %v50
  %v165 = vunpack.c.l.b16 %v51
  %v166 = vunpack.c.l.b16 %v52
  %v167 = vunpack.c.l.b16 %v53
  %v168 = vunpack.c.l.b16 %v54
  %v169 = vunpack.c.l.b16 %v55
  %v170 = vunpack.c.l.b16 %v56
  %v171 = vunpack.c.l.b16 %v57
  %v172 = vunpack.c.l.b16 %v58
  %v173 = vunpack.c.l.b16 %v59
  %v174 = vunpack.c.l.b16 %v60
  %v175 = vunpack.c.l.b16 %v61
  %v176 = vunpack.c.l.b16 %v62
  %v177 = vpack.c.b16 %v138, %v137
  %v178 = vpack.c.b16 %v140, %v139
  %v179 = vpack.c.b16 %v142, %v141
  %v180 = vpack.c.b16 %v144, %v143
  %v181 = vpack.c.b16 %v146, %v145
  %v182 = vpack.c.b16 %v148, %v147
  %v183 = vpack.c.b16 %v150, %v149
  %v184 = vpack.c.b16 %v152, %v151
  %v185 = vpack.c.b16 %v154, %v153
  %v186 = vpack.c.b16 %v156, %v155
  %v187 = vpack.c.b16 %v158, %v157
  %v188 = vpack.c.b16 %v160, %v159
  %v189 = vpack.c.b16 %v162, %v161
  %v190 = vpack.c.b16 %v164, %v163
  %v191 = vpack.c.b16 %v166, %v165
  %v192 = vpack.c.b16 %v168, %v167
  %v193 = vpack.c.b16 %v170, %v169
  %v194 = vpack.c.b16 %v172, %v171
  %v195 = vpack.c.b16 %v174, %v173
  %v196 = vpack.c.b16 %v176, %v175
  %vm217 = vcmask 523264
  %v219 = vsel %vm217, %v89, 0
  %v222 = vsel %vm217, %v92, 0
  %224 = vmatpush.bf16.msra.mxu0 %v184
  %225 = vmatpush.bf16.msra.mxu0 %v183
  %226 = vmatpush.bf16.msra.mxu0 %v182
  %227 = vmatpush.bf16.msra.mxu0 %v181
  %228 = vmatpush.bf16.msra.mxu0 %v180
  %229 = vmatpush.bf16.msra.mxu0 %v179
  %230 = vmatpush.bf16.msra.mxu0 %v178
  %231 = vmatpush.bf16.msra.mxu0 %v177
  %232 = vmatmul.bf16.gmra.mxu0 %v87
  %v233 = vpop.f32.mrf.mxu0
  %v234 = vadd.f32 %v65, %v233
  %v235 = vpop.f32.mrf.mxu0
  %v236 = vadd.f32 %v65, %v235
  %237 = vmatmul.bf16.gmra.mxu0 %v90
  %v238 = vpop.f32.mrf.mxu0
  %v239 = vadd.f32 %v65, %v238
  %v240 = vpop.f32.mrf.mxu0
  %v241 = vadd.f32 %v65, %v240
  %242 = vdwg.mxu0
  %243 = vmatpush.bf16.msra.mxu0 %v192
  %244 = vmatpush.bf16.msra.mxu0 %v191
  %245 = vmatpush.bf16.msra.mxu0 %v190
  %246 = vmatpush.bf16.msra.mxu0 %v189
  %247 = vmatpush.bf16.msra.mxu0 %v188
  %248 = vmatpush.bf16.msra.mxu0 %v187
  %249 = vmatpush.bf16.msra.mxu0 %v186
  %250 = vmatpush.bf16.msra.mxu0 %v185
  %251 = vmatmul.bf16.gmra.mxu0 %v88
  %v252 = vpop.f32.mrf.mxu0
  %v253 = vadd.f32 %v234, %v252
  %v254 = vpop.f32.mrf.mxu0
  %v255 = vadd.f32 %v236, %v254
  %256 = vmatmul.bf16.gmra.mxu0 %v91
  %v257 = vpop.f32.mrf.mxu0
  %v258 = vadd.f32 %v239, %v257
  %v259 = vpop.f32.mrf.mxu0
  %v260 = vadd.f32 %v241, %v259
  %261 = vdwg.mxu0
  %262 = vmatpush.bf16.msra.mxu0 0
  %263 = vmatpush.bf16.msra.mxu0 0
  %264 = vmatpush.bf16.msra.mxu0 0
  %265 = vmatpush.bf16.msra.mxu0 0
  %266 = vmatpush.bf16.msra.mxu0 %v196
  %267 = vmatpush.bf16.msra.mxu0 %v195
  %268 = vmatpush.bf16.msra.mxu0 %v194
  %269 = vmatpush.bf16.msra.mxu0 %v193
  %270 = vmatmul.bf16.gmra.mxu0 %v219
  %v271 = vpop.f32.mrf.mxu0
  %v272 = vadd.f32 %v253, %v271
  %v273 = vpop.f32.mrf.mxu0
  %v274 = vadd.f32 %v255, %v273
  %275 = vmatmul.bf16.gmra.mxu0 %v222
  %v276 = vpop.f32.mrf.mxu0
  %v277 = vadd.f32 %v258, %v276
  %v278 = vpop.f32.mrf.mxu0
  %v279 = vadd.f32 %v260, %v278
  %280 = vdwg.mxu0
  %vm281 = vcmp.ge.f32.partialorder %v272, 0.0
  %vm282 = vcmp.ge.f32.partialorder %v274, 0.0
  %vm283 = vcmp.ge.f32.partialorder %v277, 0.0
  %vm284 = vcmp.ge.f32.partialorder %v279, 0.0
  %v285 = vmul.f32 %v272, 0.1
  %v286 = vmul.f32 %v274, 0.1
  %v287 = vmul.f32 %v277, 0.1
  %v288 = vmul.f32 %v279, 0.1
  %v289 = vsel %vm281, %v272, %v285
  %v290 = vsel %vm282, %v274, %v286
  %v291 = vsel %vm283, %v277, %v287
  %v292 = vsel %vm284, %v279, %v288
  %v293 = vpack.c.bf16 %v289, %v289
  %v294 = vpack.c.bf16 %v290, %v290
  %v295 = vpack.c.bf16 %v291, %v291
  %v296 = vpack.c.bf16 %v292, %v292
  %297 = vst [vmem:[%s3] sm:$0xf] %v293
  %298 = vst [vmem:[%s3 + $0x4] sm:$0xf] %v294
  %299 = vst [vmem:[%s3 + $0x8] sm:$0xf] %v295
  %300 = vst [vmem:[%s3 + $0xc] sm:$0xf] %v296
  // Predicated region
  $region14: #{multi_period_disc_forward.33} parent=0 // pred_check
    _
  $region15: #{multi_period_disc_forward.33} parent=0 // pred_check_branch
    %302 = sbr.rel (0) target = $region17
  $region16: #{multi_period_disc_forward.33} parent=0 // pred_region
    _
  $region17: #{multi_period_disc_forward.33} parent=0 // pred_fallthru
    _
  // Predicated region
  $region18: #{multi_period_disc_forward.33} parent=0 // pred_check
    _
  $region19: #{multi_period_disc_forward.33} parent=0 // pred_check_branch
    %304 = sbr.rel (0) target = $region21
  $region20: #{multi_period_disc_forward.33} parent=0 // pred_region
    _
  $region21: #{multi_period_disc_forward.33} parent=0 // pred_fallthru
    _

// kernel: multi_period_disc_forward.35
$region0: #{multi_period_disc_forward.35}
  #allocation0 [shape = 'u32[]', space=smem, size = 0x4, offset = 0x4, fixed_abs, tag = 'smem constant byte address 0x4 - core index']
  #allocation1 [shape = 'u32[72,128]{1,0:T(1,128)}', space=vmem, size = 0x9000, scoped, tag = 'internal scratch']
  #allocation2 [shape = 'f32[48,128]{1,0:T(8,128)}', space=vmem, size = 0x6000, scoped, tag = 'scratch operand']
  %s0 = inlined_call_operand.vmem [shape: bf16[48,128], index: 0, kind: input, shape index: {}]
  %s1 = inlined_call_operand.vmem [shape: bf16[128,128], index: 1, kind: input, shape index: {}]
  %s2 = inlined_call_operand.vmem [shape: f32[1,128], index: 2, kind: input, shape index: {}]
  %s3 = inlined_call_operand.vmem [shape: f32[48,128], index: 3, kind: output, shape index: {}]
  %s4 = sld [smem:[#allocation0]]
  $region22: #{multi_period_disc_forward.35} parent=0
    _
  %s6 = ssub.s32 1, %s4
  %s7 = scalar_select 0, %s6, %s4
  // Predicated region
  $region2: #{multi_period_disc_forward.35} parent=0 // pred_check
    _
  $region3: #{multi_period_disc_forward.35} parent=0 // pred_check_branch
    %9 = sbr.rel (0) target = $region5
  $region4: #{multi_period_disc_forward.35} parent=0 // pred_region
    _
  $region5: #{multi_period_disc_forward.35} parent=0 // pred_fallthru
    _
  // Predicated region
  $region6: #{multi_period_disc_forward.35} parent=0 // pred_check
    _
  $region7: #{multi_period_disc_forward.35} parent=0 // pred_check_branch
    %11 = sbr.rel (0) target = $region9
  $region8: #{multi_period_disc_forward.35} parent=0 // pred_region
    _
  $region9: #{multi_period_disc_forward.35} parent=0 // pred_fallthru
    _
  // Predicated region
  $region10: #{multi_period_disc_forward.35} parent=0 // pred_check
    _
  $region11: #{multi_period_disc_forward.35} parent=0 // pred_check_branch
    %13 = sbr.rel (0) target = $region13
  $region12: #{multi_period_disc_forward.35} parent=0 // pred_region
    _
  $region13: #{multi_period_disc_forward.35} parent=0 // pred_fallthru
    _
  %v14 = vld [vmem:[%s0] sm:$0xf]
  %v15 = vld [vmem:[%s0 + $0x4] sm:$0xf]
  %v16 = vld [vmem:[%s0 + $0x8] sm:$0xf]
  %v17 = vld [vmem:[%s0 + $0xc] sm:$0xf]
  %v18 = vld [vmem:[%s0 + $0x10] sm:$0xf]
  %v19 = vld [vmem:[%s0 + $0x14] sm:$0xf]
  %v20 = vld [vmem:[%s1] sm:$0xf]
  %v21 = vld [vmem:[%s1 + $0x4] sm:$0xf]
  %v22 = vld [vmem:[%s1 + $0x8] sm:$0xf]
  %v23 = vld [vmem:[%s1 + $0xc] sm:$0xf]
  %v24 = vld [vmem:[%s1 + $0x10] sm:$0xf]
  %v25 = vld [vmem:[%s1 + $0x14] sm:$0xf]
  %v26 = vld [vmem:[%s1 + $0x18] sm:$0xf]
  %v27 = vld [vmem:[%s1 + $0x1c] sm:$0xf]
  %v28 = vld [vmem:[%s1 + $0x20] sm:$0xf]
  %v29 = vld [vmem:[%s1 + $0x24] sm:$0xf]
  %v30 = vld [vmem:[%s1 + $0x28] sm:$0xf]
  %v31 = vld [vmem:[%s1 + $0x2c] sm:$0xf]
  %v32 = vld [vmem:[%s1 + $0x30] sm:$0xf]
  %v33 = vld [vmem:[%s1 + $0x34] sm:$0xf]
  %v34 = vld [vmem:[%s1 + $0x38] sm:$0xf]
  %v35 = vld [vmem:[%s1 + $0x3c] sm:$0xf]
  %v36 = vld [vmem:[%s2] sm:$0x1]
  %v38 = vperm.slane %v36, 0
  %v46 = vunpack.c.l.b16 %v14
  %v47 = vunpack.c.l.b16 %v15
  %v48 = vunpack.c.l.b16 %v16
  %v49 = vunpack.c.l.b16 %v17
  %v50 = vunpack.c.l.b16 %v18
  %v51 = vunpack.c.l.b16 %v19
  %v52 = vpack.c.b16 %v47, %v46
  %v53 = vpack.c.b16 %v49, %v48
  %v54 = vpack.c.b16 %v51, %v50
  %v74 = vunpack.c.l.b16 %v20
  %v75 = vunpack.c.l.b16 %v21
  %v76 = vunpack.c.l.b16 %v22
  %v77 = vunpack.c.l.b16 %v23
  %v78 = vunpack.c.l.b16 %v24
  %v79 = vunpack.c.l.b16 %v25
  %v80 = vunpack.c.l.b16 %v26
  %v81 = vunpack.c.l.b16 %v27
  %v82 = vunpack.c.l.b16 %v28
  %v83 = vunpack.c.l.b16 %v29
  %v84 = vunpack.c.l.b16 %v30
  %v85 = vunpack.c.l.b16 %v31
  %v86 = vunpack.c.l.b16 %v32
  %v87 = vunpack.c.l.b16 %v33
  %v88 = vunpack.c.l.b16 %v34
  %v89 = vunpack.c.l.b16 %v35
  %v90 = vpack.c.b16 %v75, %v74
  %v91 = vpack.c.b16 %v77, %v76
  %v92 = vpack.c.b16 %v79, %v78
  %v93 = vpack.c.b16 %v81, %v80
  %v94 = vpack.c.b16 %v83, %v82
  %v95 = vpack.c.b16 %v85, %v84
  %v96 = vpack.c.b16 %v87, %v86
  %v97 = vpack.c.b16 %v89, %v88
  %106 = vmatpush.bf16.msra.mxu0 %v97
  %107 = vmatpush.bf16.msra.mxu0 %v96
  %108 = vmatpush.bf16.msra.mxu0 %v95
  %109 = vmatpush.bf16.msra.mxu0 %v94
  %110 = vmatpush.bf16.msra.mxu0 %v93
  %111 = vmatpush.bf16.msra.mxu0 %v92
  %112 = vmatpush.bf16.msra.mxu0 %v91
  %113 = vmatpush.bf16.msra.mxu0 %v90
  %114 = vmatmul.bf16.gmra.mxu0 %v52
  %v115 = vpop.f32.mrf.mxu0
  %v116 = vadd.f32 %v38, %v115
  %v117 = vpop.f32.mrf.mxu0
  %v118 = vadd.f32 %v38, %v117
  %119 = vmatmul.bf16.gmra.mxu0 %v53
  %v120 = vpop.f32.mrf.mxu0
  %v121 = vadd.f32 %v38, %v120
  %v122 = vpop.f32.mrf.mxu0
  %v123 = vadd.f32 %v38, %v122
  %124 = vmatmul.bf16.gmra.mxu0 %v54
  %v125 = vpop.f32.mrf.mxu0
  %v126 = vadd.f32 %v38, %v125
  %v127 = vpop.f32.mrf.mxu0
  %v128 = vadd.f32 %v38, %v127
  %129 = vdwg.mxu0
  %130 = vst [vmem:[%s3] sm:$0xff] %v116
  %131 = vst [vmem:[%s3 + $0x8] sm:$0xff] %v118
  %132 = vst [vmem:[%s3 + $0x10] sm:$0xff] %v121
  %133 = vst [vmem:[%s3 + $0x18] sm:$0xff] %v123
  %134 = vst [vmem:[%s3 + $0x20] sm:$0xff] %v126
  %135 = vst [vmem:[%s3 + $0x28] sm:$0xff] %v128
  // Predicated region
  $region14: #{multi_period_disc_forward.35} parent=0 // pred_check
    _
  $region15: #{multi_period_disc_forward.35} parent=0 // pred_check_branch
    %137 = sbr.rel (0) target = $region17
  $region16: #{multi_period_disc_forward.35} parent=0 // pred_region
    _
  $region17: #{multi_period_disc_forward.35} parent=0 // pred_fallthru
    _
  // Predicated region
  $region18: #{multi_period_disc_forward.35} parent=0 // pred_check
    _
  $region19: #{multi_period_disc_forward.35} parent=0 // pred_check_branch
    %139 = sbr.rel (0) target = $region21
  $region20: #{multi_period_disc_forward.35} parent=0 // pred_region
    _
  $region21: #{multi_period_disc_forward.35} parent=0 // pred_fallthru
    _

// kernel: multi_period_disc_forward.49
$region0: #{multi_period_disc_forward.49}
  #allocation0 [shape = 'u32[]', space=smem, size = 0x4, offset = 0x4, fixed_abs, tag = 'smem constant byte address 0x4 - core index']
  #allocation1 [shape = 'u32[72,128]{1,0:T(1,128)}', space=vmem, size = 0x9000, scoped, tag = 'internal scratch']
  #allocation2 [shape = 'f32[288,128]{1,0:T(8,128)}', space=vmem, size = 0x24000, scoped, tag = 'scratch operand']
  %s0 = inlined_call_operand.vmem [shape: bf16[288,48], index: 0, kind: input, shape index: {}]
  %s1 = inlined_call_operand.vmem [shape: bf16[48,128], index: 1, kind: input, shape index: {}]
  %s2 = inlined_call_operand.vmem [shape: f32[1,128], index: 2, kind: input, shape index: {}]
  %s3 = inlined_call_operand.vmem [shape: bf16[288,128], index: 3, kind: output, shape index: {}]
  %s4 = sld [smem:[#allocation0]]
  $region22: #{multi_period_disc_forward.49} parent=0
    _
  %s6 = ssub.s32 1, %s4
  %s7 = scalar_select 0, %s6, %s4
  // Predicated region
  $region2: #{multi_period_disc_forward.49} parent=0 // pred_check
    _
  $region3: #{multi_period_disc_forward.49} parent=0 // pred_check_branch
    %9 = sbr.rel (0) target = $region5
  $region4: #{multi_period_disc_forward.49} parent=0 // pred_region
    _
  $region5: #{multi_period_disc_forward.49} parent=0 // pred_fallthru
    _
  // Predicated region
  $region6: #{multi_period_disc_forward.49} parent=0 // pred_check
    _
  $region7: #{multi_period_disc_forward.49} parent=0 // pred_check_branch
    %11 = sbr.rel (0) target = $region9
  $region8: #{multi_period_disc_forward.49} parent=0 // pred_region
    _
  $region9: #{multi_period_disc_forward.49} parent=0 // pred_fallthru
    _
  // Predicated region
  $region10: #{multi_period_disc_forward.49} parent=0 // pred_check
    _
  $region11: #{multi_period_disc_forward.49} parent=0 // pred_check_branch
    %13 = sbr.rel (0) target = $region13
  $region12: #{multi_period_disc_forward.49} parent=0 // pred_region
    _
  $region13: #{multi_period_disc_forward.49} parent=0 // pred_fallthru
    _
  %v15 = vld [vmem:[%s0] sm:$0xf]
  %v16 = vld [vmem:[%s0 + $0x4] sm:$0xf]
  %v17 = vld [vmem:[%s0 + $0x8] sm:$0xf]
  %v18 = vld [vmem:[%s0 + $0xc] sm:$0xf]
  %v19 = vld [vmem:[%s0 + $0x10] sm:$0xf]
  %v20 = vld [vmem:[%s0 + $0x14] sm:$0xf]
  %v21 = vld [vmem:[%s0 + $0x18] sm:$0xf]
  %v22 = vld [vmem:[%s0 + $0x1c] sm:$0xf]
  %v23 = vld [vmem:[%s0 + $0x20] sm:$0xf]
  %v24 = vld [vmem:[%s0 + $0x24] sm:$0xf]
  %v25 = vld [vmem:[%s0 + $0x28] sm:$0xf]
  %v26 = vld [vmem:[%s0 + $0x2c] sm:$0xf]
  %v27 = vld [vmem:[%s0 + $0x30] sm:$0xf]
  %v28 = vld [vmem:[%s0 + $0x34] sm:$0xf]
  %v29 = vld [vmem:[%s0 + $0x38] sm:$0xf]
  %v30 = vld [vmem:[%s0 + $0x3c] sm:$0xf]
  %v31 = vld [vmem:[%s0 + $0x40] sm:$0xf]
  %v32 = vld [vmem:[%s0 + $0x44] sm:$0xf]
  %v33 = vld [vmem:[%s0 + $0x48] sm:$0xf]
  %v34 = vld [vmem:[%s0 + $0x4c] sm:$0xf]
  %v35 = vld [vmem:[%s0 + $0x50] sm:$0xf]
  %v36 = vld [vmem:[%s0 + $0x54] sm:$0xf]
  %v37 = vld [vmem:[%s0 + $0x58] sm:$0xf]
  %v38 = vld [vmem:[%s0 + $0x5c] sm:$0xf]
  %v39 = vld [vmem:[%s0 + $0x60] sm:$0xf]
  %v40 = vld [vmem:[%s0 + $0x64] sm:$0xf]
  %v41 = vld [vmem:[%s0 + $0x68] sm:$0xf]
  %v42 = vld [vmem:[%s0 + $0x6c] sm:$0xf]
  %v43 = vld [vmem:[%s0 + $0x70] sm:$0xf]
  %v44 = vld [vmem:[%s0 + $0x74] sm:$0xf]
  %v45 = vld [vmem:[%s0 + $0x78] sm:$0xf]
  %v46 = vld [vmem:[%s0 + $0x7c] sm:$0xf]
  %v47 = vld [vmem:[%s0 + $0x80] sm:$0xf]
  %v48 = vld [vmem:[%s0 + $0x84] sm:$0xf]
  %v49 = vld [vmem:[%s0 + $0x88] sm:$0xf]
  %v50 = vld [vmem:[%s0 + $0x8c] sm:$0xf]
  %v51 = vld [vmem:[%s1] sm:$0xf]
  %v52 = vld [vmem:[%s1 + $0x4] sm:$0xf]
  %v53 = vld [vmem:[%s1 + $0x8] sm:$0xf]
  %v54 = vld [vmem:[%s1 + $0xc] sm:$0xf]
  %v55 = vld [vmem:[%s1 + $0x10] sm:$0xf]
  %v56 = vld [vmem:[%s1 + $0x14] sm:$0xf]
  %v57 = vld [vmem:[%s2] sm:$0x1]
  %v59 = vperm.slane %v57, 0
  %v97 = vunpack.c.l.b16 %v15
  %v98 = vunpack.c.l.b16 %v16
  %v99 = vunpack.c.l.b16 %v17
  %v100 = vunpack.c.l.b16 %v18
  %v101 = vunpack.c.l.b16 %v19
  %v102 = vunpack.c.l.b16 %v20
  %v103 = vunpack.c.l.b16 %v21
  %v104 = vunpack.c.l.b16 %v22
  %v105 = vunpack.c.l.b16 %v23
  %v106 = vunpack.c.l.b16 %v24
  %v107 = vunpack.c.l.b16 %v25
  %v108 = vunpack.c.l.b16 %v26
  %v109 = vunpack.c.l.b16 %v27
  %v110 = vunpack.c.l.b16 %v28
  %v111 = vunpack.c.l.b16 %v29
  %v112 = vunpack.c.l.b16 %v30
  %v113 = vunpack.c.l.b16 %v31
  %v114 = vunpack.c.l.b16 %v32
  %v115 = vunpack.c.l.b16 %v33
  %v116 = vunpack.c.l.b16 %v34
  %v117 = vunpack.c.l.b16 %v35
  %v118 = vunpack.c.l.b16 %v36
  %v119 = vunpack.c.l.b16 %v37
  %v120 = vunpack.c.l.b16 %v38
  %v121 = vunpack.c.l.b16 %v39
  %v122 = vunpack.c.l.b16 %v40
  %v123 = vunpack.c.l.b16 %v41
  %v124 = vunpack.c.l.b16 %v42
  %v125 = vunpack.c.l.b16 %v43
  %v126 = vunpack.c.l.b16 %v44
  %v127 = vunpack.c.l.b16 %v45
  %v128 = vunpack.c.l.b16 %v46
  %v129 = vunpack.c.l.b16 %v47
  %v130 = vunpack.c.l.b16 %v48
  %v131 = vunpack.c.l.b16 %v49
  %v132 = vunpack.c.l.b16 %v50
  %v133 = vpack.c.b16 %v98, %v97
  %v134 = vpack.c.b16 %v100, %v99
  %v135 = vpack.c.b16 %v102, %v101
  %v136 = vpack.c.b16 %v104, %v103
  %v137 = vpack.c.b16 %v106, %v105
  %v138 = vpack.c.b16 %v108, %v107
  %v139 = vpack.c.b16 %v110, %v109
  %v140 = vpack.c.b16 %v112, %v111
  %v141 = vpack.c.b16 %v114, %v113
  %v142 = vpack.c.b16 %v116, %v115
  %v143 = vpack.c.b16 %v118, %v117
  %v144 = vpack.c.b16 %v120, %v119
  %v145 = vpack.c.b16 %v122, %v121
  %v146 = vpack.c.b16 %v124, %v123
  %v147 = vpack.c.b16 %v126, %v125
  %v148 = vpack.c.b16 %v128, %v127
  %v149 = vpack.c.b16 %v130, %v129
  %v150 = vpack.c.b16 %v132, %v131
  %v157 = vunpack.c.l.b16 %v51
  %v158 = vunpack.c.l.b16 %v52
  %v159 = vunpack.c.l.b16 %v53
  %v160 = vunpack.c.l.b16 %v54
  %v161 = vunpack.c.l.b16 %v55
  %v162 = vunpack.c.l.b16 %v56
  %v163 = vpack.c.b16 %v158, %v157
  %v164 = vpack.c.b16 %v160, %v159
  %v165 = vpack.c.b16 %v162, %v161
  %vm169 = vcmask 392192
  %v171 = vsel %vm169, %v133, 0
  %v174 = vsel %vm169, %v134, 0
  %v177 = vsel %vm169, %v135, 0
  %v180 = vsel %vm169, %v136, 0
  %v183 = vsel %vm169, %v137, 0
  %v186 = vsel %vm169, %v138, 0
  %v189 = vsel %vm169, %v139, 0
  %v192 = vsel %vm169, %v140, 0
  %v195 = vsel %vm169, %v141, 0
  %v198 = vsel %vm169, %v142, 0
  %v201 = vsel %vm169, %v143, 0
  %v204 = vsel %vm169, %v144, 0
  %v207 = vsel %vm169, %v145, 0
  %v210 = vsel %vm169, %v146, 0
  %v213 = vsel %vm169, %v147, 0
  %v216 = vsel %vm169, %v148, 0
  %v219 = vsel %vm169, %v149, 0
  %v222 = vsel %vm169, %v150, 0
  %224 = vmatpush.bf16.msra.mxu0 0
  %225 = vmatpush.bf16.msra.mxu0 0
  %226 = vmatpush.bf16.msra.mxu0 0
  %227 = vmatpush.bf16.msra.mxu0 0
  %228 = vmatpush.bf16.msra.mxu0 0
  %229 = vmatpush.bf16.msra.mxu0 %v165
  %230 = vmatpush.bf16.msra.mxu0 %v164
  %231 = vmatpush.bf16.msra.mxu0 %v163
  %232 = vmatmul.bf16.gmra.mxu0 %v171
  %v233 = vpop.f32.mrf.mxu0
  %v234 = vadd.f32 %v59, %v233
  %v235 = vpop.f32.mrf.mxu0
  %v236 = vadd.f32 %v59, %v235
  %237 = vmatmul.bf16.gmra.mxu0 %v174
  %v238 = vpop.f32.mrf.mxu0
  %v239 = vadd.f32 %v59, %v238
  %v240 = vpop.f32.mrf.mxu0
  %v241 = vadd.f32 %v59, %v240
  %242 = vmatmul.bf16.gmra.mxu0 %v177
  %v243 = vpop.f32.mrf.mxu0
  %v244 = vadd.f32 %v59, %v243
  %v245 = vpop.f32.mrf.mxu0
  %v246 = vadd.f32 %v59, %v245
  %247 = vmatmul.bf16.gmra.mxu0 %v180
  %v248 = vpop.f32.mrf.mxu0
  %v249 = vadd.f32 %v59, %v248
  %v250 = vpop.f32.mrf.mxu0
  %v251 = vadd.f32 %v59, %v250
  %252 = vmatmul.bf16.gmra.mxu0 %v183
  %v253 = vpop.f32.mrf.mxu0
  %v254 = vadd.f32 %v59, %v253
  %v255 = vpop.f32.mrf.mxu0
  %v256 = vadd.f32 %v59, %v255
  %257 = vmatmul.bf16.gmra.mxu0 %v186
  %v258 = vpop.f32.mrf.mxu0
  %v259 = vadd.f32 %v59, %v258
  %v260 = vpop.f32.mrf.mxu0
  %v261 = vadd.f32 %v59, %v260
  %262 = vmatmul.bf16.gmra.mxu0 %v189
  %v263 = vpop.f32.mrf.mxu0
  %v264 = vadd.f32 %v59, %v263
  %v265 = vpop.f32.mrf.mxu0
  %v266 = vadd.f32 %v59, %v265
  %267 = vmatmul.bf16.gmra.mxu0 %v192
  %v268 = vpop.f32.mrf.mxu0
  %v269 = vadd.f32 %v59, %v268
  %v270 = vpop.f32.mrf.mxu0
  %v271 = vadd.f32 %v59, %v270
  %272 = vmatmul.bf16.gmra.mxu0 %v195
  %v273 = vpop.f32.mrf.mxu0
  %v274 = vadd.f32 %v59, %v273
  %v275 = vpop.f32.mrf.mxu0
  %v276 = vadd.f32 %v59, %v275
  %277 = vmatmul.bf16.gmra.mxu0 %v198
  %v278 = vpop.f32.mrf.mxu0
  %v279 = vadd.f32 %v59, %v278
  %v280 = vpop.f32.mrf.mxu0
  %v281 = vadd.f32 %v59, %v280
  %282 = vmatmul.bf16.gmra.mxu0 %v201
  %v283 = vpop.f32.mrf.mxu0
  %v284 = vadd.f32 %v59, %v283
  %v285 = vpop.f32.mrf.mxu0
  %v286 = vadd.f32 %v59, %v285
  %287 = vmatmul.bf16.gmra.mxu0 %v204
  %v288 = vpop.f32.mrf.mxu0
  %v289 = vadd.f32 %v59, %v288
  %v290 = vpop.f32.mrf.mxu0
  %v291 = vadd.f32 %v59, %v290
  %292 = vmatmul.bf16.gmra.mxu0 %v207
  %v293 = vpop.f32.mrf.mxu0
  %v294 = vadd.f32 %v59, %v293
  %v295 = vpop.f32.mrf.mxu0
  %v296 = vadd.f32 %v59, %v295
  %297 = vmatmul.bf16.gmra.mxu0 %v210
  %v298 = vpop.f32.mrf.mxu0
  %v299 = vadd.f32 %v59, %v298
  %v300 = vpop.f32.mrf.mxu0
  %v301 = vadd.f32 %v59, %v300
  %302 = vmatmul.bf16.gmra.mxu0 %v213
  %v303 = vpop.f32.mrf.mxu0
  %v304 = vadd.f32 %v59, %v303
  %v305 = vpop.f32.mrf.mxu0
  %v306 = vadd.f32 %v59, %v305
  %307 = vmatmul.bf16.gmra.mxu0 %v216
  %v308 = vpop.f32.mrf.mxu0
  %v309 = vadd.f32 %v59, %v308
  %v310 = vpop.f32.mrf.mxu0
  %v311 = vadd.f32 %v59, %v310
  %312 = vmatmul.bf16.gmra.mxu0 %v219
  %v313 = vpop.f32.mrf.mxu0
  %v314 = vadd.f32 %v59, %v313
  %v315 = vpop.f32.mrf.mxu0
  %v316 = vadd.f32 %v59, %v315
  %317 = vmatmul.bf16.gmra.mxu0 %v222
  %v318 = vpop.f32.mrf.mxu0
  %v319 = vadd.f32 %v59, %v318
  %v320 = vpop.f32.mrf.mxu0
  %v321 = vadd.f32 %v59, %v320
  %322 = vdwg.mxu0
  %vm323 = vcmp.ge.f32.partialorder %v234, 0.0
  %vm324 = vcmp.ge.f32.partialorder %v236, 0.0
  %vm325 = vcmp.ge.f32.partialorder %v239, 0.0
  %vm326 = vcmp.ge.f32.partialorder %v241, 0.0
  %vm327 = vcmp.ge.f32.partialorder %v244, 0.0
  %vm328 = vcmp.ge.f32.partialorder %v246, 0.0
  %vm329 = vcmp.ge.f32.partialorder %v249, 0.0
  %vm330 = vcmp.ge.f32.partialorder %v251, 0.0
  %vm331 = vcmp.ge.f32.partialorder %v254, 0.0
  %vm332 = vcmp.ge.f32.partialorder %v256, 0.0
  %vm333 = vcmp.ge.f32.partialorder %v259, 0.0
  %vm334 = vcmp.ge.f32.partialorder %v261, 0.0
  %vm335 = vcmp.ge.f32.partialorder %v264, 0.0
  %vm336 = vcmp.ge.f32.partialorder %v266, 0.0
  %vm337 = vcmp.ge.f32.partialorder %v269, 0.0
  %vm338 = vcmp.ge.f32.partialorder %v271, 0.0
  %vm339 = vcmp.ge.f32.partialorder %v274, 0.0
  %vm340 = vcmp.ge.f32.partialorder %v276, 0.0
  %vm341 = vcmp.ge.f32.partialorder %v279, 0.0
  %vm342 = vcmp.ge.f32.partialorder %v281, 0.0
  %vm343 = vcmp.ge.f32.partialorder %v284, 0.0
  %vm344 = vcmp.ge.f32.partialorder %v286, 0.0
  %vm345 = vcmp.ge.f32.partialorder %v289, 0.0
  %vm346 = vcmp.ge.f32.partialorder %v291, 0.0
  %vm347 = vcmp.ge.f32.partialorder %v294, 0.0
  %vm348 = vcmp.ge.f32.partialorder %v296, 0.0
  %vm349 = vcmp.ge.f32.partialorder %v299, 0.0
  %vm350 = vcmp.ge.f32.partialorder %v301, 0.0
  %vm351 = vcmp.ge.f32.partialorder %v304, 0.0
  %vm352 = vcmp.ge.f32.partialorder %v306, 0.0
  %vm353 = vcmp.ge.f32.partialorder %v309, 0.0
  %vm354 = vcmp.ge.f32.partialorder %v311, 0.0
  %vm355 = vcmp.ge.f32.partialorder %v314, 0.0
  %vm356 = vcmp.ge.f32.partialorder %v316, 0.0
  %vm357 = vcmp.ge.f32.partialorder %v319, 0.0
  %vm358 = vcmp.ge.f32.partialorder %v321, 0.0
  %v359 = vmul.f32 %v234, 0.1
  %v360 = vmul.f32 %v236, 0.1
  %v361 = vmul.f32 %v239, 0.1
  %v362 = vmul.f32 %v241, 0.1
  %v363 = vmul.f32 %v244, 0.1
  %v364 = vmul.f32 %v246, 0.1
  %v365 = vmul.f32 %v249, 0.1
  %v366 = vmul.f32 %v251, 0.1
  %v367 = vmul.f32 %v254, 0.1
  %v368 = vmul.f32 %v256, 0.1
  %v369 = vmul.f32 %v259, 0.1
  %v370 = vmul.f32 %v261, 0.1
  %v371 = vmul.f32 %v264, 0.1
  %v372 = vmul.f32 %v266, 0.1
  %v373 = vmul.f32 %v269, 0.1
  %v374 = vmul.f32 %v271, 0.1
  %v375 = vmul.f32 %v274, 0.1
  %v376 = vmul.f32 %v276, 0.1
  %v377 = vmul.f32 %v279, 0.1
  %v378 = vmul.f32 %v281, 0.1
  %v379 = vmul.f32 %v284, 0.1
  %v380 = vmul.f32 %v286, 0.1
  %v381 = vmul.f32 %v289, 0.1
  %v382 = vmul.f32 %v291, 0.1
  %v383 = vmul.f32 %v294, 0.1
  %v384 = vmul.f32 %v296, 0.1
  %v385 = vmul.f32 %v299, 0.1
  %v386 = vmul.f32 %v301, 0.1
  %v387 = vmul.f32 %v304, 0.1
  %v388 = vmul.f32 %v306, 0.1
  %v389 = vmul.f32 %v309, 0.1
  %v390 = vmul.f32 %v311, 0.1
  %v391 = vmul.f32 %v314, 0.1
  %v392 = vmul.f32 %v316, 0.1
  %v393 = vmul.f32 %v319, 0.1
  %v394 = vmul.f32 %v321, 0.1
  %v395 = vsel %vm323, %v234, %v359
  %v396 = vsel %vm324, %v236, %v360
  %v397 = vsel %vm325, %v239, %v361
  %v398 = vsel %vm326, %v241, %v362
  %v399 = vsel %vm327, %v244, %v363
  %v400 = vsel %vm328, %v246, %v364
  %v401 = vsel %vm329, %v249, %v365
  %v402 = vsel %vm330, %v251, %v366
  %v403 = vsel %vm331, %v254, %v367
  %v404 = vsel %vm332, %v256, %v368
  %v405 = vsel %vm333, %v259, %v369
  %v406 = vsel %vm334, %v261, %v370
  %v407 = vsel %vm335, %v264, %v371
  %v408 = vsel %vm336, %v266, %v372
  %v409 = vsel %vm337, %v269, %v373
  %v410 = vsel %vm338, %v271, %v374
  %v411 = vsel %vm339, %v274, %v375
  %v412 = vsel %vm340, %v276, %v376
  %v413 = vsel %vm341, %v279, %v377
  %v414 = vsel %vm342, %v281, %v378
  %v415 = vsel %vm343, %v284, %v379
  %v416 = vsel %vm344, %v286, %v380
  %v417 = vsel %vm345, %v289, %v381
  %v418 = vsel %vm346, %v291, %v382
  %v419 = vsel %vm347, %v294, %v383
  %v420 = vsel %vm348, %v296, %v384
  %v421 = vsel %vm349, %v299, %v385
  %v422 = vsel %vm350, %v301, %v386
  %v423 = vsel %vm351, %v304, %v387
  %v424 = vsel %vm352, %v306, %v388
  %v425 = vsel %vm353, %v309, %v389
  %v426 = vsel %vm354, %v311, %v390
  %v427 = vsel %vm355, %v314, %v391
  %v428 = vsel %vm356, %v316, %v392
  %v429 = vsel %vm357, %v319, %v393
  %v430 = vsel %vm358, %v321, %v394
  %v431 = vpack.c.bf16 %v395, %v395
  %v432 = vpack.c.bf16 %v396, %v396
  %v433 = vpack.c.bf16 %v397, %v397
  %v434 = vpack.c.bf16 %v398, %v398
  %v435 = vpack.c.bf16 %v399, %v399
  %v436 = vpack.c.bf16 %v400, %v400
  %v437 = vpack.c.bf16 %v401, %v401
  %v438 = vpack.c.bf16 %v402, %v402
  %v439 = vpack.c.bf16 %v403, %v403
  %v440 = vpack.c.bf16 %v404, %v404
  %v441 = vpack.c.bf16 %v405, %v405
  %v442 = vpack.c.bf16 %v406, %v406
  %v443 = vpack.c.bf16 %v407, %v407
  %v444 = vpack.c.bf16 %v408, %v408
  %v445 = vpack.c.bf16 %v409, %v409
  %v446 = vpack.c.bf16 %v410, %v410
  %v447 = vpack.c.bf16 %v411, %v411
  %v448 = vpack.c.bf16 %v412, %v412
  %v449 = vpack.c.bf16 %v413, %v413
  %v450 = vpack.c.bf16 %v414, %v414
  %v451 = vpack.c.bf16 %v415, %v415
  %v452 = vpack.c.bf16 %v416, %v416
  %v453 = vpack.c.bf16 %v417, %v417
  %v454 = vpack.c.bf16 %v418, %v418
  %v455 = vpack.c.bf16 %v419, %v419
  %v456 = vpack.c.bf16 %v420, %v420
  %v457 = vpack.c.bf16 %v421, %v421
  %v458 = vpack.c.bf16 %v422, %v422
  %v459 = vpack.c.bf16 %v423, %v423
  %v460 = vpack.c.bf16 %v424, %v424
  %v461 = vpack.c.bf16 %v425, %v425
  %v462 = vpack.c.bf16 %v426, %v426
  %v463 = vpack.c.bf16 %v427, %v427
  %v464 = vpack.c.bf16 %v428, %v428
  %v465 = vpack.c.bf16 %v429, %v429
  %v466 = vpack.c.bf16 %v430, %v430
  %467 = vst [vmem:[%s3] sm:$0xf] %v431
  %468 = vst [vmem:[%s3 + $0x4] sm:$0xf] %v432
  %469 = vst [vmem:[%s3 + $0x8] sm:$0xf] %v433
  %470 = vst [vmem:[%s3 + $0xc] sm:$0xf] %v434
  %471 = vst [vmem:[%s3 + $0x10] sm:$0xf] %v435
  %472 = vst [vmem:[%s3 + $0x14] sm:$0xf] %v436
  %473 = vst [vmem:[%s3 + $0x18] sm:$0xf] %v437
  %474 = vst [vmem:[%s3 + $0x1c] sm:$0xf] %v438
  %475 = vst [vmem:[%s3 + $0x20] sm:$0xf] %v439
  %476 = vst [vmem:[%s3 + $0x24] sm:$0xf] %v440
  %477 = vst [vmem:[%s3 + $0x28] sm:$0xf] %v441
  %478 = vst [vmem:[%s3 + $0x2c] sm:$0xf] %v442
  %479 = vst [vmem:[%s3 + $0x30] sm:$0xf] %v443
  %480 = vst [vmem:[%s3 + $0x34] sm:$0xf] %v444
  %481 = vst [vmem:[%s3 + $0x38] sm:$0xf] %v445
  %482 = vst [vmem:[%s3 + $0x3c] sm:$0xf] %v446
  %483 = vst [vmem:[%s3 + $0x40] sm:$0xf] %v447
  %484 = vst [vmem:[%s3 + $0x44] sm:$0xf] %v448
  %485 = vst [vmem:[%s3 + $0x48] sm:$0xf] %v449
  %486 = vst [vmem:[%s3 + $0x4c] sm:$0xf] %v450
  %487 = vst [vmem:[%s3 + $0x50] sm:$0xf] %v451
  %488 = vst [vmem:[%s3 + $0x54] sm:$0xf] %v452
  %489 = vst [vmem:[%s3 + $0x58] sm:$0xf] %v453
  %490 = vst [vmem:[%s3 + $0x5c] sm:$0xf] %v454
  %491 = vst [vmem:[%s3 + $0x60] sm:$0xf] %v455
  %492 = vst [vmem:[%s3 + $0x64] sm:$0xf] %v456
  %493 = vst [vmem:[%s3 + $0x68] sm:$0xf] %v457
  %494 = vst [vmem:[%s3 + $0x6c] sm:$0xf] %v458
  %495 = vst [vmem:[%s3 + $0x70] sm:$0xf] %v459
  %496 = vst [vmem:[%s3 + $0x74] sm:$0xf] %v460
  %497 = vst [vmem:[%s3 + $0x78] sm:$0xf] %v461
  %498 = vst [vmem:[%s3 + $0x7c] sm:$0xf] %v462
  %499 = vst [vmem:[%s3 + $0x80] sm:$0xf] %v463
  %500 = vst [vmem:[%s3 + $0x84] sm:$0xf] %v464
  %501 = vst [vmem:[%s3 + $0x88] sm:$0xf] %v465
  %502 = vst [vmem:[%s3 + $0x8c] sm:$0xf] %v466
  // Predicated region
  $region14: #{multi_period_disc_forward.49} parent=0 // pred_check
    _
  $region15: #{multi_period_disc_forward.49} parent=0 // pred_check_branch
    %504 = sbr.rel (0) target = $region17
  $region16: #{multi_period_disc_forward.49} parent=0 // pred_region
    _
  $region17: #{multi_period_disc_forward.49} parent=0 // pred_fallthru
    _
  // Predicated region
  $region18: #{multi_period_disc_forward.49} parent=0 // pred_check
    _
  $region19: #{multi_period_disc_forward.49} parent=0 // pred_check_branch
    %506 = sbr.rel (0) target = $region21
  $region20: #{multi_period_disc_forward.49} parent=0 // pred_region
    _
  $region21: #{multi_period_disc_forward.49} parent=0 // pred_fallthru
    _

// kernel: multi_period_disc_forward.50
$region0: #{multi_period_disc_forward.50}
  #allocation0 [shape = 'u32[]', space=smem, size = 0x4, offset = 0x4, fixed_abs, tag = 'smem constant byte address 0x4 - core index']
  #allocation1 [shape = 'u32[72,128]{1,0:T(1,128)}', space=vmem, size = 0x9000, scoped, tag = 'internal scratch']
  #allocation2 [shape = 'f32[112,128]{1,0:T(8,128)}', space=vmem, size = 0xe000, scoped, tag = 'scratch operand']
  %s0 = inlined_call_operand.vmem [shape: bf16[112,160], index: 0, kind: input, shape index: {}]
  %s1 = inlined_call_operand.vmem [shape: bf16[160,128], index: 1, kind: input, shape index: {}]
  %s2 = inlined_call_operand.vmem [shape: f32[1,128], index: 2, kind: input, shape index: {}]
  %s3 = inlined_call_operand.vmem [shape: bf16[112,128], index: 3, kind: output, shape index: {}]
  %s4 = sld [smem:[#allocation0]]
  $region22: #{multi_period_disc_forward.50} parent=0
    _
  %s6 = ssub.s32 1, %s4
  %s7 = scalar_select 0, %s6, %s4
  // Predicated region
  $region2: #{multi_period_disc_forward.50} parent=0 // pred_check
    _
  $region3: #{multi_period_disc_forward.50} parent=0 // pred_check_branch
    %9 = sbr.rel (0) target = $region5
  $region4: #{multi_period_disc_forward.50} parent=0 // pred_region
    _
  $region5: #{multi_period_disc_forward.50} parent=0 // pred_fallthru
    _
  // Predicated region
  $region6: #{multi_period_disc_forward.50} parent=0 // pred_check
    _
  $region7: #{multi_period_disc_forward.50} parent=0 // pred_check_branch
    %11 = sbr.rel (0) target = $region9
  $region8: #{multi_period_disc_forward.50} parent=0 // pred_region
    _
  $region9: #{multi_period_disc_forward.50} parent=0 // pred_fallthru
    _
  // Predicated region
  $region10: #{multi_period_disc_forward.50} parent=0 // pred_check
    _
  $region11: #{multi_period_disc_forward.50} parent=0 // pred_check_branch
    %13 = sbr.rel (0) target = $region13
  $region12: #{multi_period_disc_forward.50} parent=0 // pred_region
    _
  $region13: #{multi_period_disc_forward.50} parent=0 // pred_fallthru
    _
  %v15 = vld [vmem:[%s0] sm:$0xff]
  %v16 = vld [vmem:[%s0 + $0x8] sm:$0xff]
  %v17 = vld [vmem:[%s0 + $0x10] sm:$0xff]
  %v18 = vld [vmem:[%s0 + $0x18] sm:$0xff]
  %v19 = vld [vmem:[%s0 + $0x20] sm:$0xff]
  %v20 = vld [vmem:[%s0 + $0x28] sm:$0xff]
  %v21 = vld [vmem:[%s0 + $0x30] sm:$0xff]
  %v22 = vld [vmem:[%s0 + $0x38] sm:$0xff]
  %v23 = vld [vmem:[%s0 + $0x40] sm:$0xff]
  %v24 = vld [vmem:[%s0 + $0x48] sm:$0xff]
  %v25 = vld [vmem:[%s0 + $0x50] sm:$0xff]
  %v26 = vld [vmem:[%s0 + $0x58] sm:$0xff]
  %v27 = vld [vmem:[%s0 + $0x60] sm:$0xff]
  %v28 = vld [vmem:[%s0 + $0x68] sm:$0xff]
  %v29 = vld [vmem:[%s1] sm:$0xf]
  %v30 = vld [vmem:[%s1 + $0x4] sm:$0xf]
  %v31 = vld [vmem:[%s1 + $0x8] sm:$0xf]
  %v32 = vld [vmem:[%s1 + $0xc] sm:$0xf]
  %v33 = vld [vmem:[%s1 + $0x10] sm:$0xf]
  %v34 = vld [vmem:[%s1 + $0x14] sm:$0xf]
  %v35 = vld [vmem:[%s1 + $0x18] sm:$0xf]
  %v36 = vld [vmem:[%s1 + $0x1c] sm:$0xf]
  %v37 = vld [vmem:[%s1 + $0x20] sm:$0xf]
  %v38 = vld [vmem:[%s1 + $0x24] sm:$0xf]
  %v39 = vld [vmem:[%s1 + $0x28] sm:$0xf]
  %v40 = vld [vmem:[%s1 + $0x2c] sm:$0xf]
  %v41 = vld [vmem:[%s1 + $0x30] sm:$0xf]
  %v42 = vld [vmem:[%s1 + $0x34] sm:$0xf]
  %v43 = vld [vmem:[%s1 + $0x38] sm:$0xf]
  %v44 = vld [vmem:[%s1 + $0x3c] sm:$0xf]
  %v45 = vld [vmem:[%s1 + $0x40] sm:$0xf]
  %v46 = vld [vmem:[%s1 + $0x44] sm:$0xf]
  %v47 = vld [vmem:[%s1 + $0x48] sm:$0xf]
  %v48 = vld [vmem:[%s1 + $0x4c] sm:$0xf]
  %v49 = vld [vmem:[%s2] sm:$0x1]
  %v51 = vperm.slane %v49, 0
  %v67 = vunpack.c.l.b16 %v15
  %v68 = vunpack.c.h.b16 %v15
  %v69 = vunpack.c.l.b16 %v16
  %v70 = vunpack.c.h.b16 %v16
  %v71 = vunpack.c.l.b16 %v17
  %v72 = vunpack.c.h.b16 %v17
  %v73 = vunpack.c.l.b16 %v18
  %v74 = vunpack.c.h.b16 %v18
  %v75 = vunpack.c.l.b16 %v19
  %v76 = vunpack.c.h.b16 %v19
  %v77 = vunpack.c.l.b16 %v20
  %v78 = vunpack.c.h.b16 %v20
  %v79 = vunpack.c.l.b16 %v21
  %v80 = vunpack.c.h.b16 %v21
  %v81 = vunpack.c.l.b16 %v22
  %v82 = vunpack.c.h.b16 %v22
  %v83 = vunpack.c.l.b16 %v23
  %v84 = vunpack.c.h.b16 %v23
  %v85 = vunpack.c.l.b16 %v24
  %v86 = vunpack.c.h.b16 %v24
  %v87 = vunpack.c.l.b16 %v25
  %v88 = vunpack.c.h.b16 %v25
  %v89 = vunpack.c.l.b16 %v26
  %v90 = vunpack.c.h.b16 %v26
  %v91 = vunpack.c.l.b16 %v27
  %v92 = vunpack.c.h.b16 %v27
  %v93 = vunpack.c.l.b16 %v28
  %v94 = vunpack.c.h.b16 %v28
  %v95 = vpack.c.b16 %v69, %v67
  %v96 = vpack.c.b16 %v70, %v68
  %v97 = vpack.c.b16 %v73, %v71
  %v98 = vpack.c.b16 %v74, %v72
  %v99 = vpack.c.b16 %v77, %v75
  %v100 = vpack.c.b16 %v78, %v76
  %v101 = vpack.c.b16 %v81, %v79
  %v102 = vpack.c.b16 %v82, %v80
  %v103 = vpack.c.b16 %v85, %v83
  %v104 = vpack.c.b16 %v86, %v84
  %v105 = vpack.c.b16 %v89, %v87
  %v106 = vpack.c.b16 %v90, %v88
  %v107 = vpack.c.b16 %v93, %v91
  %v108 = vpack.c.b16 %v94, %v92
  %v136 = vunpack.c.l.b16 %v29
  %v137 = vunpack.c.l.b16 %v30
  %v138 = vunpack.c.l.b16 %v31
  %v139 = vunpack.c.l.b16 %v32
  %v140 = vunpack.c.l.b16 %v33
  %v141 = vunpack.c.l.b16 %v34
  %v142 = vunpack.c.l.b16 %v35
  %v143 = vunpack.c.l.b16 %v36
  %v144 = vunpack.c.l.b16 %v37
  %v145 = vunpack.c.l.b16 %v38
  %v146 = vunpack.c.l.b16 %v39
  %v147 = vunpack.c.l.b16 %v40
  %v148 = vunpack.c.l.b16 %v41
  %v149 = vunpack.c.l.b16 %v42
  %v150 = vunpack.c.l.b16 %v43
  %v151 = vunpack.c.l.b16 %v44
  %v152 = vunpack.c.l.b16 %v45
  %v153 = vunpack.c.l.b16 %v46
  %v154 = vunpack.c.l.b16 %v47
  %v155 = vunpack.c.l.b16 %v48
  %v156 = vpack.c.b16 %v137, %v136
  %v157 = vpack.c.b16 %v139, %v138
  %v158 = vpack.c.b16 %v141, %v140
  %v159 = vpack.c.b16 %v143, %v142
  %v160 = vpack.c.b16 %v145, %v144
  %v161 = vpack.c.b16 %v147, %v146
  %v162 = vpack.c.b16 %v149, %v148
  %v163 = vpack.c.b16 %v151, %v150
  %v164 = vpack.c.b16 %v153, %v152
  %v165 = vpack.c.b16 %v155, %v154
  %vm176 = vcmask 261120
  %v178 = vsel %vm176, %v96, 0
  %v181 = vsel %vm176, %v98, 0
  %v184 = vsel %vm176, %v100, 0
  %v187 = vsel %vm176, %v102, 0
  %v190 = vsel %vm176, %v104, 0
  %v193 = vsel %vm176, %v106, 0
  %v196 = vsel %vm176, %v108, 0
  %198 = vmatpush.bf16.msra.mxu0 %v163
  %199 = vmatpush.bf16.msra.mxu0 %v162
  %200 = vmatpush.bf16.msra.mxu0 %v161
  %201 = vmatpush.bf16.msra.mxu0 %v160
  %202 = vmatpush.bf16.msra.mxu0 %v159
  %203 = vmatpush.bf16.msra.mxu0 %v158
  %204 = vmatpush.bf16.msra.mxu0 %v157
  %205 = vmatpush.bf16.msra.mxu0 %v156
  %206 = vmatmul.bf16.gmra.mxu0 %v95
  %v207 = vpop.f32.mrf.mxu0
  %v208 = vadd.f32 %v51, %v207
  %v209 = vpop.f32.mrf.mxu0
  %v210 = vadd.f32 %v51, %v209
  %211 = vmatmul.bf16.gmra.mxu0 %v97
  %v212 = vpop.f32.mrf.mxu0
  %v213 = vadd.f32 %v51, %v212
  %v214 = vpop.f32.mrf.mxu0
  %v215 = vadd.f32 %v51, %v214
  %216 = vmatmul.bf16.gmra.mxu0 %v99
  %v217 = vpop.f32.mrf.mxu0
  %v218 = vadd.f32 %v51, %v217
  %v219 = vpop.f32.mrf.mxu0
  %v220 = vadd.f32 %v51, %v219
  %221 = vmatmul.bf16.gmra.mxu0 %v101
  %v222 = vpop.f32.mrf.mxu0
  %v223 = vadd.f32 %v51, %v222
  %v224 = vpop.f32.mrf.mxu0
  %v225 = vadd.f32 %v51, %v224
  %226 = vmatmul.bf16.gmra.mxu0 %v103
  %v227 = vpop.f32.mrf.mxu0
  %v228 = vadd.f32 %v51, %v227
  %v229 = vpop.f32.mrf.mxu0
  %v230 = vadd.f32 %v51, %v229
  %231 = vmatmul.bf16.gmra.mxu0 %v105
  %v232 = vpop.f32.mrf.mxu0
  %v233 = vadd.f32 %v51, %v232
  %v234 = vpop.f32.mrf.mxu0
  %v235 = vadd.f32 %v51, %v234
  %236 = vmatmul.bf16.gmra.mxu0 %v107
  %v237 = vpop.f32.mrf.mxu0
  %v238 = vadd.f32 %v51, %v237
  %v239 = vpop.f32.mrf.mxu0
  %v240 = vadd.f32 %v51, %v239
  %241 = vdwg.mxu0
  %242 = vmatpush.bf16.msra.mxu0 0
  %243 = vmatpush.bf16.msra.mxu0 0
  %244 = vmatpush.bf16.msra.mxu0 0
  %245 = vmatpush.bf16.msra.mxu0 0
  %246 = vmatpush.bf16.msra.mxu0 0
  %247 = vmatpush.bf16.msra.mxu0 0
  %248 = vmatpush.bf16.msra.mxu0 %v165
  %249 = vmatpush.bf16.msra.mxu0 %v164
  %250 = vmatmul.bf16.gmra.mxu0 %v178
  %v251 = vpop.f32.mrf.mxu0
  %v252 = vadd.f32 %v208, %v251
  %v253 = vpop.f32.mrf.mxu0
  %v254 = vadd.f32 %v210, %v253
  %255 = vmatmul.bf16.gmra.mxu0 %v181
  %v256 = vpop.f32.mrf.mxu0
  %v257 = vadd.f32 %v213, %v256
  %v258 = vpop.f32.mrf.mxu0
  %v259 = vadd.f32 %v215, %v258
  %260 = vmatmul.bf16.gmra.mxu0 %v184
  %v261 = vpop.f32.mrf.mxu0
  %v262 = vadd.f32 %v218, %v261
  %v263 = vpop.f32.mrf.mxu0
  %v264 = vadd.f32 %v220, %v263
  %265 = vmatmul.bf16.gmra.mxu0 %v187
  %v266 = vpop.f32.mrf.mxu0
  %v267 = vadd.f32 %v223, %v266
  %v268 = vpop.f32.mrf.mxu0
  %v269 = vadd.f32 %v225, %v268
  %270 = vmatmul.bf16.gmra.mxu0 %v190
  %v271 = vpop.f32.mrf.mxu0
  %v272 = vadd.f32 %v228, %v271
  %v273 = vpop.f32.mrf.mxu0
  %v274 = vadd.f32 %v230, %v273
  %275 = vmatmul.bf16.gmra.mxu0 %v193
  %v276 = vpop.f32.mrf.mxu0
  %v277 = vadd.f32 %v233, %v276
  %v278 = vpop.f32.mrf.mxu0
  %v279 = vadd.f32 %v235, %v278
  %280 = vmatmul.bf16.gmra.mxu0 %v196
  %v281 = vpop.f32.mrf.mxu0
  %v282 = vadd.f32 %v238, %v281
  %v283 = vpop.f32.mrf.mxu0
  %v284 = vadd.f32 %v240, %v283
  %285 = vdwg.mxu0
  %vm286 = vcmp.ge.f32.partialorder %v252, 0.0
  %vm287 = vcmp.ge.f32.partialorder %v254, 0.0
  %vm288 = vcmp.ge.f32.partialorder %v257, 0.0
  %vm289 = vcmp.ge.f32.partialorder %v259, 0.0
  %vm290 = vcmp.ge.f32.partialorder %v262, 0.0
  %vm291 = vcmp.ge.f32.partialorder %v264, 0.0
  %vm292 = vcmp.ge.f32.partialorder %v267, 0.0
  %vm293 = vcmp.ge.f32.partialorder %v269, 0.0
  %vm294 = vcmp.ge.f32.partialorder %v272, 0.0
  %vm295 = vcmp.ge.f32.partialorder %v274, 0.0
  %vm296 = vcmp.ge.f32.partialorder %v277, 0.0
  %vm297 = vcmp.ge.f32.partialorder %v279, 0.0
  %vm298 = vcmp.ge.f32.partialorder %v282, 0.0
  %vm299 = vcmp.ge.f32.partialorder %v284, 0.0
  %v300 = vmul.f32 %v252, 0.1
  %v301 = vmul.f32 %v254, 0.1
  %v302 = vmul.f32 %v257, 0.1
  %v303 = vmul.f32 %v259, 0.1
  %v304 = vmul.f32 %v262, 0.1
  %v305 = vmul.f32 %v264, 0.1
  %v306 = vmul.f32 %v267, 0.1
  %v307 = vmul.f32 %v269, 0.1
  %v308 = vmul.f32 %v272, 0.1
  %v309 = vmul.f32 %v274, 0.1
  %v310 = vmul.f32 %v277, 0.1
  %v311 = vmul.f32 %v279, 0.1
  %v312 = vmul.f32 %v282, 0.1
  %v313 = vmul.f32 %v284, 0.1
  %v314 = vsel %vm286, %v252, %v300
  %v315 = vsel %vm287, %v254, %v301
  %v316 = vsel %vm288, %v257, %v302
  %v317 = vsel %vm289, %v259, %v303
  %v318 = vsel %vm290, %v262, %v304
  %v319 = vsel %vm291, %v264, %v305
  %v320 = vsel %vm292, %v267, %v306
  %v321 = vsel %vm293, %v269, %v307
  %v322 = vsel %vm294, %v272, %v308
  %v323 = vsel %vm295, %v274, %v309
  %v324 = vsel %vm296, %v277, %v310
  %v325 = vsel %vm297, %v279, %v311
  %v326 = vsel %vm298, %v282, %v312
  %v327 = vsel %vm299, %v284, %v313
  %v328 = vpack.c.bf16 %v314, %v314
  %v329 = vpack.c.bf16 %v315, %v315
  %v330 = vpack.c.bf16 %v316, %v316
  %v331 = vpack.c.bf16 %v317, %v317
  %v332 = vpack.c.bf16 %v318, %v318
  %v333 = vpack.c.bf16 %v319, %v319
  %v334 = vpack.c.bf16 %v320, %v320
  %v335 = vpack.c.bf16 %v321, %v321
  %v336 = vpack.c.bf16 %v322, %v322
  %v337 = vpack.c.bf16 %v323, %v323
  %v338 = vpack.c.bf16 %v324, %v324
  %v339 = vpack.c.bf16 %v325, %v325
  %v340 = vpack.c.bf16 %v326, %v326
  %v341 = vpack.c.bf16 %v327, %v327
  %342 = vst [vmem:[%s3] sm:$0xf] %v328
  %343 = vst [vmem:[%s3 + $0x4] sm:$0xf] %v329
  %344 = vst [vmem:[%s3 + $0x8] sm:$0xf] %v330
  %345 = vst [vmem:[%s3 + $0xc] sm:$0xf] %v331
  %346 = vst [vmem:[%s3 + $0x10] sm:$0xf] %v332
  %347 = vst [vmem:[%s3 + $0x14] sm:$0xf] %v333
  %348 = vst [vmem:[%s3 + $0x18] sm:$0xf] %v334
  %349 = vst [vmem:[%s3 + $0x1c] sm:$0xf] %v335
  %350 = vst [vmem:[%s3 + $0x20] sm:$0xf] %v336
  %351 = vst [vmem:[%s3 + $0x24] sm:$0xf] %v337
  %352 = vst [vmem:[%s3 + $0x28] sm:$0xf] %v338
  %353 = vst [vmem:[%s3 + $0x2c] sm:$0xf] %v339
  %354 = vst [vmem:[%s3 + $0x30] sm:$0xf] %v340
  %355 = vst [vmem:[%s3 + $0x34] sm:$0xf] %v341
  // Predicated region
  $region14: #{multi_period_disc_forward.50} parent=0 // pred_check
    _
  $region15: #{multi_period_disc_forward.50} parent=0 // pred_check_branch
    %357 = sbr.rel (0) target = $region17
  $region16: #{multi_period_disc_forward.50} parent=0 // pred_region
    _
  $region17: #{multi_period_disc_forward.50} parent=0 // pred_fallthru
    _
  // Predicated region
  $region18: #{multi_period_disc_forward.50} parent=0 // pred_check
    _
  $region19: #{multi_period_disc_forward.50} parent=0 // pred_check_branch
    %359 = sbr.rel (0) target = $region21
  $region20: #{multi_period_disc_forward.50} parent=0 // pred_region
    _
  $region21: #{multi_period_disc_forward.50} parent=0 // pred_fallthru
    _

// kernel: multi_period_disc_forward.51
$region0: #{multi_period_disc_forward.51}
  #allocation0 [shape = 'u32[]', space=smem, size = 0x4, offset = 0x4, fixed_abs, tag = 'smem constant byte address 0x4 - core index']
  #allocation1 [shape = 'u32[72,128]{1,0:T(1,128)}', space=vmem, size = 0x9000, scoped, tag = 'internal scratch']
  #allocation2 [shape = 'f32[48,128]{1,0:T(8,128)}', space=vmem, size = 0x6000, scoped, tag = 'scratch operand']
  %s0 = inlined_call_operand.vmem [shape: bf16[48,320], index: 0, kind: input, shape index: {}]
  %s1 = inlined_call_operand.vmem [shape: bf16[320,128], index: 1, kind: input, shape index: {}]
  %s2 = inlined_call_operand.vmem [shape: f32[1,128], index: 2, kind: input, shape index: {}]
  %s3 = inlined_call_operand.vmem [shape: bf16[48,128], index: 3, kind: output, shape index: {}]
  %s4 = sld [smem:[#allocation0]]
  $region22: #{multi_period_disc_forward.51} parent=0
    _
  %s6 = ssub.s32 1, %s4
  %s7 = scalar_select 0, %s6, %s4
  // Predicated region
  $region2: #{multi_period_disc_forward.51} parent=0 // pred_check
    _
  $region3: #{multi_period_disc_forward.51} parent=0 // pred_check_branch
    %9 = sbr.rel (0) target = $region5
  $region4: #{multi_period_disc_forward.51} parent=0 // pred_region
    _
  $region5: #{multi_period_disc_forward.51} parent=0 // pred_fallthru
    _
  // Predicated region
  $region6: #{multi_period_disc_forward.51} parent=0 // pred_check
    _
  $region7: #{multi_period_disc_forward.51} parent=0 // pred_check_branch
    %11 = sbr.rel (0) target = $region9
  $region8: #{multi_period_disc_forward.51} parent=0 // pred_region
    _
  $region9: #{multi_period_disc_forward.51} parent=0 // pred_fallthru
    _
  // Predicated region
  $region10: #{multi_period_disc_forward.51} parent=0 // pred_check
    _
  $region11: #{multi_period_disc_forward.51} parent=0 // pred_check_branch
    %13 = sbr.rel (0) target = $region13
  $region12: #{multi_period_disc_forward.51} parent=0 // pred_region
    _
  $region13: #{multi_period_disc_forward.51} parent=0 // pred_fallthru
    _
  %v15 = vld [vmem:[%s0] sm:$0xff]
  %v16 = vld [vmem:[%s0 + $0x8] sm:$0xf]
  %v17 = vld [vmem:[%s0 + $0xc] sm:$0xff]
  %v18 = vld [vmem:[%s0 + $0x14] sm:$0xf]
  %v19 = vld [vmem:[%s0 + $0x18] sm:$0xff]
  %v20 = vld [vmem:[%s0 + $0x20] sm:$0xf]
  %v21 = vld [vmem:[%s0 + $0x24] sm:$0xff]
  %v22 = vld [vmem:[%s0 + $0x2c] sm:$0xf]
  %v23 = vld [vmem:[%s0 + $0x30] sm:$0xff]
  %v24 = vld [vmem:[%s0 + $0x38] sm:$0xf]
  %v25 = vld [vmem:[%s0 + $0x3c] sm:$0xff]
  %v26 = vld [vmem:[%s0 + $0x44] sm:$0xf]
  %v27 = vld [vmem:[%s1] sm:$0xf]
  %v28 = vld [vmem:[%s1 + $0x4] sm:$0xf]
  %v29 = vld [vmem:[%s1 + $0x8] sm:$0xf]
  %v30 = vld [vmem:[%s1 + $0xc] sm:$0xf]
  %v31 = vld [vmem:[%s1 + $0x10] sm:$0xf]
  %v32 = vld [vmem:[%s1 + $0x14] sm:$0xf]
  %v33 = vld [vmem:[%s1 + $0x18] sm:$0xf]
  %v34 = vld [vmem:[%s1 + $0x1c] sm:$0xf]
  %v35 = vld [vmem:[%s1 + $0x20] sm:$0xf]
  %v36 = vld [vmem:[%s1 + $0x24] sm:$0xf]
  %v37 = vld [vmem:[%s1 + $0x28] sm:$0xf]
  %v38 = vld [vmem:[%s1 + $0x2c] sm:$0xf]
  %v39 = vld [vmem:[%s1 + $0x30] sm:$0xf]
  %v40 = vld [vmem:[%s1 + $0x34] sm:$0xf]
  %v41 = vld [vmem:[%s1 + $0x38] sm:$0xf]
  %v42 = vld [vmem:[%s1 + $0x3c] sm:$0xf]
  %v43 = vld [vmem:[%s1 + $0x40] sm:$0xf]
  %v44 = vld [vmem:[%s1 + $0x44] sm:$0xf]
  %v45 = vld [vmem:[%s1 + $0x48] sm:$0xf]
  %v46 = vld [vmem:[%s1 + $0x4c] sm:$0xf]
  %v47 = vld [vmem:[%s1 + $0x50] sm:$0xf]
  %v48 = vld [vmem:[%s1 + $0x54] sm:$0xf]
  %v49 = vld [vmem:[%s1 + $0x58] sm:$0xf]
  %v50 = vld [vmem:[%s1 + $0x5c] sm:$0xf]
  %v51 = vld [vmem:[%s1 + $0x60] sm:$0xf]
  %v52 = vld [vmem:[%s1 + $0x64] sm:$0xf]
  %v53 = vld [vmem:[%s1 + $0x68] sm:$0xf]
  %v54 = vld [vmem:[%s1 + $0x6c] sm:$0xf]
  %v55 = vld [vmem:[%s1 + $0x70] sm:$0xf]
  %v56 = vld [vmem:[%s1 + $0x74] sm:$0xf]
  %v57 = vld [vmem:[%s1 + $0x78] sm:$0xf]
  %v58 = vld [vmem:[%s1 + $0x7c] sm:$0xf]
  %v59 = vld [vmem:[%s1 + $0x80] sm:$0xf]
  %v60 = vld [vmem:[%s1 + $0x84] sm:$0xf]
  %v61 = vld [vmem:[%s1 + $0x88] sm:$0xf]
  %v62 = vld [vmem:[%s1 + $0x8c] sm:$0xf]
  %v63 = vld [vmem:[%s1 + $0x90] sm:$0xf]
  %v64 = vld [vmem:[%s1 + $0x94] sm:$0xf]
  %v65 = vld [vmem:[%s1 + $0x98] sm:$0xf]
  %v66 = vld [vmem:[%s1 + $0x9c] sm:$0xf]
  %v67 = vld [vmem:[%s2] sm:$0x1]
  %v69 = vperm.slane %v67, 0
  %v83 = vunpack.c.l.b16 %v15
  %v84 = vunpack.c.h.b16 %v15
  %v85 = vunpack.c.l.b16 %v16
  %v86 = vunpack.c.l.b16 %v17
  %v87 = vunpack.c.h.b16 %v17
  %v88 = vunpack.c.l.b16 %v18
  %v89 = vunpack.c.l.b16 %v19
  %v90 = vunpack.c.h.b16 %v19
  %v91 = vunpack.c.l.b16 %v20
  %v92 = vunpack.c.l.b16 %v21
  %v93 = vunpack.c.h.b16 %v21
  %v94 = vunpack.c.l.b16 %v22
  %v95 = vunpack.c.l.b16 %v23
  %v96 = vunpack.c.h.b16 %v23
  %v97 = vunpack.c.l.b16 %v24
  %v98 = vunpack.c.l.b16 %v25
  %v99 = vunpack.c.h.b16 %v25
  %v100 = vunpack.c.l.b16 %v26
  %v101 = vpack.c.b16 %v86, %v83
  %v102 = vpack.c.b16 %v87, %v84
  %v103 = vpack.c.b16 %v88, %v85
  %v104 = vpack.c.b16 %v92, %v89
  %v105 = vpack.c.b16 %v93, %v90
  %v106 = vpack.c.b16 %v94, %v91
  %v107 = vpack.c.b16 %v98, %v95
  %v108 = vpack.c.b16 %v99, %v96
  %v109 = vpack.c.b16 %v100, %v97
  %v156 = vunpack.c.l.b16 %v27
  %v157 = vunpack.c.l.b16 %v28
  %v158 = vunpack.c.l.b16 %v29
  %v159 = vunpack.c.l.b16 %v30
  %v160 = vunpack.c.l.b16 %v31
  %v161 = vunpack.c.l.b16 %v32
  %v162 = vunpack.c.l.b16 %v33
  %v163 = vunpack.c.l.b16 %v34
  %v164 = vunpack.c.l.b16 %v35
  %v165 = vunpack.c.l.b16 %v36
  %v166 = vunpack.c.l.b16 %v37
  %v167 = vunpack.c.l.b16 %v38
  %v168 = vunpack.c.l.b16 %v39
  %v169 = vunpack.c.l.b16 %v40
  %v170 = vunpack.c.l.b16 %v41
  %v171 = vunpack.c.l.b16 %v42
  %v172 = vunpack.c.l.b16 %v43
  %v173 = vunpack.c.l.b16 %v44
  %v174 = vunpack.c.l.b16 %v45
  %v175 = vunpack.c.l.b16 %v46
  %v176 = vunpack.c.l.b16 %v47
  %v177 = vunpack.c.l.b16 %v48
  %v178 = vunpack.c.l.b16 %v49
  %v179 = vunpack.c.l.b16 %v50
  %v180 = vunpack.c.l.b16 %v51
  %v181 = vunpack.c.l.b16 %v52
  %v182 = vunpack.c.l.b16 %v53
  %v183 = vunpack.c.l.b16 %v54
  %v184 = vunpack.c.l.b16 %v55
  %v185 = vunpack.c.l.b16 %v56
  %v186 = vunpack.c.l.b16 %v57
  %v187 = vunpack.c.l.b16 %v58
  %v188 = vunpack.c.l.b16 %v59
  %v189 = vunpack.c.l.b16 %v60
  %v190 = vunpack.c.l.b16 %v61
  %v191 = vunpack.c.l.b16 %v62
  %v192 = vunpack.c.l.b16 %v63
  %v193 = vunpack.c.l.b16 %v64
  %v194 = vunpack.c.l.b16 %v65
  %v195 = vunpack.c.l.b16 %v66
  %v196 = vpack.c.b16 %v157, %v156
  %v197 = vpack.c.b16 %v159, %v158
  %v198 = vpack.c.b16 %v161, %v160
  %v199 = vpack.c.b16 %v163, %v162
  %v200 = vpack.c.b16 %v165, %v164
  %v201 = vpack.c.b16 %v167, %v166
  %v202 = vpack.c.b16 %v169, %v168
  %v203 = vpack.c.b16 %v171, %v170
  %v204 = vpack.c.b16 %v173, %v172
  %v205 = vpack.c.b16 %v175, %v174
  %v206 = vpack.c.b16 %v177, %v176
  %v207 = vpack.c.b16 %v179, %v178
  %v208 = vpack.c.b16 %v181, %v180
  %v209 = vpack.c.b16 %v183, %v182
  %v210 = vpack.c.b16 %v185, %v184
  %v211 = vpack.c.b16 %v187, %v186
  %v212 = vpack.c.b16 %v189, %v188
  %v213 = vpack.c.b16 %v191, %v190
  %v214 = vpack.c.b16 %v193, %v192
  %v215 = vpack.c.b16 %v195, %v194
  %vm236 = vcmask 523264
  %v238 = vsel %vm236, %v103, 0
  %v241 = vsel %vm236, %v106, 0
  %v244 = vsel %vm236, %v109, 0
  %246 = vmatpush.bf16.msra.mxu0 %v203
  %247 = vmatpush.bf16.msra.mxu0 %v202
  %248 = vmatpush.bf16.msra.mxu0 %v201
  %249 = vmatpush.bf16.msra.mxu0 %v200
  %250 = vmatpush.bf16.msra.mxu0 %v199
  %251 = vmatpush.bf16.msra.mxu0 %v198
  %252 = vmatpush.bf16.msra.mxu0 %v197
  %253 = vmatpush.bf16.msra.mxu0 %v196
  %254 = vmatmul.bf16.gmra.mxu0 %v101
  %v255 = vpop.f32.mrf.mxu0
  %v256 = vadd.f32 %v69, %v255
  %v257 = vpop.f32.mrf.mxu0
  %v258 = vadd.f32 %v69, %v257
  %259 = vmatmul.bf16.gmra.mxu0 %v104
  %v260 = vpop.f32.mrf.mxu0
  %v261 = vadd.f32 %v69, %v260
  %v262 = vpop.f32.mrf.mxu0
  %v263 = vadd.f32 %v69, %v262
  %264 = vmatmul.bf16.gmra.mxu0 %v107
  %v265 = vpop.f32.mrf.mxu0
  %v266 = vadd.f32 %v69, %v265
  %v267 = vpop.f32.mrf.mxu0
  %v268 = vadd.f32 %v69, %v267
  %269 = vdwg.mxu0
  %270 = vmatpush.bf16.msra.mxu0 %v211
  %271 = vmatpush.bf16.msra.mxu0 %v210
  %272 = vmatpush.bf16.msra.mxu0 %v209
  %273 = vmatpush.bf16.msra.mxu0 %v208
  %274 = vmatpush.bf16.msra.mxu0 %v207
  %275 = vmatpush.bf16.msra.mxu0 %v206
  %276 = vmatpush.bf16.msra.mxu0 %v205
  %277 = vmatpush.bf16.msra.mxu0 %v204
  %278 = vmatmul.bf16.gmra.mxu0 %v102
  %v279 = vpop.f32.mrf.mxu0
  %v280 = vadd.f32 %v256, %v279
  %v281 = vpop.f32.mrf.mxu0
  %v282 = vadd.f32 %v258, %v281
  %283 = vmatmul.bf16.gmra.mxu0 %v105
  %v284 = vpop.f32.mrf.mxu0
  %v285 = vadd.f32 %v261, %v284
  %v286 = vpop.f32.mrf.mxu0
  %v287 = vadd.f32 %v263, %v286
  %288 = vmatmul.bf16.gmra.mxu0 %v108
  %v289 = vpop.f32.mrf.mxu0
  %v290 = vadd.f32 %v266, %v289
  %v291 = vpop.f32.mrf.mxu0
  %v292 = vadd.f32 %v268, %v291
  %293 = vdwg.mxu0
  %294 = vmatpush.bf16.msra.mxu0 0
  %295 = vmatpush.bf16.msra.mxu0 0
  %296 = vmatpush.bf16.msra.mxu0 0
  %297 = vmatpush.bf16.msra.mxu0 0
  %298 = vmatpush.bf16.msra.mxu0 %v215
  %299 = vmatpush.bf16.msra.mxu0 %v214
  %300 = vmatpush.bf16.msra.mxu0 %v213
  %301 = vmatpush.bf16.msra.mxu0 %v212
  %302 = vmatmul.bf16.gmra.mxu0 %v238
  %v303 = vpop.f32.mrf.mxu0
  %v304 = vadd.f32 %v280, %v303
  %v305 = vpop.f32.mrf.mxu0
  %v306 = vadd.f32 %v282, %v305
  %307 = vmatmul.bf16.gmra.mxu0 %v241
  %v308 = vpop.f32.mrf.mxu0
  %v309 = vadd.f32 %v285, %v308
  %v310 = vpop.f32.mrf.mxu0
  %v311 = vadd.f32 %v287, %v310
  %312 = vmatmul.bf16.gmra.mxu0 %v244
  %v313 = vpop.f32.mrf.mxu0
  %v314 = vadd.f32 %v290, %v313
  %v315 = vpop.f32.mrf.mxu0
  %v316 = vadd.f32 %v292, %v315
  %317 = vdwg.mxu0
  %vm318 = vcmp.ge.f32.partialorder %v304, 0.0
  %vm319 = vcmp.ge.f32.partialorder %v306, 0.0
  %vm320 = vcmp.ge.f32.partialorder %v309, 0.0
  %vm321 = vcmp.ge.f32.partialorder %v311, 0.0
  %vm322 = vcmp.ge.f32.partialorder %v314, 0.0
  %vm323 = vcmp.ge.f32.partialorder %v316, 0.0
  %v324 = vmul.f32 %v304, 0.1
  %v325 = vmul.f32 %v306, 0.1
  %v326 = vmul.f32 %v309, 0.1
  %v327 = vmul.f32 %v311, 0.1
  %v328 = vmul.f32 %v314, 0.1
  %v329 = vmul.f32 %v316, 0.1
  %v330 = vsel %vm318, %v304, %v324
  %v331 = vsel %vm319, %v306, %v325
  %v332 = vsel %vm320, %v309, %v326
  %v333 = vsel %vm321, %v311, %v327
  %v334 = vsel %vm322, %v314, %v328
  %v335 = vsel %vm323, %v316, %v329
  %v336 = vpack.c.bf16 %v330, %v330
  %v337 = vpack.c.bf16 %v331, %v331
  %v338 = vpack.c.bf16 %v332, %v332
  %v339 = vpack.c.bf16 %v333, %v333
  %v340 = vpack.c.bf16 %v334, %v334
  %v341 = vpack.c.bf16 %v335, %v335
  %342 = vst [vmem:[%s3] sm:$0xf] %v336
  %343 = vst [vmem:[%s3 + $0x4] sm:$0xf] %v337
  %344 = vst [vmem:[%s3 + $0x8] sm:$0xf] %v338
  %345 = vst [vmem:[%s3 + $0xc] sm:$0xf] %v339
  %346 = vst [vmem:[%s3 + $0x10] sm:$0xf] %v340
  %347 = vst [vmem:[%s3 + $0x14] sm:$0xf] %v341
  // Predicated region
  $region14: #{multi_period_disc_forward.51} parent=0 // pred_check
    _
  $region15: #{multi_period_disc_forward.51} parent=0 // pred_check_branch
    %349 = sbr.rel (0) target = $region17
  $region16: #{multi_period_disc_forward.51} parent=0 // pred_region
    _
  $region17: #{multi_period_disc_forward.51} parent=0 // pred_fallthru
    _
  // Predicated region
  $region18: #{multi_period_disc_forward.51} parent=0 // pred_check
    _
  $region19: #{multi_period_disc_forward.51} parent=0 // pred_check_branch
    %351 = sbr.rel (0) target = $region21
  $region20: #{multi_period_disc_forward.51} parent=0 // pred_region
    _
  $region21: #{multi_period_disc_forward.51} parent=0 // pred_fallthru
    _

// kernel: multi_period_disc_forward.53
$region0: #{multi_period_disc_forward.53}
  #allocation0 [shape = 'u32[]', space=smem, size = 0x4, offset = 0x4, fixed_abs, tag = 'smem constant byte address 0x4 - core index']
  #allocation1 [shape = 'u32[72,128]{1,0:T(1,128)}', space=vmem, size = 0x9000, scoped, tag = 'internal scratch']
  #allocation2 [shape = 'f32[64,128]{1,0:T(8,128)}', space=vmem, size = 0x8000, scoped, tag = 'scratch operand']
  %s0 = inlined_call_operand.vmem [shape: bf16[64,128], index: 0, kind: input, shape index: {}]
  %s1 = inlined_call_operand.vmem [shape: bf16[128,128], index: 1, kind: input, shape index: {}]
  %s2 = inlined_call_operand.vmem [shape: f32[1,128], index: 2, kind: input, shape index: {}]
  %s3 = inlined_call_operand.vmem [shape: f32[64,128], index: 3, kind: output, shape index: {}]
  %s4 = sld [smem:[#allocation0]]
  $region22: #{multi_period_disc_forward.53} parent=0
    _
  %s6 = ssub.s32 1, %s4
  %s7 = scalar_select 0, %s6, %s4
  // Predicated region
  $region2: #{multi_period_disc_forward.53} parent=0 // pred_check
    _
  $region3: #{multi_period_disc_forward.53} parent=0 // pred_check_branch
    %9 = sbr.rel (0) target = $region5
  $region4: #{multi_period_disc_forward.53} parent=0 // pred_region
    _
  $region5: #{multi_period_disc_forward.53} parent=0 // pred_fallthru
    _
  // Predicated region
  $region6: #{multi_period_disc_forward.53} parent=0 // pred_check
    _
  $region7: #{multi_period_disc_forward.53} parent=0 // pred_check_branch
    %11 = sbr.rel (0) target = $region9
  $region8: #{multi_period_disc_forward.53} parent=0 // pred_region
    _
  $region9: #{multi_period_disc_forward.53} parent=0 // pred_fallthru
    _
  // Predicated region
  $region10: #{multi_period_disc_forward.53} parent=0 // pred_check
    _
  $region11: #{multi_period_disc_forward.53} parent=0 // pred_check_branch
    %13 = sbr.rel (0) target = $region13
  $region12: #{multi_period_disc_forward.53} parent=0 // pred_region
    _
  $region13: #{multi_period_disc_forward.53} parent=0 // pred_fallthru
    _
  %v14 = vld [vmem:[%s0] sm:$0xf]
  %v15 = vld [vmem:[%s0 + $0x4] sm:$0xf]
  %v16 = vld [vmem:[%s0 + $0x8] sm:$0xf]
  %v17 = vld [vmem:[%s0 + $0xc] sm:$0xf]
  %v18 = vld [vmem:[%s0 + $0x10] sm:$0xf]
  %v19 = vld [vmem:[%s0 + $0x14] sm:$0xf]
  %v20 = vld [vmem:[%s0 + $0x18] sm:$0xf]
  %v21 = vld [vmem:[%s0 + $0x1c] sm:$0xf]
  %v22 = vld [vmem:[%s1] sm:$0xf]
  %v23 = vld [vmem:[%s1 + $0x4] sm:$0xf]
  %v24 = vld [vmem:[%s1 + $0x8] sm:$0xf]
  %v25 = vld [vmem:[%s1 + $0xc] sm:$0xf]
  %v26 = vld [vmem:[%s1 + $0x10] sm:$0xf]
  %v27 = vld [vmem:[%s1 + $0x14] sm:$0xf]
  %v28 = vld [vmem:[%s1 + $0x18] sm:$0xf]
  %v29 = vld [vmem:[%s1 + $0x1c] sm:$0xf]
  %v30 = vld [vmem:[%s1 + $0x20] sm:$0xf]
  %v31 = vld [vmem:[%s1 + $0x24] sm:$0xf]
  %v32 = vld [vmem:[%s1 + $0x28] sm:$0xf]
  %v33 = vld [vmem:[%s1 + $0x2c] sm:$0xf]
  %v34 = vld [vmem:[%s1 + $0x30] sm:$0xf]
  %v35 = vld [vmem:[%s1 + $0x34] sm:$0xf]
  %v36 = vld [vmem:[%s1 + $0x38] sm:$0xf]
  %v37 = vld [vmem:[%s1 + $0x3c] sm:$0xf]
  %v38 = vld [vmem:[%s2] sm:$0x1]
  %v40 = vperm.slane %v38, 0
  %v50 = vunpack.c.l.b16 %v14
  %v51 = vunpack.c.l.b16 %v15
  %v52 = vunpack.c.l.b16 %v16
  %v53 = vunpack.c.l.b16 %v17
  %v54 = vunpack.c.l.b16 %v18
  %v55 = vunpack.c.l.b16 %v19
  %v56 = vunpack.c.l.b16 %v20
  %v57 = vunpack.c.l.b16 %v21
  %v58 = vpack.c.b16 %v51, %v50
  %v59 = vpack.c.b16 %v53, %v52
  %v60 = vpack.c.b16 %v55, %v54
  %v61 = vpack.c.b16 %v57, %v56
  %v82 = vunpack.c.l.b16 %v22
  %v83 = vunpack.c.l.b16 %v23
  %v84 = vunpack.c.l.b16 %v24
  %v85 = vunpack.c.l.b16 %v25
  %v86 = vunpack.c.l.b16 %v26
  %v87 = vunpack.c.l.b16 %v27
  %v88 = vunpack.c.l.b16 %v28
  %v89 = vunpack.c.l.b16 %v29
  %v90 = vunpack.c.l.b16 %v30
  %v91 = vunpack.c.l.b16 %v31
  %v92 = vunpack.c.l.b16 %v32
  %v93 = vunpack.c.l.b16 %v33
  %v94 = vunpack.c.l.b16 %v34
  %v95 = vunpack.c.l.b16 %v35
  %v96 = vunpack.c.l.b16 %v36
  %v97 = vunpack.c.l.b16 %v37
  %v98 = vpack.c.b16 %v83, %v82
  %v99 = vpack.c.b16 %v85, %v84
  %v100 = vpack.c.b16 %v87, %v86
  %v101 = vpack.c.b16 %v89, %v88
  %v102 = vpack.c.b16 %v91, %v90
  %v103 = vpack.c.b16 %v93, %v92
  %v104 = vpack.c.b16 %v95, %v94
  %v105 = vpack.c.b16 %v97, %v96
  %114 = vmatpush.bf16.msra.mxu0 %v105
  %115 = vmatpush.bf16.msra.mxu0 %v104
  %116 = vmatpush.bf16.msra.mxu0 %v103
  %117 = vmatpush.bf16.msra.mxu0 %v102
  %118 = vmatpush.bf16.msra.mxu0 %v101
  %119 = vmatpush.bf16.msra.mxu0 %v100
  %120 = vmatpush.bf16.msra.mxu0 %v99
  %121 = vmatpush.bf16.msra.mxu0 %v98
  %122 = vmatmul.bf16.gmra.mxu0 %v58
  %v123 = vpop.f32.mrf.mxu0
  %v124 = vadd.f32 %v40, %v123
  %v125 = vpop.f32.mrf.mxu0
  %v126 = vadd.f32 %v40, %v125
  %127 = vmatmul.bf16.gmra.mxu0 %v59
  %v128 = vpop.f32.mrf.mxu0
  %v129 = vadd.f32 %v40, %v128
  %v130 = vpop.f32.mrf.mxu0
  %v131 = vadd.f32 %v40, %v130
  %132 = vmatmul.bf16.gmra.mxu0 %v60
  %v133 = vpop.f32.mrf.mxu0
  %v134 = vadd.f32 %v40, %v133
  %v135 = vpop.f32.mrf.mxu0
  %v136 = vadd.f32 %v40, %v135
  %137 = vmatmul.bf16.gmra.mxu0 %v61
  %v138 = vpop.f32.mrf.mxu0
  %v139 = vadd.f32 %v40, %v138
  %v140 = vpop.f32.mrf.mxu0
  %v141 = vadd.f32 %v40, %v140
  %142 = vdwg.mxu0
  %143 = vst [vmem:[%s3] sm:$0xff] %v124
  %144 = vst [vmem:[%s3 + $0x8] sm:$0xff] %v126
  %145 = vst [vmem:[%s3 + $0x10] sm:$0xff] %v129
  %146 = vst [vmem:[%s3 + $0x18] sm:$0xff] %v131
  %147 = vst [vmem:[%s3 + $0x20] sm:$0xff] %v134
  %148 = vst [vmem:[%s3 + $0x28] sm:$0xff] %v136
  %149 = vst [vmem:[%s3 + $0x30] sm:$0xff] %v139
  %150 = vst [vmem:[%s3 + $0x38] sm:$0xff] %v141
  // Predicated region
  $region14: #{multi_period_disc_forward.53} parent=0 // pred_check
    _
  $region15: #{multi_period_disc_forward.53} parent=0 // pred_check_branch
    %152 = sbr.rel (0) target = $region17
  $region16: #{multi_period_disc_forward.53} parent=0 // pred_region
    _
  $region17: #{multi_period_disc_forward.53} parent=0 // pred_fallthru
    _
  // Predicated region
  $region18: #{multi_period_disc_forward.53} parent=0 // pred_check
    _
  $region19: #{multi_period_disc_forward.53} parent=0 // pred_check_branch
    %154 = sbr.rel (0) target = $region21
  $region20: #{multi_period_disc_forward.53} parent=0 // pred_region
    _
  $region21: #{multi_period_disc_forward.53} parent=0 // pred_fallthru
    _

// kernel: multi_period_disc_forward.59
$region0: #{multi_period_disc_forward.59}
  #allocation0 [shape = 'u32[]', space=smem, size = 0x4, offset = 0x4, fixed_abs, tag = 'smem constant byte address 0x4 - core index']
  #allocation1 [shape = 'u32[72,128]{1,0:T(1,128)}', space=vmem, size = 0x9000, scoped, tag = 'internal scratch']
  #allocation2 [shape = 'f32[80,128]{1,0:T(8,128)}', space=vmem, size = 0xa000, scoped, tag = 'scratch operand']
  %s0 = inlined_call_operand.vmem [shape: bf16[80,128], index: 0, kind: input, shape index: {}]
  %s1 = inlined_call_operand.vmem [shape: bf16[128,128], index: 1, kind: input, shape index: {}]
  %s2 = inlined_call_operand.vmem [shape: f32[1,128], index: 2, kind: input, shape index: {}]
  %s3 = inlined_call_operand.vmem [shape: f32[80,128], index: 3, kind: output, shape index: {}]
  %s4 = sld [smem:[#allocation0]]
  $region22: #{multi_period_disc_forward.59} parent=0
    _
  %s6 = ssub.s32 1, %s4
  %s7 = scalar_select 0, %s6, %s4
  // Predicated region
  $region2: #{multi_period_disc_forward.59} parent=0 // pred_check
    _
  $region3: #{multi_period_disc_forward.59} parent=0 // pred_check_branch
    %9 = sbr.rel (0) target = $region5
  $region4: #{multi_period_disc_forward.59} parent=0 // pred_region
    _
  $region5: #{multi_period_disc_forward.59} parent=0 // pred_fallthru
    _
  // Predicated region
  $region6: #{multi_period_disc_forward.59} parent=0 // pred_check
    _
  $region7: #{multi_period_disc_forward.59} parent=0 // pred_check_branch
    %11 = sbr.rel (0) target = $region9
  $region8: #{multi_period_disc_forward.59} parent=0 // pred_region
    _
  $region9: #{multi_period_disc_forward.59} parent=0 // pred_fallthru
    _
  // Predicated region
  $region10: #{multi_period_disc_forward.59} parent=0 // pred_check
    _
  $region11: #{multi_period_disc_forward.59} parent=0 // pred_check_branch
    %13 = sbr.rel (0) target = $region13
  $region12: #{multi_period_disc_forward.59} parent=0 // pred_region
    _
  $region13: #{multi_period_disc_forward.59} parent=0 // pred_fallthru
    _
  %v14 = vld [vmem:[%s0] sm:$0xf]
  %v15 = vld [vmem:[%s0 + $0x4] sm:$0xf]
  %v16 = vld [vmem:[%s0 + $0x8] sm:$0xf]
  %v17 = vld [vmem:[%s0 + $0xc] sm:$0xf]
  %v18 = vld [vmem:[%s0 + $0x10] sm:$0xf]
  %v19 = vld [vmem:[%s0 + $0x14] sm:$0xf]
  %v20 = vld [vmem:[%s0 + $0x18] sm:$0xf]
  %v21 = vld [vmem:[%s0 + $0x1c] sm:$0xf]
  %v22 = vld [vmem:[%s0 + $0x20] sm:$0xf]
  %v23 = vld [vmem:[%s0 + $0x24] sm:$0xf]
  %v24 = vld [vmem:[%s1] sm:$0xf]
  %v25 = vld [vmem:[%s1 + $0x4] sm:$0xf]
  %v26 = vld [vmem:[%s1 + $0x8] sm:$0xf]
  %v27 = vld [vmem:[%s1 + $0xc] sm:$0xf]
  %v28 = vld [vmem:[%s1 + $0x10] sm:$0xf]
  %v29 = vld [vmem:[%s1 + $0x14] sm:$0xf]
  %v30 = vld [vmem:[%s1 + $0x18] sm:$0xf]
  %v31 = vld [vmem:[%s1 + $0x1c] sm:$0xf]
  %v32 = vld [vmem:[%s1 + $0x20] sm:$0xf]
  %v33 = vld [vmem:[%s1 + $0x24] sm:$0xf]
  %v34 = vld [vmem:[%s1 + $0x28] sm:$0xf]
  %v35 = vld [vmem:[%s1 + $0x2c] sm:$0xf]
  %v36 = vld [vmem:[%s1 + $0x30] sm:$0xf]
  %v37 = vld [vmem:[%s1 + $0x34] sm:$0xf]
  %v38 = vld [vmem:[%s1 + $0x38] sm:$0xf]
  %v39 = vld [vmem:[%s1 + $0x3c] sm:$0xf]
  %v40 = vld [vmem:[%s2] sm:$0x1]
  %v42 = vperm.slane %v40, 0
  %v54 = vunpack.c.l.b16 %v14
  %v55 = vunpack.c.l.b16 %v15
  %v56 = vunpack.c.l.b16 %v16
  %v57 = vunpack.c.l.b16 %v17
  %v58 = vunpack.c.l.b16 %v18
  %v59 = vunpack.c.l.b16 %v19
  %v60 = vunpack.c.l.b16 %v20
  %v61 = vunpack.c.l.b16 %v21
  %v62 = vunpack.c.l.b16 %v22
  %v63 = vunpack.c.l.b16 %v23
  %v64 = vpack.c.b16 %v55, %v54
  %v65 = vpack.c.b16 %v57, %v56
  %v66 = vpack.c.b16 %v59, %v58
  %v67 = vpack.c.b16 %v61, %v60
  %v68 = vpack.c.b16 %v63, %v62
  %v90 = vunpack.c.l.b16 %v24
  %v91 = vunpack.c.l.b16 %v25
  %v92 = vunpack.c.l.b16 %v26
  %v93 = vunpack.c.l.b16 %v27
  %v94 = vunpack.c.l.b16 %v28
  %v95 = vunpack.c.l.b16 %v29
  %v96 = vunpack.c.l.b16 %v30
  %v97 = vunpack.c.l.b16 %v31
  %v98 = vunpack.c.l.b16 %v32
  %v99 = vunpack.c.l.b16 %v33
  %v100 = vunpack.c.l.b16 %v34
  %v101 = vunpack.c.l.b16 %v35
  %v102 = vunpack.c.l.b16 %v36
  %v103 = vunpack.c.l.b16 %v37
  %v104 = vunpack.c.l.b16 %v38
  %v105 = vunpack.c.l.b16 %v39
  %v106 = vpack.c.b16 %v91, %v90
  %v107 = vpack.c.b16 %v93, %v92
  %v108 = vpack.c.b16 %v95, %v94
  %v109 = vpack.c.b16 %v97, %v96
  %v110 = vpack.c.b16 %v99, %v98
  %v111 = vpack.c.b16 %v101, %v100
  %v112 = vpack.c.b16 %v103, %v102
  %v113 = vpack.c.b16 %v105, %v104
  %122 = vmatpush.bf16.msra.mxu0 %v113
  %123 = vmatpush.bf16.msra.mxu0 %v112
  %124 = vmatpush.bf16.msra.mxu0 %v111
  %125 = vmatpush.bf16.msra.mxu0 %v110
  %126 = vmatpush.bf16.msra.mxu0 %v109
  %127 = vmatpush.bf16.msra.mxu0 %v108
  %128 = vmatpush.bf16.msra.mxu0 %v107
  %129 = vmatpush.bf16.msra.mxu0 %v106
  %130 = vmatmul.bf16.gmra.mxu0 %v64
  %v131 = vpop.f32.mrf.mxu0
  %v132 = vadd.f32 %v42, %v131
  %v133 = vpop.f32.mrf.mxu0
  %v134 = vadd.f32 %v42, %v133
  %135 = vmatmul.bf16.gmra.mxu0 %v65
  %v136 = vpop.f32.mrf.mxu0
  %v137 = vadd.f32 %v42, %v136
  %v138 = vpop.f32.mrf.mxu0
  %v139 = vadd.f32 %v42, %v138
  %140 = vmatmul.bf16.gmra.mxu0 %v66
  %v141 = vpop.f32.mrf.mxu0
  %v142 = vadd.f32 %v42, %v141
  %v143 = vpop.f32.mrf.mxu0
  %v144 = vadd.f32 %v42, %v143
  %145 = vmatmul.bf16.gmra.mxu0 %v67
  %v146 = vpop.f32.mrf.mxu0
  %v147 = vadd.f32 %v42, %v146
  %v148 = vpop.f32.mrf.mxu0
  %v149 = vadd.f32 %v42, %v148
  %150 = vmatmul.bf16.gmra.mxu0 %v68
  %v151 = vpop.f32.mrf.mxu0
  %v152 = vadd.f32 %v42, %v151
  %v153 = vpop.f32.mrf.mxu0
  %v154 = vadd.f32 %v42, %v153
  %155 = vdwg.mxu0
  %156 = vst [vmem:[%s3] sm:$0xff] %v132
  %157 = vst [vmem:[%s3 + $0x8] sm:$0xff] %v134
  %158 = vst [vmem:[%s3 + $0x10] sm:$0xff] %v137
  %159 = vst [vmem:[%s3 + $0x18] sm:$0xff] %v139
  %160 = vst [vmem:[%s3 + $0x20] sm:$0xff] %v142
  %161 = vst [vmem:[%s3 + $0x28] sm:$0xff] %v144
  %162 = vst [vmem:[%s3 + $0x30] sm:$0xff] %v147
  %163 = vst [vmem:[%s3 + $0x38] sm:$0xff] %v149
  %164 = vst [vmem:[%s3 + $0x40] sm:$0xff] %v152
  %165 = vst [vmem:[%s3 + $0x48] sm:$0xff] %v154
  // Predicated region
  $region14: #{multi_period_disc_forward.59} parent=0 // pred_check
    _
  $region15: #{multi_period_disc_forward.59} parent=0 // pred_check_branch
    %167 = sbr.rel (0) target = $region17
  $region16: #{multi_period_disc_forward.59} parent=0 // pred_region
    _
  $region17: #{multi_period_disc_forward.59} parent=0 // pred_fallthru
    _
  // Predicated region
  $region18: #{multi_period_disc_forward.59} parent=0 // pred_check
    _
  $region19: #{multi_period_disc_forward.59} parent=0 // pred_check_branch
    %169 = sbr.rel (0) target = $region21
  $region20: #{multi_period_disc_forward.59} parent=0 // pred_region
    _
  $region21: #{multi_period_disc_forward.59} parent=0 // pred_fallthru
    _

</llo_original>
